<compile_context>
chip_gen: v7x
topology: tpu7x:2x2x1
jax: 0.10.0
libtpu: 0.0.40
codegen_flags: <defaults>
</compile_context>

<pallas_src>
import functools

import jax
import jax.numpy as jnp
import numpy as np
from jax import lax
from jax.experimental import pallas as pl
from jax.experimental.pallas import tpu as pltpu


# ----------------------------------------------------------------------------
# In-kernel helpers
# ----------------------------------------------------------------------------
def _mish_fast(x):
    """Mish with one exp + one EUP reciprocal.

    mish(x) = x * tanh(softplus(x)) = x * n / (n + 2),  n = e^x (e^x + 2).
    The x > 20 branch avoids exp overflow; there mish(x) == x in f32.
    """
    e = jnp.exp(jnp.minimum(x, 20.0))
    n = e * (e + 2.0)
    r = n * pl.reciprocal(n + 2.0, approx=True)
    return jnp.where(x > 20.0, x, x * r)


# ----------------------------------------------------------------------------
# Pass 1: 3x3 conv (stride 1, pad 1) for one image + BN1 partial statistics.
# ----------------------------------------------------------------------------
def _conv1_stats_kernel(xp_ref, w1_ref, y1_ref, sum_ref, sq_ref):
    # xp_ref : (1, H+2, W+2, Cin)  padded channels-last input (one image)
    # w1_ref : (9, Cin, Cout)      conv1 weights, tap-major
    # y1_ref : (1, Cout, H*W)      conv1 output, channels-first / lane-dense
    # sum_ref, sq_ref : (1, Cout, 1)  per-image sum and sum of squares
    _, Hp, Wp, Cin = xp_ref.shape
    H, W = Hp - 2, Wp - 2
    HW = H * W
    Cout = w1_ref.shape[2]

    acc = jnp.zeros((HW, Cout), jnp.float32)
    for dy in range(3):                 # static unrolled: 9 shifted windows
        for dx in range(3):
            win = xp_ref[0, dy:dy + H, dx:dx + W, :]        # (H, W, Cin)
            win = win.reshape(HW, Cin)
            acc = acc + jnp.dot(win, w1_ref[dy * 3 + dx],
                                preferred_element_type=jnp.float32)

    y_t = acc.T                                             # (Cout, HW)
    y1_ref[0] = y_t
    sum_ref[0] = jnp.sum(y_t, axis=1, keepdims=True)
    sq_ref[0] = jnp.sum(y_t * y_t, axis=1, keepdims=True)


# ----------------------------------------------------------------------------
# Pass 2: folded BN1 -> Mish -> 1x1 conv on one (Cout, T) tile + BN2 partials.
# ----------------------------------------------------------------------------
def _bn1_mish_conv2_kernel(y1_ref, s1_ref, t1_ref, w2_ref,
                           h2_ref, sum_ref, sq_ref):
    h = y1_ref[0] * s1_ref[...] + t1_ref[...]               # (Cout, T)
    h = _mish_fast(h)
    h2 = jnp.dot(w2_ref[...], h, preferred_element_type=jnp.float32)
    h2_ref[0] = h2
    sum_ref[0] = jnp.sum(h2, axis=1, keepdims=True)
    sq_ref[0] = jnp.sum(h2 * h2, axis=1, keepdims=True)


# ----------------------------------------------------------------------------
# Pass 3: folded BN2 -> Mish -> + residual, pure elementwise per tile.
# ----------------------------------------------------------------------------
def _bn2_mish_res_kernel(h2_ref, s2_ref, t2_ref, xres_ref, o_ref):
    h = h2_ref[0] * s2_ref[...] + t2_ref[...]
    o_ref[0] = _mish_fast(h) + xres_ref[0]


# ----------------------------------------------------------------------------
# Host-side glue
# ----------------------------------------------------------------------------
def _pick_hw_tile(hw, max_tile=2048):
    """Largest multiple of 128 dividing hw (capped), else the full hw."""
    best = hw
    if hw % 128 == 0:
        best = 128
        t = 128
        while t <= min(hw, max_tile):
            if hw % t == 0:
                best = t
            t += 128
    return best


def _fold_bn(sum_c, sq_c, count, gamma, beta, eps):
    """Fold training-mode BN (biased batch variance) into scale/shift."""
    mean = sum_c / count
    var = jnp.maximum(sq_c / count - mean * mean, 0.0)
    scale = gamma * lax.rsqrt(var + eps)
    shift = beta - mean * scale
    c = scale.shape[0]
    return (scale.reshape(c, 1).astype(jnp.float32),
            shift.reshape(c, 1).astype(jnp.float32))


def res_conv(x_nchw, w1_oihw, g1, b1, w2_oihw, g2, b2, *, eps=1e-3):
    """ResConv forward: stride=1, kernel_size=3, rate=1, padding=1.

    eps defaults to 1e-3, matching the module's `epsilon=0.001` default.
    """
    B, Cin, H, W = x_nchw.shape
    Cout, wc_in, K, K2 = w1_oihw.shape
    assert K == 3 and K2 == 3 and wc_in == Cin
    assert Cin == Cout, "residual add requires in_channels == out_channels"
    HW = H * W
    Npix = B * HW
    Hp, Wp = H + 2, W + 2

    x = x_nchw.astype(jnp.float32)
    # Single padded channels-last copy for in-kernel 3x3 window extraction.
    xp = jnp.pad(jnp.transpose(x, (0, 2, 3, 1)),
                 ((0, 0), (1, 1), (1, 1), (0, 0)))
    # Residual / elementwise layout: channels-first, H*W on the lane axis.
    x_cf = x.reshape(B, Cin, HW)

    w1 = jnp.transpose(w1_oihw, (2, 3, 1, 0)).reshape(K * K, Cin, Cout)
    w2 = w2_oihw[:, :, 0, 0].astype(jnp.float32)            # (Cout, Cout)

    vmem_cap = 32 * 1024 * 1024
    cp1 = pltpu.CompilerParams(dimension_semantics=("parallel",),
                               vmem_limit_bytes=vmem_cap)

    # ---- pass 1: conv1 + per-image BN1 partial stats -----------------------
    y1, ps1, pq1 = pl.pallas_call(
        _conv1_stats_kernel,
        grid=(B,),
        in_specs=[
            pl.BlockSpec((1, Hp, Wp, Cin), lambda b: (b, 0, 0, 0)),
            pl.BlockSpec((K * K, Cin, Cout), lambda b: (0, 0, 0)),
        ],
        out_specs=[
            pl.BlockSpec((1, Cout, HW), lambda b: (b, 0, 0)),
            pl.BlockSpec((1, Cout, 1), lambda b: (b, 0, 0)),
            pl.BlockSpec((1, Cout, 1), lambda b: (b, 0, 0)),
        ],
        out_shape=[
            jax.ShapeDtypeStruct((B, Cout, HW), jnp.float32),
            jax.ShapeDtypeStruct((B, Cout, 1), jnp.float32),
            jax.ShapeDtypeStruct((B, Cout, 1), jnp.float32),
        ],
        compiler_params=cp1,
    )(xp, w1)

    s1, t1 = _fold_bn(jnp.sum(ps1, axis=0)[:, 0], jnp.sum(pq1, axis=0)[:, 0],
                      Npix, g1, b1, eps)

    # ---- pass 2: BN1 (folded) -> Mish -> 1x1 conv + BN2 partial stats ------
    T = _pick_hw_tile(HW)
    nt = HW // T
    G = B * nt
    cp2 = pltpu.CompilerParams(dimension_semantics=("parallel", "parallel"),
                               vmem_limit_bytes=vmem_cap)

    tile_spec = pl.BlockSpec((1, Cout, T), lambda b, t: (b, 0, t))
    vec_spec = pl.BlockSpec((Cout, 1), lambda b, t: (0, 0))

    def _stat_index(b, t):
        return (b * nt + t, 0, 0)

    stat_spec = pl.BlockSpec((1, Cout, 1), _stat_index)

    h2, ps2, pq2 = pl.pallas_call(
        _bn1_mish_conv2_kernel,
        grid=(B, nt),
        in_specs=[
            tile_spec,
            vec_spec,
            vec_spec,
            pl.BlockSpec((Cout, Cout), lambda b, t: (0, 0)),
        ],
        out_specs=[tile_spec, stat_spec, stat_spec],
        out_shape=[
            jax.ShapeDtypeStruct((B, Cout, HW), jnp.float32),
            jax.ShapeDtypeStruct((G, Cout, 1), jnp.float32),
            jax.ShapeDtypeStruct((G, Cout, 1), jnp.float32),
        ],
        compiler_params=cp2,
    )(y1, s1, t1, w2)

    s2, t2 = _fold_bn(jnp.sum(ps2, axis=0)[:, 0], jnp.sum(pq2, axis=0)[:, 0],
                      Npix, g2, b2, eps)

    # ---- pass 3: BN2 (folded) -> Mish -> + residual -------------------------
    out_cf = pl.pallas_call(
        _bn2_mish_res_kernel,
        grid=(B, nt),
        in_specs=[tile_spec, vec_spec, vec_spec, tile_spec],
        out_specs=tile_spec,
        out_shape=jax.ShapeDtypeStruct((B, Cout, HW), jnp.float32),
        compiler_params=cp2,
    )(h2, s2, t2, x_cf)

    return out_cf.reshape(B, Cout, H, W)


# ----------------------------------------------------------------------------
# Pure-JAX reference (mirrors the PyTorch module, training-mode BN)
# ----------------------------------------------------------------------------
def _ref_forward(x, w1, g1, b1, w2, g2, b2, eps=1e-3):
    dn = ('NCHW', 'OIHW', 'NCHW')

    def bn(t, g, b):
        mu = t.mean(axis=(0, 2, 3), keepdims=True)
        var = ((t - mu) ** 2).mean(axis=(0, 2, 3), keepdims=True)
        return ((t - mu) / jnp.sqrt(var + eps)) * g.reshape(1, -1, 1, 1) \
            + b.reshape(1, -1, 1, 1)

    def mish(v):
        return v * jnp.tanh(jax.nn.softplus(v))

    y = lax.conv_general_dilated(x, w1, (1, 1), ((1, 1), (1, 1)),
                                 dimension_numbers=dn,
                                 precision=lax.Precision.HIGHEST)
    y = mish(bn(y, g1, b1))
    y = lax.conv_general_dilated(y, w2, (1, 1), ((0, 0), (0, 0)),
                                 dimension_numbers=dn,
                                 precision=lax.Precision.HIGHEST)
    y = mish(bn(y, g2, b2))
    return y + x


if __name__ == "__main__":
    B, C, H, W = 2, 4, 16, 16          # in_channels == out_channels == 4
    eps = 1e-3                         # module default epsilon=0.001

    key = jax.random.PRNGKey(0)
    kx, k1, k2 = jax.random.split(key, 3)
    x = jax.random.normal(kx, (B, C, H, W), jnp.float32)

    # conv1.weight: (out, in, 3, 3); conv2.weight: (out, out, 1, 1); no biases.
    w1 = jax.random.normal(k1, (C, C, 3, 3), jnp.float32) * 0.1
    w2 = jax.random.normal(k2, (C, C, 1, 1), jnp.float32) * 0.1
    # BatchNorm2d default init: weight=1, bias=0.
    g1 = jnp.ones((C,), jnp.float32)
    b1 = jnp.zeros((C,), jnp.float32)
    g2 = jnp.ones((C,), jnp.float32)
    b2 = jnp.zeros((C,), jnp.float32)

    out = res_conv(x, w1, g1, b1, w2, g2, b2, eps=eps)
    out = jax.block_until_ready(out)

    ref = jax.block_until_ready(_ref_forward(x, w1, g1, b1, w2, g2, b2, eps))
    np.testing.assert_allclose(np.asarray(out), np.asarray(ref),
                               rtol=1e-2, atol=1e-2)
    assert out.shape == x.shape and out.dtype == jnp.float32

    print("KERNEL_OK")
</pallas_src>

<mosaic_0001>
module attributes {stable_mosaic.version = 11 : i64} {
  func.func @_conv1_stats_kernel(%arg0: i32, %arg1: memref<1x18x18x4xf32, #tpu.memory_space<vmem>>, %arg2: memref<9x4x4xf32, #tpu.memory_space<vmem>>, %arg3: memref<1x4x256xf32, #tpu.memory_space<vmem>>, %arg4: memref<1x4x1xf32, #tpu.memory_space<vmem>>, %arg5: memref<1x4x1xf32, #tpu.memory_space<vmem>>) attributes {dimension_semantics = [#tpu.dimension_semantics<parallel>], iteration_bounds = array<i64: 2>, scalar_prefetch = 0 : i64, scratch_operands = 0 : i64, tpu.core_type = #tpu.core_type<tc>, window_params = [{transform_indices = @transform_0, window_bounds = array<i64: 1, 18, 18, 4>}, {pipeline_mode = #tpu.pipeline_mode<synchronous>, transform_indices = @transform_1, window_bounds = array<i64: 9, 4, 4>}, {transform_indices = @transform_2, window_bounds = array<i64: 1, 4, 256>}, {transform_indices = @transform_3, window_bounds = array<i64: 1, 4, 1>}, {transform_indices = @transform_4, window_bounds = array<i64: 1, 4, 1>}]} {
    %cst = arith.constant 0.000000e+00 : f32
    %0 = vector.broadcast %cst : f32 to vector<256x4xf32>
    %c0 = arith.constant 0 : index
    %c0_0 = arith.constant 0 : index
    %c0_1 = arith.constant 0 : index
    %c0_2 = arith.constant 0 : index
    %1 = vector.load %arg1[%c0, %c0_0, %c0_1, %c0_2] : memref<1x18x18x4xf32, #tpu.memory_space<vmem>>, vector<1x16x16x4xf32>
    %2 = vector.shape_cast %1 : vector<1x16x16x4xf32> to vector<16x16x4xf32>
    %3 = vector.shape_cast %2 : vector<16x16x4xf32> to vector<256x4xf32>
    %c0_3 = arith.constant 0 : index
    %c0_4 = arith.constant 0 : index
    %c0_5 = arith.constant 0 : index
    %4 = vector.load %arg2[%c0_3, %c0_4, %c0_5] : memref<9x4x4xf32, #tpu.memory_space<vmem>>, vector<1x4x4xf32>
    %5 = vector.shape_cast %4 : vector<1x4x4xf32> to vector<4x4xf32>
    %cst_6 = arith.constant dense<0.000000e+00> : vector<256x4xf32>
    %6 = tpu.matmul %3, %5, %cst_6 {dimension_numbers = #tpu.dot_dimension_numbers<[1], [0], [0], [1], [0, 0, 1, 1], [], []>} : vector<256x4xf32>, vector<4x4xf32>, vector<256x4xf32> -> vector<256x4xf32>
    %7 = arith.addf %0, %6 : vector<256x4xf32>
    %c0_7 = arith.constant 0 : index
    %c0_8 = arith.constant 0 : index
    %c1 = arith.constant 1 : index
    %c0_9 = arith.constant 0 : index
    %8 = vector.load %arg1[%c0_7, %c0_8, %c1, %c0_9] : memref<1x18x18x4xf32, #tpu.memory_space<vmem>>, vector<1x16x16x4xf32>
    %9 = vector.shape_cast %8 : vector<1x16x16x4xf32> to vector<16x16x4xf32>
    %10 = vector.shape_cast %9 : vector<16x16x4xf32> to vector<256x4xf32>
    %c1_10 = arith.constant 1 : index
    %c0_11 = arith.constant 0 : index
    %c0_12 = arith.constant 0 : index
    %11 = vector.load %arg2[%c1_10, %c0_11, %c0_12] : memref<9x4x4xf32, #tpu.memory_space<vmem>>, vector<1x4x4xf32>
    %12 = vector.shape_cast %11 : vector<1x4x4xf32> to vector<4x4xf32>
    %cst_13 = arith.constant dense<0.000000e+00> : vector<256x4xf32>
    %13 = tpu.matmul %10, %12, %cst_13 {dimension_numbers = #tpu.dot_dimension_numbers<[1], [0], [0], [1], [0, 0, 1, 1], [], []>} : vector<256x4xf32>, vector<4x4xf32>, vector<256x4xf32> -> vector<256x4xf32>
    %14 = arith.addf %7, %13 : vector<256x4xf32>
    %c0_14 = arith.constant 0 : index
    %c0_15 = arith.constant 0 : index
    %c2 = arith.constant 2 : index
    %c0_16 = arith.constant 0 : index
    %15 = vector.load %arg1[%c0_14, %c0_15, %c2, %c0_16] : memref<1x18x18x4xf32, #tpu.memory_space<vmem>>, vector<1x16x16x4xf32>
    %16 = vector.shape_cast %15 : vector<1x16x16x4xf32> to vector<16x16x4xf32>
    %17 = vector.shape_cast %16 : vector<16x16x4xf32> to vector<256x4xf32>
    %c2_17 = arith.constant 2 : index
    %c0_18 = arith.constant 0 : index
    %c0_19 = arith.constant 0 : index
    %18 = vector.load %arg2[%c2_17, %c0_18, %c0_19] : memref<9x4x4xf32, #tpu.memory_space<vmem>>, vector<1x4x4xf32>
    %19 = vector.shape_cast %18 : vector<1x4x4xf32> to vector<4x4xf32>
    %cst_20 = arith.constant dense<0.000000e+00> : vector<256x4xf32>
    %20 = tpu.matmul %17, %19, %cst_20 {dimension_numbers = #tpu.dot_dimension_numbers<[1], [0], [0], [1], [0, 0, 1, 1], [], []>} : vector<256x4xf32>, vector<4x4xf32>, vector<256x4xf32> -> vector<256x4xf32>
    %21 = arith.addf %14, %20 : vector<256x4xf32>
    %c0_21 = arith.constant 0 : index
    %c1_22 = arith.constant 1 : index
    %c0_23 = arith.constant 0 : index
    %c0_24 = arith.constant 0 : index
    %22 = vector.load %arg1[%c0_21, %c1_22, %c0_23, %c0_24] : memref<1x18x18x4xf32, #tpu.memory_space<vmem>>, vector<1x16x16x4xf32>
    %23 = vector.shape_cast %22 : vector<1x16x16x4xf32> to vector<16x16x4xf32>
    %24 = vector.shape_cast %23 : vector<16x16x4xf32> to vector<256x4xf32>
    %c3 = arith.constant 3 : index
    %c0_25 = arith.constant 0 : index
    %c0_26 = arith.constant 0 : index
    %25 = vector.load %arg2[%c3, %c0_25, %c0_26] : memref<9x4x4xf32, #tpu.memory_space<vmem>>, vector<1x4x4xf32>
    %26 = vector.shape_cast %25 : vector<1x4x4xf32> to vector<4x4xf32>
    %cst_27 = arith.constant dense<0.000000e+00> : vector<256x4xf32>
    %27 = tpu.matmul %24, %26, %cst_27 {dimension_numbers = #tpu.dot_dimension_numbers<[1], [0], [0], [1], [0, 0, 1, 1], [], []>} : vector<256x4xf32>, vector<4x4xf32>, vector<256x4xf32> -> vector<256x4xf32>
    %28 = arith.addf %21, %27 : vector<256x4xf32>
    %c0_28 = arith.constant 0 : index
    %c1_29 = arith.constant 1 : index
    %c1_30 = arith.constant 1 : index
    %c0_31 = arith.constant 0 : index
    %29 = vector.load %arg1[%c0_28, %c1_29, %c1_30, %c0_31] : memref<1x18x18x4xf32, #tpu.memory_space<vmem>>, vector<1x16x16x4xf32>
    %30 = vector.shape_cast %29 : vector<1x16x16x4xf32> to vector<16x16x4xf32>
    %31 = vector.shape_cast %30 : vector<16x16x4xf32> to vector<256x4xf32>
    %c4 = arith.constant 4 : index
    %c0_32 = arith.constant 0 : index
    %c0_33 = arith.constant 0 : index
    %32 = vector.load %arg2[%c4, %c0_32, %c0_33] : memref<9x4x4xf32, #tpu.memory_space<vmem>>, vector<1x4x4xf32>
    %33 = vector.shape_cast %32 : vector<1x4x4xf32> to vector<4x4xf32>
    %cst_34 = arith.constant dense<0.000000e+00> : vector<256x4xf32>
    %34 = tpu.matmul %31, %33, %cst_34 {dimension_numbers = #tpu.dot_dimension_numbers<[1], [0], [0], [1], [0, 0, 1, 1], [], []>} : vector<256x4xf32>, vector<4x4xf32>, vector<256x4xf32> -> vector<256x4xf32>
    %35 = arith.addf %28, %34 : vector<256x4xf32>
    %c0_35 = arith.constant 0 : index
    %c1_36 = arith.constant 1 : index
    %c2_37 = arith.constant 2 : index
    %c0_38 = arith.constant 0 : index
    %36 = vector.load %arg1[%c0_35, %c1_36, %c2_37, %c0_38] : memref<1x18x18x4xf32, #tpu.memory_space<vmem>>, vector<1x16x16x4xf32>
    %37 = vector.shape_cast %36 : vector<1x16x16x4xf32> to vector<16x16x4xf32>
    %38 = vector.shape_cast %37 : vector<16x16x4xf32> to vector<256x4xf32>
    %c5 = arith.constant 5 : index
    %c0_39 = arith.constant 0 : index
    %c0_40 = arith.constant 0 : index
    %39 = vector.load %arg2[%c5, %c0_39, %c0_40] : memref<9x4x4xf32, #tpu.memory_space<vmem>>, vector<1x4x4xf32>
    %40 = vector.shape_cast %39 : vector<1x4x4xf32> to vector<4x4xf32>
    %cst_41 = arith.constant dense<0.000000e+00> : vector<256x4xf32>
    %41 = tpu.matmul %38, %40, %cst_41 {dimension_numbers = #tpu.dot_dimension_numbers<[1], [0], [0], [1], [0, 0, 1, 1], [], []>} : vector<256x4xf32>, vector<4x4xf32>, vector<256x4xf32> -> vector<256x4xf32>
    %42 = arith.addf %35, %41 : vector<256x4xf32>
    %c0_42 = arith.constant 0 : index
    %c2_43 = arith.constant 2 : index
    %c0_44 = arith.constant 0 : index
    %c0_45 = arith.constant 0 : index
    %43 = vector.load %arg1[%c0_42, %c2_43, %c0_44, %c0_45] : memref<1x18x18x4xf32, #tpu.memory_space<vmem>>, vector<1x16x16x4xf32>
    %44 = vector.shape_cast %43 : vector<1x16x16x4xf32> to vector<16x16x4xf32>
    %45 = vector.shape_cast %44 : vector<16x16x4xf32> to vector<256x4xf32>
    %c6 = arith.constant 6 : index
    %c0_46 = arith.constant 0 : index
    %c0_47 = arith.constant 0 : index
    %46 = vector.load %arg2[%c6, %c0_46, %c0_47] : memref<9x4x4xf32, #tpu.memory_space<vmem>>, vector<1x4x4xf32>
    %47 = vector.shape_cast %46 : vector<1x4x4xf32> to vector<4x4xf32>
    %cst_48 = arith.constant dense<0.000000e+00> : vector<256x4xf32>
    %48 = tpu.matmul %45, %47, %cst_48 {dimension_numbers = #tpu.dot_dimension_numbers<[1], [0], [0], [1], [0, 0, 1, 1], [], []>} : vector<256x4xf32>, vector<4x4xf32>, vector<256x4xf32> -> vector<256x4xf32>
    %49 = arith.addf %42, %48 : vector<256x4xf32>
    %c0_49 = arith.constant 0 : index
    %c2_50 = arith.constant 2 : index
    %c1_51 = arith.constant 1 : index
    %c0_52 = arith.constant 0 : index
    %50 = vector.load %arg1[%c0_49, %c2_50, %c1_51, %c0_52] : memref<1x18x18x4xf32, #tpu.memory_space<vmem>>, vector<1x16x16x4xf32>
    %51 = vector.shape_cast %50 : vector<1x16x16x4xf32> to vector<16x16x4xf32>
    %52 = vector.shape_cast %51 : vector<16x16x4xf32> to vector<256x4xf32>
    %c7 = arith.constant 7 : index
    %c0_53 = arith.constant 0 : index
    %c0_54 = arith.constant 0 : index
    %53 = vector.load %arg2[%c7, %c0_53, %c0_54] : memref<9x4x4xf32, #tpu.memory_space<vmem>>, vector<1x4x4xf32>
    %54 = vector.shape_cast %53 : vector<1x4x4xf32> to vector<4x4xf32>
    %cst_55 = arith.constant dense<0.000000e+00> : vector<256x4xf32>
    %55 = tpu.matmul %52, %54, %cst_55 {dimension_numbers = #tpu.dot_dimension_numbers<[1], [0], [0], [1], [0, 0, 1, 1], [], []>} : vector<256x4xf32>, vector<4x4xf32>, vector<256x4xf32> -> vector<256x4xf32>
    %56 = arith.addf %49, %55 : vector<256x4xf32>
    %c0_56 = arith.constant 0 : index
    %c2_57 = arith.constant 2 : index
    %c2_58 = arith.constant 2 : index
    %c0_59 = arith.constant 0 : index
    %57 = vector.load %arg1[%c0_56, %c2_57, %c2_58, %c0_59] : memref<1x18x18x4xf32, #tpu.memory_space<vmem>>, vector<1x16x16x4xf32>
    %58 = vector.shape_cast %57 : vector<1x16x16x4xf32> to vector<16x16x4xf32>
    %59 = vector.shape_cast %58 : vector<16x16x4xf32> to vector<256x4xf32>
    %c8 = arith.constant 8 : index
    %c0_60 = arith.constant 0 : index
    %c0_61 = arith.constant 0 : index
    %60 = vector.load %arg2[%c8, %c0_60, %c0_61] : memref<9x4x4xf32, #tpu.memory_space<vmem>>, vector<1x4x4xf32>
    %61 = vector.shape_cast %60 : vector<1x4x4xf32> to vector<4x4xf32>
    %cst_62 = arith.constant dense<0.000000e+00> : vector<256x4xf32>
    %62 = tpu.matmul %59, %61, %cst_62 {dimension_numbers = #tpu.dot_dimension_numbers<[1], [0], [0], [1], [0, 0, 1, 1], [], []>} : vector<256x4xf32>, vector<4x4xf32>, vector<256x4xf32> -> vector<256x4xf32>
    %63 = arith.addf %56, %62 : vector<256x4xf32>
    %64 = tpu.transpose %63, [1, 0] : vector<256x4xf32> -> vector<4x256xf32>
    %c0_63 = arith.constant 0 : index
    %c0_64 = arith.constant 0 : index
    %c0_65 = arith.constant 0 : index
    %65 = vector.load %arg3[%c0_63, %c0_64, %c0_65] : memref<1x4x256xf32, #tpu.memory_space<vmem>>, vector<1x4x256xf32>
    %66 = vector.shape_cast %65 : vector<1x4x256xf32> to vector<4x256xf32>
    %67 = vector.shape_cast %64 : vector<4x256xf32> to vector<1x4x256xf32>
    tpu.vector_store %arg3[%c0_63, %c0_64, %c0_65], %67 {strides = array<i32>} : memref<1x4x256xf32, #tpu.memory_space<vmem>>, vector<1x4x256xf32>,
    %cst_66 = arith.constant dense<0.000000e+00> : vector<4xf32>
    %68 = vector.multi_reduction <add>, %64, %cst_66 [1] : vector<4x256xf32> to vector<4xf32>
    %69 = vector.shape_cast %68 : vector<4xf32> to vector<4x1xf32>
    %c0_67 = arith.constant 0 : index
    %c0_68 = arith.constant 0 : index
    %c0_69 = arith.constant 0 : index
    %70 = vector.load %arg4[%c0_67, %c0_68, %c0_69] : memref<1x4x1xf32, #tpu.memory_space<vmem>>, vector<1x4x1xf32>
    %71 = vector.shape_cast %70 : vector<1x4x1xf32> to vector<4x1xf32>
    %72 = vector.shape_cast %69 : vector<4x1xf32> to vector<1x4x1xf32>
    tpu.vector_store %arg4[%c0_67, %c0_68, %c0_69], %72 {strides = array<i32>} : memref<1x4x1xf32, #tpu.memory_space<vmem>>, vector<1x4x1xf32>,
    %73 = arith.mulf %64, %64 : vector<4x256xf32>
    %cst_70 = arith.constant dense<0.000000e+00> : vector<4xf32>
    %74 = vector.multi_reduction <add>, %73, %cst_70 [1] : vector<4x256xf32> to vector<4xf32>
    %75 = vector.shape_cast %74 : vector<4xf32> to vector<4x1xf32>
    %c0_71 = arith.constant 0 : index
    %c0_72 = arith.constant 0 : index
    %c0_73 = arith.constant 0 : index
    %76 = vector.load %arg5[%c0_71, %c0_72, %c0_73] : memref<1x4x1xf32, #tpu.memory_space<vmem>>, vector<1x4x1xf32>
    %77 = vector.shape_cast %76 : vector<1x4x1xf32> to vector<4x1xf32>
    %78 = vector.shape_cast %75 : vector<4x1xf32> to vector<1x4x1xf32>
    tpu.vector_store %arg5[%c0_71, %c0_72, %c0_73], %78 {strides = array<i32>} : memref<1x4x1xf32, #tpu.memory_space<vmem>>, vector<1x4x1xf32>,
    return
  }
  func.func @transform_0(%arg0: i32) -> (i32, i32, i32, i32) {
    %c0_i32 = arith.constant 0 : i32
    %c0_i32_0 = arith.constant 0 : i32
    %c0_i32_1 = arith.constant 0 : i32
    %c0_i32_2 = arith.constant 0 : i32
    return %arg0, %c0_i32, %c0_i32_0, %c0_i32_1 : i32, i32, i32, i32
  }
  func.func @transform_1(%arg0: i32) -> (i32, i32, i32) {
    %c0_i32 = arith.constant 0 : i32
    %c0_i32_0 = arith.constant 0 : i32
    %c0_i32_1 = arith.constant 0 : i32
    %c0_i32_2 = arith.constant 0 : i32
    return %c0_i32, %c0_i32_0, %c0_i32_1 : i32, i32, i32
  }
  func.func @transform_2(%arg0: i32) -> (i32, i32, i32) {
    %c0_i32 = arith.constant 0 : i32
    %c0_i32_0 = arith.constant 0 : i32
    %c0_i32_1 = arith.constant 0 : i32
    return %arg0, %c0_i32, %c0_i32_0 : i32, i32, i32
  }
  func.func @transform_3(%arg0: i32) -> (i32, i32, i32) {
    %c0_i32 = arith.constant 0 : i32
    %c0_i32_0 = arith.constant 0 : i32
    %c0_i32_1 = arith.constant 0 : i32
    return %arg0, %c0_i32, %c0_i32_0 : i32, i32, i32
  }
  func.func @transform_4(%arg0: i32) -> (i32, i32, i32) {
    %c0_i32 = arith.constant 0 : i32
    %c0_i32_0 = arith.constant 0 : i32
    %c0_i32_1 = arith.constant 0 : i32
    return %arg0, %c0_i32, %c0_i32_0 : i32, i32, i32
  }
}

</mosaic_0001>

<llo_original>
// kernel: tpu_custom_call.1
$region0: #{tpu_custom_call.1}
  #allocation0 [shape = 'u32[]', space=smem, size = 0x4, offset = 0x4, fixed_abs, tag = 'smem constant byte address 0x4 - core index']
  #allocation1 [shape = 'u32[144,128]{1,0:T(1,128)}', space=vmem, size = 0x12000, scoped, tag = 'internal scratch']
  %s0 = inlined_call_operand.vmem [shape: f32[2,18,18,4], index: 0, kind: input, shape index: {}]
  %s1 = inlined_call_operand.vmem [shape: f32[9,4,4], index: 1, kind: input, shape index: {}]
  %s2 = inlined_call_operand.hbm [shape: f32[2,4,256], index: 2, kind: output, shape index: {0}]
  %s3 = inlined_call_operand.vmem [shape: f32[2,4,1], index: 3, kind: output, shape index: {1}]
  %s4 = inlined_call_operand.vmem [shape: f32[2,4,1], index: 4, kind: output, shape index: {2}]
  %5 = xla_tuple %s2, %s3, %s4
  %s6 = sld [smem:[#allocation0]]
  $region57: #{tpu_custom_call.1} parent=0
    _
  %s8 = ssub.s32 1, %s6
  %s9 = scalar_select 0, %s8, %s6
  $region1: #{tpu_custom_call.1} parent=0
    #allocation2 [shape = 'u8[8192]{0}', space=vmem, size = 0x2000, scoped, tag = 'output window, operand 0']
    #allocation3 [shape = 's32[2]{0}', space=sflag, size = 0x8, scoped, tag = 'scoped memory for tpu_custom_call.1']
    %10 = vsyncpa [#allocation3], 0
    %s11 = scalar_lea.sflag [#allocation3], 1
    %12 = vsyncpa %s11, 0
    loop: start=0, step=1, limit=4
    $region2: #{tpu_custom_call.1} parent=1 // loop_pre_header
      _
    $region3: #{tpu_custom_call.1} parent=1 // loop_header
      %s14 = sphi 0, %s18
      %p15 = scmp.ge.s32.totalorder %s14, 4
      %s24 = sphi 0, %s26
      %s27 = sphi 0, %s24
      %s28 = sphi 0, %s27
      %s44 = sphi 0, %s28
      %s48 = sphi 0, %s48
      %s50 = sphi 0, %s48
      %s51 = sphi 0, %s50
      %s65 = sphi 0, %s51
      %s71 = sphi 0, %s73
      %s74 = sphi 0, %s71
      %s75 = sphi 0, %s74
      %s91 = sphi 0, %s75
      %s97 = sphi 0, %s99
      %s100 = sphi 0, %s97
      %s101 = sphi 0, %s100
      %s117 = sphi 0, %s101
      %s123 = sphi 0, %s125
      %s126 = sphi 0, %s123
      %s127 = sphi 0, %s126
      %s143 = sphi 0, %s127
    $region4: #{tpu_custom_call.1} parent=1 // loop_header_branch
      %17 = sbr.rel (%p15) target = $region8
    $region5: #{tpu_custom_call.1} parent=1 // loop_body
      %s19 = ssub.s32 %s14, 1
      %s20 = ssub.s32 %s14, 2
      %s21 = sadd.s32 %s14, 1
      %s22 = ssub.s32 %s14, %s21
      %p23 = scmp.eq.s32.totalorder %s22, 0
      %s25 = sadd.s32 %s24, 1
      %s26 = scalar_select %p23, %s24, %s25
      %p29 = pneg %p23
      %p30 = scmp.eq.s32.totalorder %s14, 1
      %p31 = por %p29, %p30
      %p32 = scmp.ne.s32.totalorder %s24, %s27
      %p33 = scmp.eq.s32.totalorder %s14, 0
      %p34 = por %p32, %p33
      %p35 = scmp.ne.s32.totalorder %s24, %s27
      %p36 = scmp.eq.s32.totalorder %s19, 1
      %p37 = por %p35, %p36
      %p38 = scmp.ne.s32.totalorder %s27, %s28
      %p39 = scmp.eq.s32.totalorder %s19, 0
      %p40 = por %p38, %p39
      %p41 = scmp.ne.s32.totalorder %s27, %s28
      %p42 = scmp.eq.s32.totalorder %s20, 1
      %p43 = por %p41, %p42
      %p45 = scmp.ne.s32.totalorder %s28, %s44
      %p46 = scmp.eq.s32.totalorder %s20, 0
      %p47 = por %p45, %p46
      %s49 = sadd.s32 %s48, 1
      %p52 = scmp.eq.s32.totalorder %s14, 1
      %p53 = scmp.ne.s32.totalorder %s48, %s50
      %p54 = scmp.eq.s32.totalorder %s14, 0
      %p55 = por %p53, %p54
      %p56 = scmp.ne.s32.totalorder %s48, %s50
      %p57 = scmp.eq.s32.totalorder %s19, 1
      %p58 = por %p56, %p57
      %p59 = scmp.ne.s32.totalorder %s50, %s51
      %p60 = scmp.eq.s32.totalorder %s19, 0
      %p61 = por %p59, %p60
      %p62 = scmp.ne.s32.totalorder %s50, %s51
      %p63 = scmp.eq.s32.totalorder %s20, 1
      %p64 = por %p62, %p63
      %p66 = scmp.ne.s32.totalorder %s51, %s65
      %p67 = scmp.eq.s32.totalorder %s20, 0
      %p68 = por %p66, %p67
      %s69 = ssub.s32 %s14, %s21
      %p70 = scmp.eq.s32.totalorder %s69, 0
      %s72 = sadd.s32 %s71, 1
      %s73 = scalar_select %p70, %s71, %s72
      %p76 = pneg %p70
      %p77 = scmp.eq.s32.totalorder %s14, 1
      %p78 = por %p76, %p77
      %p79 = scmp.ne.s32.totalorder %s71, %s74
      %p80 = scmp.eq.s32.totalorder %s14, 0
      %p81 = por %p79, %p80
      %p82 = scmp.ne.s32.totalorder %s71, %s74
      %p83 = scmp.eq.s32.totalorder %s19, 1
      %p84 = por %p82, %p83
      %p85 = scmp.ne.s32.totalorder %s74, %s75
      %p86 = scmp.eq.s32.totalorder %s19, 0
      %p87 = por %p85, %p86
      %p88 = scmp.ne.s32.totalorder %s74, %s75
      %p89 = scmp.eq.s32.totalorder %s20, 1
      %p90 = por %p88, %p89
      %p92 = scmp.ne.s32.totalorder %s75, %s91
      %p93 = scmp.eq.s32.totalorder %s20, 0
      %p94 = por %p92, %p93
      %s95 = ssub.s32 %s14, %s21
      %p96 = scmp.eq.s32.totalorder %s95, 0
      %s98 = sadd.s32 %s97, 1
      %s99 = scalar_select %p96, %s97, %s98
      %p102 = pneg %p96
      %p103 = scmp.eq.s32.totalorder %s14, 1
      %p104 = por %p102, %p103
      %p105 = scmp.ne.s32.totalorder %s97, %s100
      %p106 = scmp.eq.s32.totalorder %s14, 0
      %p107 = por %p105, %p106
      %p108 = scmp.ne.s32.totalorder %s97, %s100
      %p109 = scmp.eq.s32.totalorder %s19, 1
      %p110 = por %p108, %p109
      %p111 = scmp.ne.s32.totalorder %s100, %s101
      %p112 = scmp.eq.s32.totalorder %s19, 0
      %p113 = por %p111, %p112
      %p114 = scmp.ne.s32.totalorder %s100, %s101
      %p115 = scmp.eq.s32.totalorder %s20, 1
      %p116 = por %p114, %p115
      %p118 = scmp.ne.s32.totalorder %s101, %s117
      %p119 = scmp.eq.s32.totalorder %s20, 0
      %p120 = por %p118, %p119
      %s121 = ssub.s32 %s14, %s21
      %p122 = scmp.eq.s32.totalorder %s121, 0
      %s124 = sadd.s32 %s123, 1
      %s125 = scalar_select %p122, %s123, %s124
      %p128 = pneg %p122
      %p129 = scmp.eq.s32.totalorder %s14, 1
      %p130 = por %p128, %p129
      %p131 = scmp.ne.s32.totalorder %s123, %s126
      %p132 = scmp.eq.s32.totalorder %s14, 0
      %p133 = por %p131, %p132
      %p134 = scmp.ne.s32.totalorder %s123, %s126
      %p135 = scmp.eq.s32.totalorder %s19, 1
      %p136 = por %p134, %p135
      %p137 = scmp.ne.s32.totalorder %s126, %s127
      %p138 = scmp.eq.s32.totalorder %s19, 0
      %p139 = por %p137, %p138
      %p140 = scmp.ne.s32.totalorder %s126, %s127
      %p141 = scmp.eq.s32.totalorder %s20, 1
      %p142 = por %p140, %p141
      %p144 = scmp.ne.s32.totalorder %s127, %s143
      %p145 = scmp.eq.s32.totalorder %s20, 0
      %p146 = por %p144, %p145
      %p147 = scmp.le.s32.totalorder 1, %s14
      %p148 = scmp.lt.s32.totalorder %s14, 3
      %p149 = pnand %p147, %p148
      %p150 = pneg %p149
      // Predicated region
      $region9: #{tpu_custom_call.1} parent=5 // pred_check
        _
      $region10: #{tpu_custom_call.1} parent=5 // pred_check_branch
        %152 = sbr.rel (%p149) target = $region12
      $region11: #{tpu_custom_call.1} parent=5 // pred_region
        %s153 = ssub.s32 %s14, 1
        // Predicated region
        $region13: #{tpu_custom_call.1} parent=11 // pred_check
          %p154 = pneg %p61
        $region14: #{tpu_custom_call.1} parent=11 // pred_check_branch
          %156 = sbr.rel (%p154) target = $region16
        $region15: #{tpu_custom_call.1} parent=11 // pred_region
          _
        $region16: #{tpu_custom_call.1} parent=11 // pred_fallthru
          _
      $region12: #{tpu_custom_call.1} parent=5 // pred_fallthru
        _
      %p157 = scmp.lt.s32.totalorder %s14, 2
      // Predicated region
      $region17: #{tpu_custom_call.1} parent=5 // pred_check
        %p158 = pneg %p157
      $region18: #{tpu_custom_call.1} parent=5 // pred_check_branch
        %160 = sbr.rel (%p158) target = $region20
      $region19: #{tpu_custom_call.1} parent=5 // pred_region
        // Predicated region
        $region21: #{tpu_custom_call.1} parent=19 // pred_check
          %p161 = pneg %p34
        $region22: #{tpu_custom_call.1} parent=19 // pred_check_branch
          %163 = sbr.rel (%p161) target = $region24
        $region23: #{tpu_custom_call.1} parent=19 // pred_region
          %p164 = scmp.lt.s32.totalorder %s14, 1
          %s165 = scalar_select %p164, %s14, 1
          %s166 = smul.addr %s165, 54
          %s167 = smul.addr %s166, 8
          %s168 = scalar_lea.vmem %s0, %s167
        $region24: #{tpu_custom_call.1} parent=19 // pred_fallthru
          _
      $region20: #{tpu_custom_call.1} parent=5 // pred_fallthru
        _
      %p169 = scmp.le.s32.totalorder 1, %s14
      %p170 = scmp.lt.s32.totalorder %s14, 3
      %p171 = pnand %p169, %p170
      %p172 = pneg %p171
      // Predicated region
      $region25: #{tpu_custom_call.1} parent=5 // pred_check
        _
      $region26: #{tpu_custom_call.1} parent=5 // pred_check_branch
        %174 = sbr.rel (%p171) target = $region28
      $region27: #{tpu_custom_call.1} parent=5 // pred_region
        %s175 = ssub.s32 %s14, 1
        %p176 = scmp.lt.s32.totalorder %s19, 1
        %s177 = scalar_select %p176, %s19, 1
        %s178 = smul.addr %s177, 54
        %s179 = smul.addr %s178, 8
        %s180 = scalar_lea.vmem %s0, %s179
        %p181 = pneg %p40
        %p182 = pneg %p37
        %p183 = pneg %p61
        %p184 = pneg %p58
        %p185 = pneg %p87
        %p186 = pneg %p84
        %s187 = sand.u32 %s74, 1
        %s188 = scalar_lea.sflag [#allocation3], %s187
        %s189 = sand.u32 %s74, 1
        %s190 = smul.addr %s189, 8
        %s191 = scalar_lea.vmem [#allocation2], %s190
        %p192 = pneg %p113
        %p193 = pneg %p110
        %p194 = scmp.lt.s32.totalorder %s19, 1
        %s195 = scalar_select %p194, %s19, 1
        %s196 = smul.addr %s195, 4
        %s197 = scalar_lea.vmem %s3, %s196
        %p198 = pneg %p139
        %p199 = pneg %p136
        %p200 = scmp.lt.s32.totalorder %s19, 1
        %s201 = scalar_select %p200, %s19, 1
        %s202 = smul.addr %s201, 4
        %s203 = scalar_lea.vmem %s4, %s202
        %p204 = scmp.lt.s32.totalorder %s19, 1
        %s205 = scalar_select %p204, %s19, 1
        %s206 = smul.addr %s205, 54
        %s207 = smul.addr %s206, 8
        %s208 = scalar_lea.vmem %s0, %s207
        %p209 = scmp.lt.s32.totalorder %s19, 1
        %s210 = scalar_select %p209, %s19, 1
        %s211 = smul.addr %s210, 4
        %s212 = scalar_lea.vmem %s3, %s211
        %p213 = scmp.lt.s32.totalorder %s19, 1
        %s214 = scalar_select %p213, %s19, 1
        %s215 = smul.addr %s214, 4
        %s216 = scalar_lea.vmem %s4, %s215
        %v217 = vld [vmem:[%s208] sm:$0xff]
        %v218 = vld [vmem:[%s208 + $0x8] sm:$0xff]
        %v219 = vld [vmem:[%s208 + $0x18] sm:$0xff]
        %v220 = vld [vmem:[%s208 + $0x20] sm:$0xff]
        %v221 = vld [vmem:[%s208 + $0x30] sm:$0xff]
        %v222 = vld [vmem:[%s208 + $0x38] sm:$0xff]
        %v223 = vld [vmem:[%s208 + $0x48] sm:$0xff]
        %v224 = vld [vmem:[%s208 + $0x50] sm:$0xff]
        %v225 = vld [vmem:[%s208 + $0x60] sm:$0xff]
        %v226 = vld [vmem:[%s208 + $0x68] sm:$0xff]
        %v227 = vld [vmem:[%s208 + $0x78] sm:$0xff]
        %v228 = vld [vmem:[%s208 + $0x80] sm:$0xff]
        %v229 = vld [vmem:[%s208 + $0x90] sm:$0xff]
        %v230 = vld [vmem:[%s208 + $0x98] sm:$0xff]
        %v231 = vld [vmem:[%s208 + $0xa8] sm:$0xff]
        %v232 = vld [vmem:[%s208 + $0xb0] sm:$0xff]
        %v233 = vld [vmem:[%s208 + $0xc0] sm:$0xff]
        %v234 = vld [vmem:[%s208 + $0xc8] sm:$0xff]
        %v235 = vld [vmem:[%s208 + $0xd8] sm:$0xff]
        %v236 = vld [vmem:[%s208 + $0xe0] sm:$0xff]
        %v237 = vld [vmem:[%s208 + $0xf0] sm:$0xff]
        %v238 = vld [vmem:[%s208 + $0xf8] sm:$0xff]
        %v239 = vld [vmem:[%s208 + $0x108] sm:$0xff]
        %v240 = vld [vmem:[%s208 + $0x110] sm:$0xff]
        %v241 = vld [vmem:[%s208 + $0x120] sm:$0xff]
        %v242 = vld [vmem:[%s208 + $0x128] sm:$0xff]
        %v243 = vld [vmem:[%s208 + $0x138] sm:$0xff]
        %v244 = vld [vmem:[%s208 + $0x140] sm:$0xff]
        %v245 = vld [vmem:[%s208 + $0x150] sm:$0xff]
        %v246 = vld [vmem:[%s208 + $0x158] sm:$0xff]
        %v247 = vld [vmem:[%s208 + $0x168] sm:$0xff]
        %v248 = vld [vmem:[%s208 + $0x170] sm:$0xff]
        %v249 = vld [vmem:[%s1] sm:$0xf]
        %v250 = vld [vmem:[%s208 + $0x1] sm:$0xff]
        %v251 = vld [vmem:[%s208 + $0x9] sm:$0xff]
        %v252 = vld [vmem:[%s208 + $0x19] sm:$0xff]
        %v253 = vld [vmem:[%s208 + $0x21] sm:$0xff]
        %v254 = vld [vmem:[%s208 + $0x31] sm:$0xff]
        %v255 = vld [vmem:[%s208 + $0x39] sm:$0xff]
        %v256 = vld [vmem:[%s208 + $0x49] sm:$0xff]
        %v257 = vld [vmem:[%s208 + $0x51] sm:$0xff]
        %v258 = vld [vmem:[%s208 + $0x61] sm:$0xff]
        %v259 = vld [vmem:[%s208 + $0x69] sm:$0xff]
        %v260 = vld [vmem:[%s208 + $0x79] sm:$0xff]
        %v261 = vld [vmem:[%s208 + $0x81] sm:$0xff]
        %v262 = vld [vmem:[%s208 + $0x91] sm:$0xff]
        %v263 = vld [vmem:[%s208 + $0x99] sm:$0xff]
        %v264 = vld [vmem:[%s208 + $0xa9] sm:$0xff]
        %v265 = vld [vmem:[%s208 + $0xb1] sm:$0xff]
        %v266 = vld [vmem:[%s208 + $0xc1] sm:$0xff]
        %v267 = vld [vmem:[%s208 + $0xc9] sm:$0xff]
        %v268 = vld [vmem:[%s208 + $0xd9] sm:$0xff]
        %v269 = vld [vmem:[%s208 + $0xe1] sm:$0xff]
        %v270 = vld [vmem:[%s208 + $0xf1] sm:$0xff]
        %v271 = vld [vmem:[%s208 + $0xf9] sm:$0xff]
        %v272 = vld [vmem:[%s208 + $0x109] sm:$0xff]
        %v273 = vld [vmem:[%s208 + $0x111] sm:$0xff]
        %v274 = vld [vmem:[%s208 + $0x121] sm:$0xff]
        %v275 = vld [vmem:[%s208 + $0x129] sm:$0xff]
        %v276 = vld [vmem:[%s208 + $0x139] sm:$0xff]
        %v277 = vld [vmem:[%s208 + $0x141] sm:$0xff]
        %v278 = vld [vmem:[%s208 + $0x151] sm:$0xff]
        %v279 = vld [vmem:[%s208 + $0x159] sm:$0xff]
        %v280 = vld [vmem:[%s208 + $0x169] sm:$0xff]
        %v281 = vld [vmem:[%s208 + $0x171] sm:$0xff]
        %s282 = scalar_lea.vmem %s1, 4
        %v283 = vld [vmem:[%s282] sm:$0xf]
        %vm284 = vcmask 31744
        %v286 = vsel %vm284, %v250, 0
        %v289 = vsel %vm284, %v251, 0
        %v292 = vsel %vm284, %v252, 0
        %v295 = vsel %vm284, %v253, 0
        %v298 = vsel %vm284, %v254, 0
        %v301 = vsel %vm284, %v255, 0
        %v304 = vsel %vm284, %v256, 0
        %v307 = vsel %vm284, %v257, 0
        %v310 = vsel %vm284, %v258, 0
        %v313 = vsel %vm284, %v259, 0
        %v316 = vsel %vm284, %v260, 0
        %v319 = vsel %vm284, %v261, 0
        %v322 = vsel %vm284, %v262, 0
        %v325 = vsel %vm284, %v263, 0
        %v328 = vsel %vm284, %v264, 0
        %v331 = vsel %vm284, %v265, 0
        %v334 = vsel %vm284, %v266, 0
        %v337 = vsel %vm284, %v267, 0
        %v340 = vsel %vm284, %v268, 0
        %v343 = vsel %vm284, %v269, 0
        %v346 = vsel %vm284, %v270, 0
        %v349 = vsel %vm284, %v271, 0
        %v352 = vsel %vm284, %v272, 0
        %v355 = vsel %vm284, %v273, 0
        %v358 = vsel %vm284, %v274, 0
        %v361 = vsel %vm284, %v275, 0
        %v364 = vsel %vm284, %v276, 0
        %v367 = vsel %vm284, %v277, 0
        %v370 = vsel %vm284, %v278, 0
        %v373 = vsel %vm284, %v279, 0
        %v376 = vsel %vm284, %v280, 0
        %v379 = vsel %vm284, %v281, 0
        %vm381 = vcmask 1043456
        %v383 = vsel %vm381, %v283, 0
        %385 = vmatprep.subr.mxu0 0.0
        %386 = vmatpush1.msra.mxu0 %v383
        %387 = vmatprep.subr.mxu0 0.0
        %388 = vmatpush1.msra.mxu0 0.0
        %389 = vmatprep.subr.mxu0 0.0
        %390 = vmatpush1.msra.mxu0 0.0
        %391 = vmatprep.subr.mxu0 0.0
        %392 = vmatpush1.msra.mxu0 0.0
        %393 = vmatprep.subr.mxu0 0.0
        %394 = vmatpush1.msra.mxu0 0.0
        %395 = vmatprep.subr.mxu0 0.0
        %396 = vmatpush1.msra.mxu0 0.0
        %397 = vmatprep.subr.mxu0 0.0
        %398 = vmatpush1.msra.mxu0 0.0
        %399 = vmatprep.subr.mxu0 0.0
        %400 = vmatpush1.msra.mxu0 0.0
        %401 = vmatprep.subr.mxu0 0.0
        %402 = vmatpush1.msra.mxu0 0.0
        %403 = vmatprep.subr.mxu0 0.0
        %404 = vmatpush1.msra.mxu0 0.0
        %405 = vmatprep.subr.mxu0 0.0
        %406 = vmatpush1.msra.mxu0 0.0
        %407 = vmatprep.subr.mxu0 0.0
        %408 = vmatpush1.msra.mxu0 0.0
        %409 = vmatprep.subr.mxu0 0.0
        %410 = vmatpush1.msra.mxu0 0.0
        %411 = vmatprep.subr.mxu0 0.0
        %412 = vmatpush1.msra.mxu0 0.0
        %413 = vmatprep.subr.mxu0 0.0
        %414 = vmatpush1.msra.mxu0 0.0
        %415 = vmatprep.subr.mxu0 0.0
        %416 = vmatpush1.msra.mxu0 0.0
        %417 = vmatprep.subr.mxu0 0.0
        %418 = vmatpush1.msra.mxu0 0.0
        %419 = vmatprep.subr.mxu0 0.0
        %420 = vmatpush1.msra.mxu0 0.0
        %421 = vmatprep.subr.mxu0 0.0
        %422 = vmatpush1.msra.mxu0 0.0
        %423 = vmatprep.subr.mxu0 0.0
        %424 = vmatpush1.msra.mxu0 0.0
        %425 = vmatprep.subr.mxu0 0.0
        %426 = vmatpush1.msra.mxu0 0.0
        %427 = vmatprep.subr.mxu0 0.0
        %428 = vmatpush1.msra.mxu0 0.0
        %429 = vmatprep.subr.mxu0 0.0
        %430 = vmatpush1.msra.mxu0 0.0
        %431 = vmatprep.subr.mxu0 0.0
        %432 = vmatpush1.msra.mxu0 0.0
        %433 = vmatprep.subr.mxu0 0.0
        %434 = vmatpush1.msra.mxu0 0.0
        %435 = vmatprep.subr.mxu0 0.0
        %436 = vmatpush1.msra.mxu0 0.0
        %437 = vmatprep.subr.mxu0 0.0
        %438 = vmatpush1.msra.mxu0 0.0
        %439 = vmatprep.subr.mxu0 0.0
        %440 = vmatpush1.msra.mxu0 0.0
        %441 = vmatprep.subr.mxu0 0.0
        %442 = vmatpush1.msra.mxu0 0.0
        %443 = vmatprep.subr.mxu0 0.0
        %444 = vmatpush1.msra.mxu0 0.0
        %445 = vmatprep.subr.mxu0 0.0
        %446 = vmatpush1.msra.mxu0 0.0
        %447 = vmatprep.subr.mxu0 0.0
        %448 = vmatpush1.msra.mxu0 0.0
        %449 = vmatprep.mubr.f32.mxu0 0.0
        %450 = vmatmul.mubr.f32.gmra.mrb[0].mxu0 %v286
        %v451 = vpop.f32.mrb[0].mxu0
        %v452 = vadd.f32 0.0, %v451
        %v453 = vpop.f32.mrb[0].mxu0
        %454 = vmatprep.mubr.f32.mxu0 0.0
        %455 = vmatmul.mubr.f32.gmra.mrb[0].mxu0 %v289
        %v456 = vpop.f32.mrb[0].mxu0
        %v457 = vadd.f32 0.0, %v456
        %v458 = vpop.f32.mrb[0].mxu0
        %459 = vmatprep.mubr.f32.mxu0 0.0
        %460 = vmatmul.mubr.f32.gmra.mrb[0].mxu0 %v292
        %v461 = vpop.f32.mrb[0].mxu0
        %v462 = vadd.f32 0.0, %v461
        %v463 = vpop.f32.mrb[0].mxu0
        %464 = vmatprep.mubr.f32.mxu0 0.0
        %465 = vmatmul.mubr.f32.gmra.mrb[0].mxu0 %v295
        %v466 = vpop.f32.mrb[0].mxu0
        %v467 = vadd.f32 0.0, %v466
        %v468 = vpop.f32.mrb[0].mxu0
        %469 = vmatprep.mubr.f32.mxu0 0.0
        %470 = vmatmul.mubr.f32.gmra.mrb[0].mxu0 %v298
        %v471 = vpop.f32.mrb[0].mxu0
        %v472 = vadd.f32 0.0, %v471
        %v473 = vpop.f32.mrb[0].mxu0
        %474 = vmatprep.mubr.f32.mxu0 0.0
        %475 = vmatmul.mubr.f32.gmra.mrb[0].mxu0 %v301
        %v476 = vpop.f32.mrb[0].mxu0
        %v477 = vadd.f32 0.0, %v476
        %v478 = vpop.f32.mrb[0].mxu0
        %479 = vmatprep.mubr.f32.mxu0 0.0
        %480 = vmatmul.mubr.f32.gmra.mrb[0].mxu0 %v304
        %v481 = vpop.f32.mrb[0].mxu0
        %v482 = vadd.f32 0.0, %v481
        %v483 = vpop.f32.mrb[0].mxu0
        %484 = vmatprep.mubr.f32.mxu0 0.0
        %485 = vmatmul.mubr.f32.gmra.mrb[0].mxu0 %v307
        %v486 = vpop.f32.mrb[0].mxu0
        %v487 = vadd.f32 0.0, %v486
        %v488 = vpop.f32.mrb[0].mxu0
        %489 = vmatprep.mubr.f32.mxu0 0.0
        %490 = vmatmul.mubr.f32.gmra.mrb[0].mxu0 %v310
        %v491 = vpop.f32.mrb[0].mxu0
        %v492 = vadd.f32 0.0, %v491
        %v493 = vpop.f32.mrb[0].mxu0
        %494 = vmatprep.mubr.f32.mxu0 0.0
        %495 = vmatmul.mubr.f32.gmra.mrb[0].mxu0 %v313
        %v496 = vpop.f32.mrb[0].mxu0
        %v497 = vadd.f32 0.0, %v496
        %v498 = vpop.f32.mrb[0].mxu0
        %499 = vmatprep.mubr.f32.mxu0 0.0
        %500 = vmatmul.mubr.f32.gmra.mrb[0].mxu0 %v316
        %v501 = vpop.f32.mrb[0].mxu0
        %v502 = vadd.f32 0.0, %v501
        %v503 = vpop.f32.mrb[0].mxu0
        %504 = vmatprep.mubr.f32.mxu0 0.0
        %505 = vmatmul.mubr.f32.gmra.mrb[0].mxu0 %v319
        %v506 = vpop.f32.mrb[0].mxu0
        %v507 = vadd.f32 0.0, %v506
        %v508 = vpop.f32.mrb[0].mxu0
        %509 = vmatprep.mubr.f32.mxu0 0.0
        %510 = vmatmul.mubr.f32.gmra.mrb[0].mxu0 %v322
        %v511 = vpop.f32.mrb[0].mxu0
        %v512 = vadd.f32 0.0, %v511
        %v513 = vpop.f32.mrb[0].mxu0
        %514 = vmatprep.mubr.f32.mxu0 0.0
        %515 = vmatmul.mubr.f32.gmra.mrb[0].mxu0 %v325
        %v516 = vpop.f32.mrb[0].mxu0
        %v517 = vadd.f32 0.0, %v516
        %v518 = vpop.f32.mrb[0].mxu0
        %519 = vmatprep.mubr.f32.mxu0 0.0
        %520 = vmatmul.mubr.f32.gmra.mrb[0].mxu0 %v328
        %v521 = vpop.f32.mrb[0].mxu0
        %v522 = vadd.f32 0.0, %v521
        %v523 = vpop.f32.mrb[0].mxu0
        %524 = vmatprep.mubr.f32.mxu0 0.0
        %525 = vmatmul.mubr.f32.gmra.mrb[0].mxu0 %v331
        %v526 = vpop.f32.mrb[0].mxu0
        %v527 = vadd.f32 0.0, %v526
        %v528 = vpop.f32.mrb[0].mxu0
        %529 = vmatprep.mubr.f32.mxu0 0.0
        %530 = vmatmul.mubr.f32.gmra.mrb[0].mxu0 %v334
        %v531 = vpop.f32.mrb[0].mxu0
        %v532 = vadd.f32 0.0, %v531
        %v533 = vpop.f32.mrb[0].mxu0
        %534 = vmatprep.mubr.f32.mxu0 0.0
        %535 = vmatmul.mubr.f32.gmra.mrb[0].mxu0 %v337
        %v536 = vpop.f32.mrb[0].mxu0
        %v537 = vadd.f32 0.0, %v536
        %v538 = vpop.f32.mrb[0].mxu0
        %539 = vmatprep.mubr.f32.mxu0 0.0
        %540 = vmatmul.mubr.f32.gmra.mrb[0].mxu0 %v340
        %v541 = vpop.f32.mrb[0].mxu0
        %v542 = vadd.f32 0.0, %v541
        %v543 = vpop.f32.mrb[0].mxu0
        %544 = vmatprep.mubr.f32.mxu0 0.0
        %545 = vmatmul.mubr.f32.gmra.mrb[0].mxu0 %v343
        %v546 = vpop.f32.mrb[0].mxu0
        %v547 = vadd.f32 0.0, %v546
        %v548 = vpop.f32.mrb[0].mxu0
        %549 = vmatprep.mubr.f32.mxu0 0.0
        %550 = vmatmul.mubr.f32.gmra.mrb[0].mxu0 %v346
        %v551 = vpop.f32.mrb[0].mxu0
        %v552 = vadd.f32 0.0, %v551
        %v553 = vpop.f32.mrb[0].mxu0
        %554 = vmatprep.mubr.f32.mxu0 0.0
        %555 = vmatmul.mubr.f32.gmra.mrb[0].mxu0 %v349
        %v556 = vpop.f32.mrb[0].mxu0
        %v557 = vadd.f32 0.0, %v556
        %v558 = vpop.f32.mrb[0].mxu0
        %559 = vmatprep.mubr.f32.mxu0 0.0
        %560 = vmatmul.mubr.f32.gmra.mrb[0].mxu0 %v352
        %v561 = vpop.f32.mrb[0].mxu0
        %v562 = vadd.f32 0.0, %v561
        %v563 = vpop.f32.mrb[0].mxu0
        %564 = vmatprep.mubr.f32.mxu0 0.0
        %565 = vmatmul.mubr.f32.gmra.mrb[0].mxu0 %v355
        %v566 = vpop.f32.mrb[0].mxu0
        %v567 = vadd.f32 0.0, %v566
        %v568 = vpop.f32.mrb[0].mxu0
        %569 = vmatprep.mubr.f32.mxu0 0.0
        %570 = vmatmul.mubr.f32.gmra.mrb[0].mxu0 %v358
        %v571 = vpop.f32.mrb[0].mxu0
        %v572 = vadd.f32 0.0, %v571
        %v573 = vpop.f32.mrb[0].mxu0
        %574 = vmatprep.mubr.f32.mxu0 0.0
        %575 = vmatmul.mubr.f32.gmra.mrb[0].mxu0 %v361
        %v576 = vpop.f32.mrb[0].mxu0
        %v577 = vadd.f32 0.0, %v576
        %v578 = vpop.f32.mrb[0].mxu0
        %579 = vmatprep.mubr.f32.mxu0 0.0
        %580 = vmatmul.mubr.f32.gmra.mrb[0].mxu0 %v364
        %v581 = vpop.f32.mrb[0].mxu0
        %v582 = vadd.f32 0.0, %v581
        %v583 = vpop.f32.mrb[0].mxu0
        %584 = vmatprep.mubr.f32.mxu0 0.0
        %585 = vmatmul.mubr.f32.gmra.mrb[0].mxu0 %v367
        %v586 = vpop.f32.mrb[0].mxu0
        %v587 = vadd.f32 0.0, %v586
        %v588 = vpop.f32.mrb[0].mxu0
        %589 = vmatprep.mubr.f32.mxu0 0.0
        %590 = vmatmul.mubr.f32.gmra.mrb[0].mxu0 %v370
        %v591 = vpop.f32.mrb[0].mxu0
        %v592 = vadd.f32 0.0, %v591
        %v593 = vpop.f32.mrb[0].mxu0
        %594 = vmatprep.mubr.f32.mxu0 0.0
        %595 = vmatmul.mubr.f32.gmra.mrb[0].mxu0 %v373
        %v596 = vpop.f32.mrb[0].mxu0
        %v597 = vadd.f32 0.0, %v596
        %v598 = vpop.f32.mrb[0].mxu0
        %599 = vmatprep.mubr.f32.mxu0 0.0
        %600 = vmatmul.mubr.f32.gmra.mrb[0].mxu0 %v376
        %v601 = vpop.f32.mrb[0].mxu0
        %v602 = vadd.f32 0.0, %v601
        %v603 = vpop.f32.mrb[0].mxu0
        %604 = vmatprep.mubr.f32.mxu0 0.0
        %605 = vmatmul.mubr.f32.gmra.mrb[0].mxu0 %v379
        %v606 = vpop.f32.mrb[0].mxu0
        %v607 = vadd.f32 0.0, %v606
        %v608 = vpop.f32.mrb[0].mxu0
        %609 = vdwg.mxu0
        %v611 = vsel %vm284, %v217, 0
        %v614 = vsel %vm284, %v218, 0
        %v617 = vsel %vm284, %v219, 0
        %v620 = vsel %vm284, %v220, 0
        %v623 = vsel %vm284, %v221, 0
        %v626 = vsel %vm284, %v222, 0
        %v629 = vsel %vm284, %v223, 0
        %v632 = vsel %vm284, %v224, 0
        %v635 = vsel %vm284, %v225, 0
        %v638 = vsel %vm284, %v226, 0
        %v641 = vsel %vm284, %v227, 0
        %v644 = vsel %vm284, %v228, 0
        %v647 = vsel %vm284, %v229, 0
        %v650 = vsel %vm284, %v230, 0
        %v653 = vsel %vm284, %v231, 0
        %v656 = vsel %vm284, %v232, 0
        %v659 = vsel %vm284, %v233, 0
        %v662 = vsel %vm284, %v234, 0
        %v665 = vsel %vm284, %v235, 0
        %v668 = vsel %vm284, %v236, 0
        %v671 = vsel %vm284, %v237, 0
        %v674 = vsel %vm284, %v238, 0
        %v677 = vsel %vm284, %v239, 0
        %v680 = vsel %vm284, %v240, 0
        %v683 = vsel %vm284, %v241, 0
        %v686 = vsel %vm284, %v242, 0
        %v689 = vsel %vm284, %v243, 0
        %v692 = vsel %vm284, %v244, 0
        %v695 = vsel %vm284, %v245, 0
        %v698 = vsel %vm284, %v246, 0
        %v701 = vsel %vm284, %v247, 0
        %v704 = vsel %vm284, %v248, 0
        %v707 = vsel %vm381, %v249, 0
        %709 = vmatprep.subr.mxu0 0.0
        %710 = vmatpush1.msra.mxu0 %v707
        %711 = vmatprep.subr.mxu0 0.0
        %712 = vmatpush1.msra.mxu0 0.0
        %713 = vmatprep.subr.mxu0 0.0
        %714 = vmatpush1.msra.mxu0 0.0
        %715 = vmatprep.subr.mxu0 0.0
        %716 = vmatpush1.msra.mxu0 0.0
        %717 = vmatprep.subr.mxu0 0.0
        %718 = vmatpush1.msra.mxu0 0.0
        %719 = vmatprep.subr.mxu0 0.0
        %720 = vmatpush1.msra.mxu0 0.0
        %721 = vmatprep.subr.mxu0 0.0
        %722 = vmatpush1.msra.mxu0 0.0
        %723 = vmatprep.subr.mxu0 0.0
        %724 = vmatpush1.msra.mxu0 0.0
        %725 = vmatprep.subr.mxu0 0.0
        %726 = vmatpush1.msra.mxu0 0.0
        %727 = vmatprep.subr.mxu0 0.0
        %728 = vmatpush1.msra.mxu0 0.0
        %729 = vmatprep.subr.mxu0 0.0
        %730 = vmatpush1.msra.mxu0 0.0
        %731 = vmatprep.subr.mxu0 0.0
        %732 = vmatpush1.msra.mxu0 0.0
        %733 = vmatprep.subr.mxu0 0.0
        %734 = vmatpush1.msra.mxu0 0.0
        %735 = vmatprep.subr.mxu0 0.0
        %736 = vmatpush1.msra.mxu0 0.0
        %737 = vmatprep.subr.mxu0 0.0
        %738 = vmatpush1.msra.mxu0 0.0
        %739 = vmatprep.subr.mxu0 0.0
        %740 = vmatpush1.msra.mxu0 0.0
        %741 = vmatprep.subr.mxu0 0.0
        %742 = vmatpush1.msra.mxu0 0.0
        %743 = vmatprep.subr.mxu0 0.0
        %744 = vmatpush1.msra.mxu0 0.0
        %745 = vmatprep.subr.mxu0 0.0
        %746 = vmatpush1.msra.mxu0 0.0
        %747 = vmatprep.subr.mxu0 0.0
        %748 = vmatpush1.msra.mxu0 0.0
        %749 = vmatprep.subr.mxu0 0.0
        %750 = vmatpush1.msra.mxu0 0.0
        %751 = vmatprep.subr.mxu0 0.0
        %752 = vmatpush1.msra.mxu0 0.0
        %753 = vmatprep.subr.mxu0 0.0
        %754 = vmatpush1.msra.mxu0 0.0
        %755 = vmatprep.subr.mxu0 0.0
        %756 = vmatpush1.msra.mxu0 0.0
        %757 = vmatprep.subr.mxu0 0.0
        %758 = vmatpush1.msra.mxu0 0.0
        %759 = vmatprep.subr.mxu0 0.0
        %760 = vmatpush1.msra.mxu0 0.0
        %761 = vmatprep.subr.mxu0 0.0
        %762 = vmatpush1.msra.mxu0 0.0
        %763 = vmatprep.subr.mxu0 0.0
        %764 = vmatpush1.msra.mxu0 0.0
        %765 = vmatprep.subr.mxu0 0.0
        %766 = vmatpush1.msra.mxu0 0.0
        %767 = vmatprep.subr.mxu0 0.0
        %768 = vmatpush1.msra.mxu0 0.0
        %769 = vmatprep.subr.mxu0 0.0
        %770 = vmatpush1.msra.mxu0 0.0
        %771 = vmatprep.subr.mxu0 0.0
        %772 = vmatpush1.msra.mxu0 0.0
        %773 = vmatprep.mubr.f32.mxu0 0.0
        %774 = vmatmul.mubr.f32.gmra.mrb[0].mxu0 %v611
        %v775 = vpop.f32.mrb[0].mxu0
        %v776 = vadd.f32 %v452, %v775
        %v777 = vpop.f32.mrb[0].mxu0
        %778 = vmatprep.mubr.f32.mxu0 0.0
        %779 = vmatmul.mubr.f32.gmra.mrb[0].mxu0 %v614
        %v780 = vpop.f32.mrb[0].mxu0
        %v781 = vadd.f32 %v457, %v780
        %v782 = vpop.f32.mrb[0].mxu0
        %783 = vmatprep.mubr.f32.mxu0 0.0
        %784 = vmatmul.mubr.f32.gmra.mrb[0].mxu0 %v617
        %v785 = vpop.f32.mrb[0].mxu0
        %v786 = vadd.f32 %v462, %v785
        %v787 = vpop.f32.mrb[0].mxu0
        %788 = vmatprep.mubr.f32.mxu0 0.0
        %789 = vmatmul.mubr.f32.gmra.mrb[0].mxu0 %v620
        %v790 = vpop.f32.mrb[0].mxu0
        %v791 = vadd.f32 %v467, %v790
        %v792 = vpop.f32.mrb[0].mxu0
        %793 = vmatprep.mubr.f32.mxu0 0.0
        %794 = vmatmul.mubr.f32.gmra.mrb[0].mxu0 %v623
        %v795 = vpop.f32.mrb[0].mxu0
        %v796 = vadd.f32 %v472, %v795
        %v797 = vpop.f32.mrb[0].mxu0
        %798 = vmatprep.mubr.f32.mxu0 0.0
        %799 = vmatmul.mubr.f32.gmra.mrb[0].mxu0 %v626
        %v800 = vpop.f32.mrb[0].mxu0
        %v801 = vadd.f32 %v477, %v800
        %v802 = vpop.f32.mrb[0].mxu0
        %803 = vmatprep.mubr.f32.mxu0 0.0
        %804 = vmatmul.mubr.f32.gmra.mrb[0].mxu0 %v629
        %v805 = vpop.f32.mrb[0].mxu0
        %v806 = vadd.f32 %v482, %v805
        %v807 = vpop.f32.mrb[0].mxu0
        %808 = vmatprep.mubr.f32.mxu0 0.0
        %809 = vmatmul.mubr.f32.gmra.mrb[0].mxu0 %v632
        %v810 = vpop.f32.mrb[0].mxu0
        %v811 = vadd.f32 %v487, %v810
        %v812 = vpop.f32.mrb[0].mxu0
        %813 = vmatprep.mubr.f32.mxu0 0.0
        %814 = vmatmul.mubr.f32.gmra.mrb[0].mxu0 %v635
        %v815 = vpop.f32.mrb[0].mxu0
        %v816 = vadd.f32 %v492, %v815
        %v817 = vpop.f32.mrb[0].mxu0
        %818 = vmatprep.mubr.f32.mxu0 0.0
        %819 = vmatmul.mubr.f32.gmra.mrb[0].mxu0 %v638
        %v820 = vpop.f32.mrb[0].mxu0
        %v821 = vadd.f32 %v497, %v820
        %v822 = vpop.f32.mrb[0].mxu0
        %823 = vmatprep.mubr.f32.mxu0 0.0
        %824 = vmatmul.mubr.f32.gmra.mrb[0].mxu0 %v641
        %v825 = vpop.f32.mrb[0].mxu0
        %v826 = vadd.f32 %v502, %v825
        %v827 = vpop.f32.mrb[0].mxu0
        %828 = vmatprep.mubr.f32.mxu0 0.0
        %829 = vmatmul.mubr.f32.gmra.mrb[0].mxu0 %v644
        %v830 = vpop.f32.mrb[0].mxu0
        %v831 = vadd.f32 %v507, %v830
        %v832 = vpop.f32.mrb[0].mxu0
        %833 = vmatprep.mubr.f32.mxu0 0.0
        %834 = vmatmul.mubr.f32.gmra.mrb[0].mxu0 %v647
        %v835 = vpop.f32.mrb[0].mxu0
        %v836 = vadd.f32 %v512, %v835
        %v837 = vpop.f32.mrb[0].mxu0
        %838 = vmatprep.mubr.f32.mxu0 0.0
        %839 = vmatmul.mubr.f32.gmra.mrb[0].mxu0 %v650
        %v840 = vpop.f32.mrb[0].mxu0
        %v841 = vadd.f32 %v517, %v840
        %v842 = vpop.f32.mrb[0].mxu0
        %843 = vmatprep.mubr.f32.mxu0 0.0
        %844 = vmatmul.mubr.f32.gmra.mrb[0].mxu0 %v653
        %v845 = vpop.f32.mrb[0].mxu0
        %v846 = vadd.f32 %v522, %v845
        %v847 = vpop.f32.mrb[0].mxu0
        %848 = vmatprep.mubr.f32.mxu0 0.0
        %849 = vmatmul.mubr.f32.gmra.mrb[0].mxu0 %v656
        %v850 = vpop.f32.mrb[0].mxu0
        %v851 = vadd.f32 %v527, %v850
        %v852 = vpop.f32.mrb[0].mxu0
        %853 = vmatprep.mubr.f32.mxu0 0.0
        %854 = vmatmul.mubr.f32.gmra.mrb[0].mxu0 %v659
        %v855 = vpop.f32.mrb[0].mxu0
        %v856 = vadd.f32 %v532, %v855
        %v857 = vpop.f32.mrb[0].mxu0
        %858 = vmatprep.mubr.f32.mxu0 0.0
        %859 = vmatmul.mubr.f32.gmra.mrb[0].mxu0 %v662
        %v860 = vpop.f32.mrb[0].mxu0
        %v861 = vadd.f32 %v537, %v860
        %v862 = vpop.f32.mrb[0].mxu0
        %863 = vmatprep.mubr.f32.mxu0 0.0
        %864 = vmatmul.mubr.f32.gmra.mrb[0].mxu0 %v665
        %v865 = vpop.f32.mrb[0].mxu0
        %v866 = vadd.f32 %v542, %v865
        %v867 = vpop.f32.mrb[0].mxu0
        %868 = vmatprep.mubr.f32.mxu0 0.0
        %869 = vmatmul.mubr.f32.gmra.mrb[0].mxu0 %v668
        %v870 = vpop.f32.mrb[0].mxu0
        %v871 = vadd.f32 %v547, %v870
        %v872 = vpop.f32.mrb[0].mxu0
        %873 = vmatprep.mubr.f32.mxu0 0.0
        %874 = vmatmul.mubr.f32.gmra.mrb[0].mxu0 %v671
        %v875 = vpop.f32.mrb[0].mxu0
        %v876 = vadd.f32 %v552, %v875
        %v877 = vpop.f32.mrb[0].mxu0
        %878 = vmatprep.mubr.f32.mxu0 0.0
        %879 = vmatmul.mubr.f32.gmra.mrb[0].mxu0 %v674
        %v880 = vpop.f32.mrb[0].mxu0
        %v881 = vadd.f32 %v557, %v880
        %v882 = vpop.f32.mrb[0].mxu0
        %883 = vmatprep.mubr.f32.mxu0 0.0
        %884 = vmatmul.mubr.f32.gmra.mrb[0].mxu0 %v677
        %v885 = vpop.f32.mrb[0].mxu0
        %v886 = vadd.f32 %v562, %v885
        %v887 = vpop.f32.mrb[0].mxu0
        %888 = vmatprep.mubr.f32.mxu0 0.0
        %889 = vmatmul.mubr.f32.gmra.mrb[0].mxu0 %v680
        %v890 = vpop.f32.mrb[0].mxu0
        %v891 = vadd.f32 %v567, %v890
        %v892 = vpop.f32.mrb[0].mxu0
        %893 = vmatprep.mubr.f32.mxu0 0.0
        %894 = vmatmul.mubr.f32.gmra.mrb[0].mxu0 %v683
        %v895 = vpop.f32.mrb[0].mxu0
        %v896 = vadd.f32 %v572, %v895
        %v897 = vpop.f32.mrb[0].mxu0
        %898 = vmatprep.mubr.f32.mxu0 0.0
        %899 = vmatmul.mubr.f32.gmra.mrb[0].mxu0 %v686
        %v900 = vpop.f32.mrb[0].mxu0
        %v901 = vadd.f32 %v577, %v900
        %v902 = vpop.f32.mrb[0].mxu0
        %903 = vmatprep.mubr.f32.mxu0 0.0
        %904 = vmatmul.mubr.f32.gmra.mrb[0].mxu0 %v689
        %v905 = vpop.f32.mrb[0].mxu0
        %v906 = vadd.f32 %v582, %v905
        %v907 = vpop.f32.mrb[0].mxu0
        %908 = vmatprep.mubr.f32.mxu0 0.0
        %909 = vmatmul.mubr.f32.gmra.mrb[0].mxu0 %v692
        %v910 = vpop.f32.mrb[0].mxu0
        %v911 = vadd.f32 %v587, %v910
        %v912 = vpop.f32.mrb[0].mxu0
        %913 = vmatprep.mubr.f32.mxu0 0.0
        %914 = vmatmul.mubr.f32.gmra.mrb[0].mxu0 %v695
        %v915 = vpop.f32.mrb[0].mxu0
        %v916 = vadd.f32 %v592, %v915
        %v917 = vpop.f32.mrb[0].mxu0
        %918 = vmatprep.mubr.f32.mxu0 0.0
        %919 = vmatmul.mubr.f32.gmra.mrb[0].mxu0 %v698
        %v920 = vpop.f32.mrb[0].mxu0
        %v921 = vadd.f32 %v597, %v920
        %v922 = vpop.f32.mrb[0].mxu0
        %923 = vmatprep.mubr.f32.mxu0 0.0
        %924 = vmatmul.mubr.f32.gmra.mrb[0].mxu0 %v701
        %v925 = vpop.f32.mrb[0].mxu0
        %v926 = vadd.f32 %v602, %v925
        %v927 = vpop.f32.mrb[0].mxu0
        %928 = vmatprep.mubr.f32.mxu0 0.0
        %929 = vmatmul.mubr.f32.gmra.mrb[0].mxu0 %v704
        %v930 = vpop.f32.mrb[0].mxu0
        %v931 = vadd.f32 %v607, %v930
        %v932 = vpop.f32.mrb[0].mxu0
        %933 = vdwg.mxu0
        %v934 = vld [vmem:[%s208 + $0x2] sm:$0xff]
        %v935 = vld [vmem:[%s208 + $0xa] sm:$0xff]
        %v936 = vld [vmem:[%s208 + $0x1a] sm:$0xff]
        %v937 = vld [vmem:[%s208 + $0x22] sm:$0xff]
        %v938 = vld [vmem:[%s208 + $0x32] sm:$0xff]
        %v939 = vld [vmem:[%s208 + $0x3a] sm:$0xff]
        %v940 = vld [vmem:[%s208 + $0x4a] sm:$0xff]
        %v941 = vld [vmem:[%s208 + $0x52] sm:$0xff]
        %v942 = vld [vmem:[%s208 + $0x62] sm:$0xff]
        %v943 = vld [vmem:[%s208 + $0x6a] sm:$0xff]
        %v944 = vld [vmem:[%s208 + $0x7a] sm:$0xff]
        %v945 = vld [vmem:[%s208 + $0x82] sm:$0xff]
        %v946 = vld [vmem:[%s208 + $0x92] sm:$0xff]
        %v947 = vld [vmem:[%s208 + $0x9a] sm:$0xff]
        %v948 = vld [vmem:[%s208 + $0xaa] sm:$0xff]
        %v949 = vld [vmem:[%s208 + $0xb2] sm:$0xff]
        %v950 = vld [vmem:[%s208 + $0xc2] sm:$0xff]
        %v951 = vld [vmem:[%s208 + $0xca] sm:$0xff]
        %v952 = vld [vmem:[%s208 + $0xda] sm:$0xff]
        %v953 = vld [vmem:[%s208 + $0xe2] sm:$0xff]
        %v954 = vld [vmem:[%s208 + $0xf2] sm:$0xff]
        %v955 = vld [vmem:[%s208 + $0xfa] sm:$0xff]
        %v956 = vld [vmem:[%s208 + $0x10a] sm:$0xff]
        %v957 = vld [vmem:[%s208 + $0x112] sm:$0xff]
        %v958 = vld [vmem:[%s208 + $0x122] sm:$0xff]
        %v959 = vld [vmem:[%s208 + $0x12a] sm:$0xff]
        %v960 = vld [vmem:[%s208 + $0x13a] sm:$0xff]
        %v961 = vld [vmem:[%s208 + $0x142] sm:$0xff]
        %v962 = vld [vmem:[%s208 + $0x152] sm:$0xff]
        %v963 = vld [vmem:[%s208 + $0x15a] sm:$0xff]
        %v964 = vld [vmem:[%s208 + $0x16a] sm:$0xff]
        %v965 = vld [vmem:[%s208 + $0x172] sm:$0xff]
        %s966 = scalar_lea.vmem %s1, 8
        %v967 = vld [vmem:[%s966] sm:$0xf]
        %v969 = vsel %vm284, %v934, 0
        %v972 = vsel %vm284, %v935, 0
        %v975 = vsel %vm284, %v936, 0
        %v978 = vsel %vm284, %v937, 0
        %v981 = vsel %vm284, %v938, 0
        %v984 = vsel %vm284, %v939, 0
        %v987 = vsel %vm284, %v940, 0
        %v990 = vsel %vm284, %v941, 0
        %v993 = vsel %vm284, %v942, 0
        %v996 = vsel %vm284, %v943, 0
        %v999 = vsel %vm284, %v944, 0
        %v1002 = vsel %vm284, %v945, 0
        %v1005 = vsel %vm284, %v946, 0
        %v1008 = vsel %vm284, %v947, 0
        %v1011 = vsel %vm284, %v948, 0
        %v1014 = vsel %vm284, %v949, 0
        %v1017 = vsel %vm284, %v950, 0
        %v1020 = vsel %vm284, %v951, 0
        %v1023 = vsel %vm284, %v952, 0
        %v1026 = vsel %vm284, %v953, 0
        %v1029 = vsel %vm284, %v954, 0
        %v1032 = vsel %vm284, %v955, 0
        %v1035 = vsel %vm284, %v956, 0
        %v1038 = vsel %vm284, %v957, 0
        %v1041 = vsel %vm284, %v958, 0
        %v1044 = vsel %vm284, %v959, 0
        %v1047 = vsel %vm284, %v960, 0
        %v1050 = vsel %vm284, %v961, 0
        %v1053 = vsel %vm284, %v962, 0
        %v1056 = vsel %vm284, %v963, 0
        %v1059 = vsel %vm284, %v964, 0
        %v1062 = vsel %vm284, %v965, 0
        %v1065 = vsel %vm381, %v967, 0
        %1067 = vmatprep.subr.mxu0 0.0
        %1068 = vmatpush1.msra.mxu0 %v1065
        %1069 = vmatprep.subr.mxu0 0.0
        %1070 = vmatpush1.msra.mxu0 0.0
        %1071 = vmatprep.subr.mxu0 0.0
        %1072 = vmatpush1.msra.mxu0 0.0
        %1073 = vmatprep.subr.mxu0 0.0
        %1074 = vmatpush1.msra.mxu0 0.0
        %1075 = vmatprep.subr.mxu0 0.0
        %1076 = vmatpush1.msra.mxu0 0.0
        %1077 = vmatprep.subr.mxu0 0.0
        %1078 = vmatpush1.msra.mxu0 0.0
        %1079 = vmatprep.subr.mxu0 0.0
        %1080 = vmatpush1.msra.mxu0 0.0
        %1081 = vmatprep.subr.mxu0 0.0
        %1082 = vmatpush1.msra.mxu0 0.0
        %1083 = vmatprep.subr.mxu0 0.0
        %1084 = vmatpush1.msra.mxu0 0.0
        %1085 = vmatprep.subr.mxu0 0.0
        %1086 = vmatpush1.msra.mxu0 0.0
        %1087 = vmatprep.subr.mxu0 0.0
        %1088 = vmatpush1.msra.mxu0 0.0
        %1089 = vmatprep.subr.mxu0 0.0
        %1090 = vmatpush1.msra.mxu0 0.0
        %1091 = vmatprep.subr.mxu0 0.0
        %1092 = vmatpush1.msra.mxu0 0.0
        %1093 = vmatprep.subr.mxu0 0.0
        %1094 = vmatpush1.msra.mxu0 0.0
        %1095 = vmatprep.subr.mxu0 0.0
        %1096 = vmatpush1.msra.mxu0 0.0
        %1097 = vmatprep.subr.mxu0 0.0
        %1098 = vmatpush1.msra.mxu0 0.0
        %1099 = vmatprep.subr.mxu0 0.0
        %1100 = vmatpush1.msra.mxu0 0.0
        %1101 = vmatprep.subr.mxu0 0.0
        %1102 = vmatpush1.msra.mxu0 0.0
        %1103 = vmatprep.subr.mxu0 0.0
        %1104 = vmatpush1.msra.mxu0 0.0
        %1105 = vmatprep.subr.mxu0 0.0
        %1106 = vmatpush1.msra.mxu0 0.0
        %1107 = vmatprep.subr.mxu0 0.0
        %1108 = vmatpush1.msra.mxu0 0.0
        %1109 = vmatprep.subr.mxu0 0.0
        %1110 = vmatpush1.msra.mxu0 0.0
        %1111 = vmatprep.subr.mxu0 0.0
        %1112 = vmatpush1.msra.mxu0 0.0
        %1113 = vmatprep.subr.mxu0 0.0
        %1114 = vmatpush1.msra.mxu0 0.0
        %1115 = vmatprep.subr.mxu0 0.0
        %1116 = vmatpush1.msra.mxu0 0.0
        %1117 = vmatprep.subr.mxu0 0.0
        %1118 = vmatpush1.msra.mxu0 0.0
        %1119 = vmatprep.subr.mxu0 0.0
        %1120 = vmatpush1.msra.mxu0 0.0
        %1121 = vmatprep.subr.mxu0 0.0
        %1122 = vmatpush1.msra.mxu0 0.0
        %1123 = vmatprep.subr.mxu0 0.0
        %1124 = vmatpush1.msra.mxu0 0.0
        %1125 = vmatprep.subr.mxu0 0.0
        %1126 = vmatpush1.msra.mxu0 0.0
        %1127 = vmatprep.subr.mxu0 0.0
        %1128 = vmatpush1.msra.mxu0 0.0
        %1129 = vmatprep.subr.mxu0 0.0
        %1130 = vmatpush1.msra.mxu0 0.0
        %1131 = vmatprep.mubr.f32.mxu0 0.0
        %1132 = vmatmul.mubr.f32.gmra.mrb[0].mxu0 %v969
        %v1133 = vpop.f32.mrb[0].mxu0
        %v1134 = vadd.f32 0.0, %v1133
        %v1135 = vpop.f32.mrb[0].mxu0
        %1136 = vmatprep.mubr.f32.mxu0 0.0
        %1137 = vmatmul.mubr.f32.gmra.mrb[0].mxu0 %v972
        %v1138 = vpop.f32.mrb[0].mxu0
        %v1139 = vadd.f32 0.0, %v1138
        %v1140 = vpop.f32.mrb[0].mxu0
        %1141 = vmatprep.mubr.f32.mxu0 0.0
        %1142 = vmatmul.mubr.f32.gmra.mrb[0].mxu0 %v975
        %v1143 = vpop.f32.mrb[0].mxu0
        %v1144 = vadd.f32 0.0, %v1143
        %v1145 = vpop.f32.mrb[0].mxu0
        %1146 = vmatprep.mubr.f32.mxu0 0.0
        %1147 = vmatmul.mubr.f32.gmra.mrb[0].mxu0 %v978
        %v1148 = vpop.f32.mrb[0].mxu0
        %v1149 = vadd.f32 0.0, %v1148
        %v1150 = vpop.f32.mrb[0].mxu0
        %1151 = vmatprep.mubr.f32.mxu0 0.0
        %1152 = vmatmul.mubr.f32.gmra.mrb[0].mxu0 %v981
        %v1153 = vpop.f32.mrb[0].mxu0
        %v1154 = vadd.f32 0.0, %v1153
        %v1155 = vpop.f32.mrb[0].mxu0
        %1156 = vmatprep.mubr.f32.mxu0 0.0
        %1157 = vmatmul.mubr.f32.gmra.mrb[0].mxu0 %v984
        %v1158 = vpop.f32.mrb[0].mxu0
        %v1159 = vadd.f32 0.0, %v1158
        %v1160 = vpop.f32.mrb[0].mxu0
        %1161 = vmatprep.mubr.f32.mxu0 0.0
        %1162 = vmatmul.mubr.f32.gmra.mrb[0].mxu0 %v987
        %v1163 = vpop.f32.mrb[0].mxu0
        %v1164 = vadd.f32 0.0, %v1163
        %v1165 = vpop.f32.mrb[0].mxu0
        %1166 = vmatprep.mubr.f32.mxu0 0.0
        %1167 = vmatmul.mubr.f32.gmra.mrb[0].mxu0 %v990
        %v1168 = vpop.f32.mrb[0].mxu0
        %v1169 = vadd.f32 0.0, %v1168
        %v1170 = vpop.f32.mrb[0].mxu0
        %1171 = vmatprep.mubr.f32.mxu0 0.0
        %1172 = vmatmul.mubr.f32.gmra.mrb[0].mxu0 %v993
        %v1173 = vpop.f32.mrb[0].mxu0
        %v1174 = vadd.f32 0.0, %v1173
        %v1175 = vpop.f32.mrb[0].mxu0
        %1176 = vmatprep.mubr.f32.mxu0 0.0
        %1177 = vmatmul.mubr.f32.gmra.mrb[0].mxu0 %v996
        %v1178 = vpop.f32.mrb[0].mxu0
        %v1179 = vadd.f32 0.0, %v1178
        %v1180 = vpop.f32.mrb[0].mxu0
        %1181 = vmatprep.mubr.f32.mxu0 0.0
        %1182 = vmatmul.mubr.f32.gmra.mrb[0].mxu0 %v999
        %v1183 = vpop.f32.mrb[0].mxu0
        %v1184 = vadd.f32 0.0, %v1183
        %v1185 = vpop.f32.mrb[0].mxu0
        %1186 = vmatprep.mubr.f32.mxu0 0.0
        %1187 = vmatmul.mubr.f32.gmra.mrb[0].mxu0 %v1002
        %v1188 = vpop.f32.mrb[0].mxu0
        %v1189 = vadd.f32 0.0, %v1188
        %v1190 = vpop.f32.mrb[0].mxu0
        %1191 = vmatprep.mubr.f32.mxu0 0.0
        %1192 = vmatmul.mubr.f32.gmra.mrb[0].mxu0 %v1005
        %v1193 = vpop.f32.mrb[0].mxu0
        %v1194 = vadd.f32 0.0, %v1193
        %v1195 = vpop.f32.mrb[0].mxu0
        %1196 = vmatprep.mubr.f32.mxu0 0.0
        %1197 = vmatmul.mubr.f32.gmra.mrb[0].mxu0 %v1008
        %v1198 = vpop.f32.mrb[0].mxu0
        %v1199 = vadd.f32 0.0, %v1198
        %v1200 = vpop.f32.mrb[0].mxu0
        %1201 = vmatprep.mubr.f32.mxu0 0.0
        %1202 = vmatmul.mubr.f32.gmra.mrb[0].mxu0 %v1011
        %v1203 = vpop.f32.mrb[0].mxu0
        %v1204 = vadd.f32 0.0, %v1203
        %v1205 = vpop.f32.mrb[0].mxu0
        %1206 = vmatprep.mubr.f32.mxu0 0.0
        %1207 = vmatmul.mubr.f32.gmra.mrb[0].mxu0 %v1014
        %v1208 = vpop.f32.mrb[0].mxu0
        %v1209 = vadd.f32 0.0, %v1208
        %v1210 = vpop.f32.mrb[0].mxu0
        %1211 = vmatprep.mubr.f32.mxu0 0.0
        %1212 = vmatmul.mubr.f32.gmra.mrb[0].mxu0 %v1017
        %v1213 = vpop.f32.mrb[0].mxu0
        %v1214 = vadd.f32 0.0, %v1213
        %v1215 = vpop.f32.mrb[0].mxu0
        %1216 = vmatprep.mubr.f32.mxu0 0.0
        %1217 = vmatmul.mubr.f32.gmra.mrb[0].mxu0 %v1020
        %v1218 = vpop.f32.mrb[0].mxu0
        %v1219 = vadd.f32 0.0, %v1218
        %v1220 = vpop.f32.mrb[0].mxu0
        %1221 = vmatprep.mubr.f32.mxu0 0.0
        %1222 = vmatmul.mubr.f32.gmra.mrb[0].mxu0 %v1023
        %v1223 = vpop.f32.mrb[0].mxu0
        %v1224 = vadd.f32 0.0, %v1223
        %v1225 = vpop.f32.mrb[0].mxu0
        %1226 = vmatprep.mubr.f32.mxu0 0.0
        %1227 = vmatmul.mubr.f32.gmra.mrb[0].mxu0 %v1026
        %v1228 = vpop.f32.mrb[0].mxu0
        %v1229 = vadd.f32 0.0, %v1228
        %v1230 = vpop.f32.mrb[0].mxu0
        %1231 = vmatprep.mubr.f32.mxu0 0.0
        %1232 = vmatmul.mubr.f32.gmra.mrb[0].mxu0 %v1029
        %v1233 = vpop.f32.mrb[0].mxu0
        %v1234 = vadd.f32 0.0, %v1233
        %v1235 = vpop.f32.mrb[0].mxu0
        %1236 = vmatprep.mubr.f32.mxu0 0.0
        %1237 = vmatmul.mubr.f32.gmra.mrb[0].mxu0 %v1032
        %v1238 = vpop.f32.mrb[0].mxu0
        %v1239 = vadd.f32 0.0, %v1238
        %v1240 = vpop.f32.mrb[0].mxu0
        %1241 = vmatprep.mubr.f32.mxu0 0.0
        %1242 = vmatmul.mubr.f32.gmra.mrb[0].mxu0 %v1035
        %v1243 = vpop.f32.mrb[0].mxu0
        %v1244 = vadd.f32 0.0, %v1243
        %v1245 = vpop.f32.mrb[0].mxu0
        %1246 = vmatprep.mubr.f32.mxu0 0.0
        %1247 = vmatmul.mubr.f32.gmra.mrb[0].mxu0 %v1038
        %v1248 = vpop.f32.mrb[0].mxu0
        %v1249 = vadd.f32 0.0, %v1248
        %v1250 = vpop.f32.mrb[0].mxu0
        %1251 = vmatprep.mubr.f32.mxu0 0.0
        %1252 = vmatmul.mubr.f32.gmra.mrb[0].mxu0 %v1041
        %v1253 = vpop.f32.mrb[0].mxu0
        %v1254 = vadd.f32 0.0, %v1253
        %v1255 = vpop.f32.mrb[0].mxu0
        %1256 = vmatprep.mubr.f32.mxu0 0.0
        %1257 = vmatmul.mubr.f32.gmra.mrb[0].mxu0 %v1044
        %v1258 = vpop.f32.mrb[0].mxu0
        %v1259 = vadd.f32 0.0, %v1258
        %v1260 = vpop.f32.mrb[0].mxu0
        %1261 = vmatprep.mubr.f32.mxu0 0.0
        %1262 = vmatmul.mubr.f32.gmra.mrb[0].mxu0 %v1047
        %v1263 = vpop.f32.mrb[0].mxu0
        %v1264 = vadd.f32 0.0, %v1263
        %v1265 = vpop.f32.mrb[0].mxu0
        %1266 = vmatprep.mubr.f32.mxu0 0.0
        %1267 = vmatmul.mubr.f32.gmra.mrb[0].mxu0 %v1050
        %v1268 = vpop.f32.mrb[0].mxu0
        %v1269 = vadd.f32 0.0, %v1268
        %v1270 = vpop.f32.mrb[0].mxu0
        %1271 = vmatprep.mubr.f32.mxu0 0.0
        %1272 = vmatmul.mubr.f32.gmra.mrb[0].mxu0 %v1053
        %v1273 = vpop.f32.mrb[0].mxu0
        %v1274 = vadd.f32 0.0, %v1273
        %v1275 = vpop.f32.mrb[0].mxu0
        %1276 = vmatprep.mubr.f32.mxu0 0.0
        %1277 = vmatmul.mubr.f32.gmra.mrb[0].mxu0 %v1056
        %v1278 = vpop.f32.mrb[0].mxu0
        %v1279 = vadd.f32 0.0, %v1278
        %v1280 = vpop.f32.mrb[0].mxu0
        %1281 = vmatprep.mubr.f32.mxu0 0.0
        %1282 = vmatmul.mubr.f32.gmra.mrb[0].mxu0 %v1059
        %v1283 = vpop.f32.mrb[0].mxu0
        %v1284 = vadd.f32 0.0, %v1283
        %v1285 = vpop.f32.mrb[0].mxu0
        %1286 = vmatprep.mubr.f32.mxu0 0.0
        %1287 = vmatmul.mubr.f32.gmra.mrb[0].mxu0 %v1062
        %v1288 = vpop.f32.mrb[0].mxu0
        %v1289 = vadd.f32 0.0, %v1288
        %v1290 = vpop.f32.mrb[0].mxu0
        %1291 = vdwg.mxu0
        %v1292 = vadd.f32 %v776, %v1134
        %v1293 = vadd.f32 %v781, %v1139
        %v1294 = vadd.f32 %v786, %v1144
        %v1295 = vadd.f32 %v791, %v1149
        %v1296 = vadd.f32 %v796, %v1154
        %v1297 = vadd.f32 %v801, %v1159
        %v1298 = vadd.f32 %v806, %v1164
        %v1299 = vadd.f32 %v811, %v1169
        %v1300 = vadd.f32 %v816, %v1174
        %v1301 = vadd.f32 %v821, %v1179
        %v1302 = vadd.f32 %v826, %v1184
        %v1303 = vadd.f32 %v831, %v1189
        %v1304 = vadd.f32 %v836, %v1194
        %v1305 = vadd.f32 %v841, %v1199
        %v1306 = vadd.f32 %v846, %v1204
        %v1307 = vadd.f32 %v851, %v1209
        %v1308 = vadd.f32 %v856, %v1214
        %v1309 = vadd.f32 %v861, %v1219
        %v1310 = vadd.f32 %v866, %v1224
        %v1311 = vadd.f32 %v871, %v1229
        %v1312 = vadd.f32 %v876, %v1234
        %v1313 = vadd.f32 %v881, %v1239
        %v1314 = vadd.f32 %v886, %v1244
        %v1315 = vadd.f32 %v891, %v1249
        %v1316 = vadd.f32 %v896, %v1254
        %v1317 = vadd.f32 %v901, %v1259
        %v1318 = vadd.f32 %v906, %v1264
        %v1319 = vadd.f32 %v911, %v1269
        %v1320 = vadd.f32 %v916, %v1274
        %v1321 = vadd.f32 %v921, %v1279
        %v1322 = vadd.f32 %v926, %v1284
        %v1323 = vadd.f32 %v931, %v1289
        %s1324 = scalar_lea.vmem %s208, 24
        %v1325 = vld [vmem:[%s1324] sm:$0xff]
        %v1326 = vld [vmem:[%s1324 + $0x8] sm:$0xff]
        %v1327 = vld [vmem:[%s1324 + $0x18] sm:$0xff]
        %v1328 = vld [vmem:[%s1324 + $0x20] sm:$0xff]
        %v1329 = vld [vmem:[%s1324 + $0x30] sm:$0xff]
        %v1330 = vld [vmem:[%s1324 + $0x38] sm:$0xff]
        %v1331 = vld [vmem:[%s1324 + $0x48] sm:$0xff]
        %v1332 = vld [vmem:[%s1324 + $0x50] sm:$0xff]
        %v1333 = vld [vmem:[%s1324 + $0x60] sm:$0xff]
        %v1334 = vld [vmem:[%s1324 + $0x68] sm:$0xff]
        %v1335 = vld [vmem:[%s1324 + $0x78] sm:$0xff]
        %v1336 = vld [vmem:[%s1324 + $0x80] sm:$0xff]
        %v1337 = vld [vmem:[%s1324 + $0x90] sm:$0xff]
        %v1338 = vld [vmem:[%s1324 + $0x98] sm:$0xff]
        %v1339 = vld [vmem:[%s1324 + $0xa8] sm:$0xff]
        %v1340 = vld [vmem:[%s1324 + $0xb0] sm:$0xff]
        %v1341 = vld [vmem:[%s1324 + $0xc0] sm:$0xff]
        %v1342 = vld [vmem:[%s1324 + $0xc8] sm:$0xff]
        %v1343 = vld [vmem:[%s1324 + $0xd8] sm:$0xff]
        %v1344 = vld [vmem:[%s1324 + $0xe0] sm:$0xff]
        %v1345 = vld [vmem:[%s1324 + $0xf0] sm:$0xff]
        %v1346 = vld [vmem:[%s1324 + $0xf8] sm:$0xff]
        %v1347 = vld [vmem:[%s1324 + $0x108] sm:$0xff]
        %v1348 = vld [vmem:[%s1324 + $0x110] sm:$0xff]
        %v1349 = vld [vmem:[%s1324 + $0x120] sm:$0xff]
        %v1350 = vld [vmem:[%s1324 + $0x128] sm:$0xff]
        %v1351 = vld [vmem:[%s1324 + $0x138] sm:$0xff]
        %v1352 = vld [vmem:[%s1324 + $0x140] sm:$0xff]
        %v1353 = vld [vmem:[%s1324 + $0x150] sm:$0xff]
        %v1354 = vld [vmem:[%s1324 + $0x158] sm:$0xff]
        %v1355 = vld [vmem:[%s1324 + $0x168] sm:$0xff]
        %v1356 = vld [vmem:[%s1324 + $0x170] sm:$0xff]
        %s1357 = scalar_lea.vmem %s1, 12
        %v1358 = vld [vmem:[%s1357] sm:$0xf]
        %v1360 = vsel %vm284, %v1325, 0
        %v1363 = vsel %vm284, %v1326, 0
        %v1366 = vsel %vm284, %v1327, 0
        %v1369 = vsel %vm284, %v1328, 0
        %v1372 = vsel %vm284, %v1329, 0
        %v1375 = vsel %vm284, %v1330, 0
        %v1378 = vsel %vm284, %v1331, 0
        %v1381 = vsel %vm284, %v1332, 0
        %v1384 = vsel %vm284, %v1333, 0
        %v1387 = vsel %vm284, %v1334, 0
        %v1390 = vsel %vm284, %v1335, 0
        %v1393 = vsel %vm284, %v1336, 0
        %v1396 = vsel %vm284, %v1337, 0
        %v1399 = vsel %vm284, %v1338, 0
        %v1402 = vsel %vm284, %v1339, 0
        %v1405 = vsel %vm284, %v1340, 0
        %v1408 = vsel %vm284, %v1341, 0
        %v1411 = vsel %vm284, %v1342, 0
        %v1414 = vsel %vm284, %v1343, 0
        %v1417 = vsel %vm284, %v1344, 0
        %v1420 = vsel %vm284, %v1345, 0
        %v1423 = vsel %vm284, %v1346, 0
        %v1426 = vsel %vm284, %v1347, 0
        %v1429 = vsel %vm284, %v1348, 0
        %v1432 = vsel %vm284, %v1349, 0
        %v1435 = vsel %vm284, %v1350, 0
        %v1438 = vsel %vm284, %v1351, 0
        %v1441 = vsel %vm284, %v1352, 0
        %v1444 = vsel %vm284, %v1353, 0
        %v1447 = vsel %vm284, %v1354, 0
        %v1450 = vsel %vm284, %v1355, 0
        %v1453 = vsel %vm284, %v1356, 0
        %v1456 = vsel %vm381, %v1358, 0
        %1458 = vmatprep.subr.mxu0 0.0
        %1459 = vmatpush1.msra.mxu0 %v1456
        %1460 = vmatprep.subr.mxu0 0.0
        %1461 = vmatpush1.msra.mxu0 0.0
        %1462 = vmatprep.subr.mxu0 0.0
        %1463 = vmatpush1.msra.mxu0 0.0
        %1464 = vmatprep.subr.mxu0 0.0
        %1465 = vmatpush1.msra.mxu0 0.0
        %1466 = vmatprep.subr.mxu0 0.0
        %1467 = vmatpush1.msra.mxu0 0.0
        %1468 = vmatprep.subr.mxu0 0.0
        %1469 = vmatpush1.msra.mxu0 0.0
        %1470 = vmatprep.subr.mxu0 0.0
        %1471 = vmatpush1.msra.mxu0 0.0
        %1472 = vmatprep.subr.mxu0 0.0
        %1473 = vmatpush1.msra.mxu0 0.0
        %1474 = vmatprep.subr.mxu0 0.0
        %1475 = vmatpush1.msra.mxu0 0.0
        %1476 = vmatprep.subr.mxu0 0.0
        %1477 = vmatpush1.msra.mxu0 0.0
        %1478 = vmatprep.subr.mxu0 0.0
        %1479 = vmatpush1.msra.mxu0 0.0
        %1480 = vmatprep.subr.mxu0 0.0
        %1481 = vmatpush1.msra.mxu0 0.0
        %1482 = vmatprep.subr.mxu0 0.0
        %1483 = vmatpush1.msra.mxu0 0.0
        %1484 = vmatprep.subr.mxu0 0.0
        %1485 = vmatpush1.msra.mxu0 0.0
        %1486 = vmatprep.subr.mxu0 0.0
        %1487 = vmatpush1.msra.mxu0 0.0
        %1488 = vmatprep.subr.mxu0 0.0
        %1489 = vmatpush1.msra.mxu0 0.0
        %1490 = vmatprep.subr.mxu0 0.0
        %1491 = vmatpush1.msra.mxu0 0.0
        %1492 = vmatprep.subr.mxu0 0.0
        %1493 = vmatpush1.msra.mxu0 0.0
        %1494 = vmatprep.subr.mxu0 0.0
        %1495 = vmatpush1.msra.mxu0 0.0
        %1496 = vmatprep.subr.mxu0 0.0
        %1497 = vmatpush1.msra.mxu0 0.0
        %1498 = vmatprep.subr.mxu0 0.0
        %1499 = vmatpush1.msra.mxu0 0.0
        %1500 = vmatprep.subr.mxu0 0.0
        %1501 = vmatpush1.msra.mxu0 0.0
        %1502 = vmatprep.subr.mxu0 0.0
        %1503 = vmatpush1.msra.mxu0 0.0
        %1504 = vmatprep.subr.mxu0 0.0
        %1505 = vmatpush1.msra.mxu0 0.0
        %1506 = vmatprep.subr.mxu0 0.0
        %1507 = vmatpush1.msra.mxu0 0.0
        %1508 = vmatprep.subr.mxu0 0.0
        %1509 = vmatpush1.msra.mxu0 0.0
        %1510 = vmatprep.subr.mxu0 0.0
        %1511 = vmatpush1.msra.mxu0 0.0
        %1512 = vmatprep.subr.mxu0 0.0
        %1513 = vmatpush1.msra.mxu0 0.0
        %1514 = vmatprep.subr.mxu0 0.0
        %1515 = vmatpush1.msra.mxu0 0.0
        %1516 = vmatprep.subr.mxu0 0.0
        %1517 = vmatpush1.msra.mxu0 0.0
        %1518 = vmatprep.subr.mxu0 0.0
        %1519 = vmatpush1.msra.mxu0 0.0
        %1520 = vmatprep.subr.mxu0 0.0
        %1521 = vmatpush1.msra.mxu0 0.0
        %1522 = vmatprep.mubr.f32.mxu0 0.0
        %1523 = vmatmul.mubr.f32.gmra.mrb[0].mxu0 %v1360
        %v1524 = vpop.f32.mrb[0].mxu0
        %v1525 = vadd.f32 0.0, %v1524
        %v1526 = vpop.f32.mrb[0].mxu0
        %1527 = vmatprep.mubr.f32.mxu0 0.0
        %1528 = vmatmul.mubr.f32.gmra.mrb[0].mxu0 %v1363
        %v1529 = vpop.f32.mrb[0].mxu0
        %v1530 = vadd.f32 0.0, %v1529
        %v1531 = vpop.f32.mrb[0].mxu0
        %1532 = vmatprep.mubr.f32.mxu0 0.0
        %1533 = vmatmul.mubr.f32.gmra.mrb[0].mxu0 %v1366
        %v1534 = vpop.f32.mrb[0].mxu0
        %v1535 = vadd.f32 0.0, %v1534
        %v1536 = vpop.f32.mrb[0].mxu0
        %1537 = vmatprep.mubr.f32.mxu0 0.0
        %1538 = vmatmul.mubr.f32.gmra.mrb[0].mxu0 %v1369
        %v1539 = vpop.f32.mrb[0].mxu0
        %v1540 = vadd.f32 0.0, %v1539
        %v1541 = vpop.f32.mrb[0].mxu0
        %1542 = vmatprep.mubr.f32.mxu0 0.0
        %1543 = vmatmul.mubr.f32.gmra.mrb[0].mxu0 %v1372
        %v1544 = vpop.f32.mrb[0].mxu0
        %v1545 = vadd.f32 0.0, %v1544
        %v1546 = vpop.f32.mrb[0].mxu0
        %1547 = vmatprep.mubr.f32.mxu0 0.0
        %1548 = vmatmul.mubr.f32.gmra.mrb[0].mxu0 %v1375
        %v1549 = vpop.f32.mrb[0].mxu0
        %v1550 = vadd.f32 0.0, %v1549
        %v1551 = vpop.f32.mrb[0].mxu0
        %1552 = vmatprep.mubr.f32.mxu0 0.0
        %1553 = vmatmul.mubr.f32.gmra.mrb[0].mxu0 %v1378
        %v1554 = vpop.f32.mrb[0].mxu0
        %v1555 = vadd.f32 0.0, %v1554
        %v1556 = vpop.f32.mrb[0].mxu0
        %1557 = vmatprep.mubr.f32.mxu0 0.0
        %1558 = vmatmul.mubr.f32.gmra.mrb[0].mxu0 %v1381
        %v1559 = vpop.f32.mrb[0].mxu0
        %v1560 = vadd.f32 0.0, %v1559
        %v1561 = vpop.f32.mrb[0].mxu0
        %1562 = vmatprep.mubr.f32.mxu0 0.0
        %1563 = vmatmul.mubr.f32.gmra.mrb[0].mxu0 %v1384
        %v1564 = vpop.f32.mrb[0].mxu0
        %v1565 = vadd.f32 0.0, %v1564
        %v1566 = vpop.f32.mrb[0].mxu0
        %1567 = vmatprep.mubr.f32.mxu0 0.0
        %1568 = vmatmul.mubr.f32.gmra.mrb[0].mxu0 %v1387
        %v1569 = vpop.f32.mrb[0].mxu0
        %v1570 = vadd.f32 0.0, %v1569
        %v1571 = vpop.f32.mrb[0].mxu0
        %1572 = vmatprep.mubr.f32.mxu0 0.0
        %1573 = vmatmul.mubr.f32.gmra.mrb[0].mxu0 %v1390
        %v1574 = vpop.f32.mrb[0].mxu0
        %v1575 = vadd.f32 0.0, %v1574
        %v1576 = vpop.f32.mrb[0].mxu0
        %1577 = vmatprep.mubr.f32.mxu0 0.0
        %1578 = vmatmul.mubr.f32.gmra.mrb[0].mxu0 %v1393
        %v1579 = vpop.f32.mrb[0].mxu0
        %v1580 = vadd.f32 0.0, %v1579
        %v1581 = vpop.f32.mrb[0].mxu0
        %1582 = vmatprep.mubr.f32.mxu0 0.0
        %1583 = vmatmul.mubr.f32.gmra.mrb[0].mxu0 %v1396
        %v1584 = vpop.f32.mrb[0].mxu0
        %v1585 = vadd.f32 0.0, %v1584
        %v1586 = vpop.f32.mrb[0].mxu0
        %1587 = vmatprep.mubr.f32.mxu0 0.0
        %1588 = vmatmul.mubr.f32.gmra.mrb[0].mxu0 %v1399
        %v1589 = vpop.f32.mrb[0].mxu0
        %v1590 = vadd.f32 0.0, %v1589
        %v1591 = vpop.f32.mrb[0].mxu0
        %1592 = vmatprep.mubr.f32.mxu0 0.0
        %1593 = vmatmul.mubr.f32.gmra.mrb[0].mxu0 %v1402
        %v1594 = vpop.f32.mrb[0].mxu0
        %v1595 = vadd.f32 0.0, %v1594
        %v1596 = vpop.f32.mrb[0].mxu0
        %1597 = vmatprep.mubr.f32.mxu0 0.0
        %1598 = vmatmul.mubr.f32.gmra.mrb[0].mxu0 %v1405
        %v1599 = vpop.f32.mrb[0].mxu0
        %v1600 = vadd.f32 0.0, %v1599
        %v1601 = vpop.f32.mrb[0].mxu0
        %1602 = vmatprep.mubr.f32.mxu0 0.0
        %1603 = vmatmul.mubr.f32.gmra.mrb[0].mxu0 %v1408
        %v1604 = vpop.f32.mrb[0].mxu0
        %v1605 = vadd.f32 0.0, %v1604
        %v1606 = vpop.f32.mrb[0].mxu0
        %1607 = vmatprep.mubr.f32.mxu0 0.0
        %1608 = vmatmul.mubr.f32.gmra.mrb[0].mxu0 %v1411
        %v1609 = vpop.f32.mrb[0].mxu0
        %v1610 = vadd.f32 0.0, %v1609
        %v1611 = vpop.f32.mrb[0].mxu0
        %1612 = vmatprep.mubr.f32.mxu0 0.0
        %1613 = vmatmul.mubr.f32.gmra.mrb[0].mxu0 %v1414
        %v1614 = vpop.f32.mrb[0].mxu0
        %v1615 = vadd.f32 0.0, %v1614
        %v1616 = vpop.f32.mrb[0].mxu0
        %1617 = vmatprep.mubr.f32.mxu0 0.0
        %1618 = vmatmul.mubr.f32.gmra.mrb[0].mxu0 %v1417
        %v1619 = vpop.f32.mrb[0].mxu0
        %v1620 = vadd.f32 0.0, %v1619
        %v1621 = vpop.f32.mrb[0].mxu0
        %1622 = vmatprep.mubr.f32.mxu0 0.0
        %1623 = vmatmul.mubr.f32.gmra.mrb[0].mxu0 %v1420
        %v1624 = vpop.f32.mrb[0].mxu0
        %v1625 = vadd.f32 0.0, %v1624
        %v1626 = vpop.f32.mrb[0].mxu0
        %1627 = vmatprep.mubr.f32.mxu0 0.0
        %1628 = vmatmul.mubr.f32.gmra.mrb[0].mxu0 %v1423
        %v1629 = vpop.f32.mrb[0].mxu0
        %v1630 = vadd.f32 0.0, %v1629
        %v1631 = vpop.f32.mrb[0].mxu0
        %1632 = vmatprep.mubr.f32.mxu0 0.0
        %1633 = vmatmul.mubr.f32.gmra.mrb[0].mxu0 %v1426
        %v1634 = vpop.f32.mrb[0].mxu0
        %v1635 = vadd.f32 0.0, %v1634
        %v1636 = vpop.f32.mrb[0].mxu0
        %1637 = vmatprep.mubr.f32.mxu0 0.0
        %1638 = vmatmul.mubr.f32.gmra.mrb[0].mxu0 %v1429
        %v1639 = vpop.f32.mrb[0].mxu0
        %v1640 = vadd.f32 0.0, %v1639
        %v1641 = vpop.f32.mrb[0].mxu0
        %1642 = vmatprep.mubr.f32.mxu0 0.0
        %1643 = vmatmul.mubr.f32.gmra.mrb[0].mxu0 %v1432
        %v1644 = vpop.f32.mrb[0].mxu0
        %v1645 = vadd.f32 0.0, %v1644
        %v1646 = vpop.f32.mrb[0].mxu0
        %1647 = vmatprep.mubr.f32.mxu0 0.0
        %1648 = vmatmul.mubr.f32.gmra.mrb[0].mxu0 %v1435
        %v1649 = vpop.f32.mrb[0].mxu0
        %v1650 = vadd.f32 0.0, %v1649
        %v1651 = vpop.f32.mrb[0].mxu0
        %1652 = vmatprep.mubr.f32.mxu0 0.0
        %1653 = vmatmul.mubr.f32.gmra.mrb[0].mxu0 %v1438
        %v1654 = vpop.f32.mrb[0].mxu0
        %v1655 = vadd.f32 0.0, %v1654
        %v1656 = vpop.f32.mrb[0].mxu0
        %1657 = vmatprep.mubr.f32.mxu0 0.0
        %1658 = vmatmul.mubr.f32.gmra.mrb[0].mxu0 %v1441
        %v1659 = vpop.f32.mrb[0].mxu0
        %v1660 = vadd.f32 0.0, %v1659
        %v1661 = vpop.f32.mrb[0].mxu0
        %1662 = vmatprep.mubr.f32.mxu0 0.0
        %1663 = vmatmul.mubr.f32.gmra.mrb[0].mxu0 %v1444
        %v1664 = vpop.f32.mrb[0].mxu0
        %v1665 = vadd.f32 0.0, %v1664
        %v1666 = vpop.f32.mrb[0].mxu0
        %1667 = vmatprep.mubr.f32.mxu0 0.0
        %1668 = vmatmul.mubr.f32.gmra.mrb[0].mxu0 %v1447
        %v1669 = vpop.f32.mrb[0].mxu0
        %v1670 = vadd.f32 0.0, %v1669
        %v1671 = vpop.f32.mrb[0].mxu0
        %1672 = vmatprep.mubr.f32.mxu0 0.0
        %1673 = vmatmul.mubr.f32.gmra.mrb[0].mxu0 %v1450
        %v1674 = vpop.f32.mrb[0].mxu0
        %v1675 = vadd.f32 0.0, %v1674
        %v1676 = vpop.f32.mrb[0].mxu0
        %1677 = vmatprep.mubr.f32.mxu0 0.0
        %1678 = vmatmul.mubr.f32.gmra.mrb[0].mxu0 %v1453
        %v1679 = vpop.f32.mrb[0].mxu0
        %v1680 = vadd.f32 0.0, %v1679
        %v1681 = vpop.f32.mrb[0].mxu0
        %1682 = vdwg.mxu0
        %v1683 = vadd.f32 %v1292, %v1525
        %v1684 = vadd.f32 %v1293, %v1530
        %v1685 = vadd.f32 %v1294, %v1535
        %v1686 = vadd.f32 %v1295, %v1540
        %v1687 = vadd.f32 %v1296, %v1545
        %v1688 = vadd.f32 %v1297, %v1550
        %v1689 = vadd.f32 %v1298, %v1555
        %v1690 = vadd.f32 %v1299, %v1560
        %v1691 = vadd.f32 %v1300, %v1565
        %v1692 = vadd.f32 %v1301, %v1570
        %v1693 = vadd.f32 %v1302, %v1575
        %v1694 = vadd.f32 %v1303, %v1580
        %v1695 = vadd.f32 %v1304, %v1585
        %v1696 = vadd.f32 %v1305, %v1590
        %v1697 = vadd.f32 %v1306, %v1595
        %v1698 = vadd.f32 %v1307, %v1600
        %v1699 = vadd.f32 %v1308, %v1605
        %v1700 = vadd.f32 %v1309, %v1610
        %v1701 = vadd.f32 %v1310, %v1615
        %v1702 = vadd.f32 %v1311, %v1620
        %v1703 = vadd.f32 %v1312, %v1625
        %v1704 = vadd.f32 %v1313, %v1630
        %v1705 = vadd.f32 %v1314, %v1635
        %v1706 = vadd.f32 %v1315, %v1640
        %v1707 = vadd.f32 %v1316, %v1645
        %v1708 = vadd.f32 %v1317, %v1650
        %v1709 = vadd.f32 %v1318, %v1655
        %v1710 = vadd.f32 %v1319, %v1660
        %v1711 = vadd.f32 %v1320, %v1665
        %v1712 = vadd.f32 %v1321, %v1670
        %v1713 = vadd.f32 %v1322, %v1675
        %v1714 = vadd.f32 %v1323, %v1680
        %v1715 = vld [vmem:[%s1324 + $0x1] sm:$0xff]
        %v1716 = vld [vmem:[%s1324 + $0x9] sm:$0xff]
        %v1717 = vld [vmem:[%s1324 + $0x19] sm:$0xff]
        %v1718 = vld [vmem:[%s1324 + $0x21] sm:$0xff]
        %v1719 = vld [vmem:[%s1324 + $0x31] sm:$0xff]
        %v1720 = vld [vmem:[%s1324 + $0x39] sm:$0xff]
        %v1721 = vld [vmem:[%s1324 + $0x49] sm:$0xff]
        %v1722 = vld [vmem:[%s1324 + $0x51] sm:$0xff]
        %v1723 = vld [vmem:[%s1324 + $0x61] sm:$0xff]
        %v1724 = vld [vmem:[%s1324 + $0x69] sm:$0xff]
        %v1725 = vld [vmem:[%s1324 + $0x79] sm:$0xff]
        %v1726 = vld [vmem:[%s1324 + $0x81] sm:$0xff]
        %v1727 = vld [vmem:[%s1324 + $0x91] sm:$0xff]
        %v1728 = vld [vmem:[%s1324 + $0x99] sm:$0xff]
        %v1729 = vld [vmem:[%s1324 + $0xa9] sm:$0xff]
        %v1730 = vld [vmem:[%s1324 + $0xb1] sm:$0xff]
        %v1731 = vld [vmem:[%s1324 + $0xc1] sm:$0xff]
        %v1732 = vld [vmem:[%s1324 + $0xc9] sm:$0xff]
        %v1733 = vld [vmem:[%s1324 + $0xd9] sm:$0xff]
        %v1734 = vld [vmem:[%s1324 + $0xe1] sm:$0xff]
        %v1735 = vld [vmem:[%s1324 + $0xf1] sm:$0xff]
        %v1736 = vld [vmem:[%s1324 + $0xf9] sm:$0xff]
        %v1737 = vld [vmem:[%s1324 + $0x109] sm:$0xff]
        %v1738 = vld [vmem:[%s1324 + $0x111] sm:$0xff]
        %v1739 = vld [vmem:[%s1324 + $0x121] sm:$0xff]
        %v1740 = vld [vmem:[%s1324 + $0x129] sm:$0xff]
        %v1741 = vld [vmem:[%s1324 + $0x139] sm:$0xff]
        %v1742 = vld [vmem:[%s1324 + $0x141] sm:$0xff]
        %v1743 = vld [vmem:[%s1324 + $0x151] sm:$0xff]
        %v1744 = vld [vmem:[%s1324 + $0x159] sm:$0xff]
        %v1745 = vld [vmem:[%s1324 + $0x169] sm:$0xff]
        %v1746 = vld [vmem:[%s1324 + $0x171] sm:$0xff]
        %s1747 = scalar_lea.vmem %s1, 16
        %v1748 = vld [vmem:[%s1747] sm:$0xf]
        %v1750 = vsel %vm284, %v1715, 0
        %v1753 = vsel %vm284, %v1716, 0
        %v1756 = vsel %vm284, %v1717, 0
        %v1759 = vsel %vm284, %v1718, 0
        %v1762 = vsel %vm284, %v1719, 0
        %v1765 = vsel %vm284, %v1720, 0
        %v1768 = vsel %vm284, %v1721, 0
        %v1771 = vsel %vm284, %v1722, 0
        %v1774 = vsel %vm284, %v1723, 0
        %v1777 = vsel %vm284, %v1724, 0
        %v1780 = vsel %vm284, %v1725, 0
        %v1783 = vsel %vm284, %v1726, 0
        %v1786 = vsel %vm284, %v1727, 0
        %v1789 = vsel %vm284, %v1728, 0
        %v1792 = vsel %vm284, %v1729, 0
        %v1795 = vsel %vm284, %v1730, 0
        %v1798 = vsel %vm284, %v1731, 0
        %v1801 = vsel %vm284, %v1732, 0
        %v1804 = vsel %vm284, %v1733, 0
        %v1807 = vsel %vm284, %v1734, 0
        %v1810 = vsel %vm284, %v1735, 0
        %v1813 = vsel %vm284, %v1736, 0
        %v1816 = vsel %vm284, %v1737, 0
        %v1819 = vsel %vm284, %v1738, 0
        %v1822 = vsel %vm284, %v1739, 0
        %v1825 = vsel %vm284, %v1740, 0
        %v1828 = vsel %vm284, %v1741, 0
        %v1831 = vsel %vm284, %v1742, 0
        %v1834 = vsel %vm284, %v1743, 0
        %v1837 = vsel %vm284, %v1744, 0
        %v1840 = vsel %vm284, %v1745, 0
        %v1843 = vsel %vm284, %v1746, 0
        %v1846 = vsel %vm381, %v1748, 0
        %1848 = vmatprep.subr.mxu0 0.0
        %1849 = vmatpush1.msra.mxu0 %v1846
        %1850 = vmatprep.subr.mxu0 0.0
        %1851 = vmatpush1.msra.mxu0 0.0
        %1852 = vmatprep.subr.mxu0 0.0
        %1853 = vmatpush1.msra.mxu0 0.0
        %1854 = vmatprep.subr.mxu0 0.0
        %1855 = vmatpush1.msra.mxu0 0.0
        %1856 = vmatprep.subr.mxu0 0.0
        %1857 = vmatpush1.msra.mxu0 0.0
        %1858 = vmatprep.subr.mxu0 0.0
        %1859 = vmatpush1.msra.mxu0 0.0
        %1860 = vmatprep.subr.mxu0 0.0
        %1861 = vmatpush1.msra.mxu0 0.0
        %1862 = vmatprep.subr.mxu0 0.0
        %1863 = vmatpush1.msra.mxu0 0.0
        %1864 = vmatprep.subr.mxu0 0.0
        %1865 = vmatpush1.msra.mxu0 0.0
        %1866 = vmatprep.subr.mxu0 0.0
        %1867 = vmatpush1.msra.mxu0 0.0
        %1868 = vmatprep.subr.mxu0 0.0
        %1869 = vmatpush1.msra.mxu0 0.0
        %1870 = vmatprep.subr.mxu0 0.0
        %1871 = vmatpush1.msra.mxu0 0.0
        %1872 = vmatprep.subr.mxu0 0.0
        %1873 = vmatpush1.msra.mxu0 0.0
        %1874 = vmatprep.subr.mxu0 0.0
        %1875 = vmatpush1.msra.mxu0 0.0
        %1876 = vmatprep.subr.mxu0 0.0
        %1877 = vmatpush1.msra.mxu0 0.0
        %1878 = vmatprep.subr.mxu0 0.0
        %1879 = vmatpush1.msra.mxu0 0.0
        %1880 = vmatprep.subr.mxu0 0.0
        %1881 = vmatpush1.msra.mxu0 0.0
        %1882 = vmatprep.subr.mxu0 0.0
        %1883 = vmatpush1.msra.mxu0 0.0
        %1884 = vmatprep.subr.mxu0 0.0
        %1885 = vmatpush1.msra.mxu0 0.0
        %1886 = vmatprep.subr.mxu0 0.0
        %1887 = vmatpush1.msra.mxu0 0.0
        %1888 = vmatprep.subr.mxu0 0.0
        %1889 = vmatpush1.msra.mxu0 0.0
        %1890 = vmatprep.subr.mxu0 0.0
        %1891 = vmatpush1.msra.mxu0 0.0
        %1892 = vmatprep.subr.mxu0 0.0
        %1893 = vmatpush1.msra.mxu0 0.0
        %1894 = vmatprep.subr.mxu0 0.0
        %1895 = vmatpush1.msra.mxu0 0.0
        %1896 = vmatprep.subr.mxu0 0.0
        %1897 = vmatpush1.msra.mxu0 0.0
        %1898 = vmatprep.subr.mxu0 0.0
        %1899 = vmatpush1.msra.mxu0 0.0
        %1900 = vmatprep.subr.mxu0 0.0
        %1901 = vmatpush1.msra.mxu0 0.0
        %1902 = vmatprep.subr.mxu0 0.0
        %1903 = vmatpush1.msra.mxu0 0.0
        %1904 = vmatprep.subr.mxu0 0.0
        %1905 = vmatpush1.msra.mxu0 0.0
        %1906 = vmatprep.subr.mxu0 0.0
        %1907 = vmatpush1.msra.mxu0 0.0
        %1908 = vmatprep.subr.mxu0 0.0
        %1909 = vmatpush1.msra.mxu0 0.0
        %1910 = vmatprep.subr.mxu0 0.0
        %1911 = vmatpush1.msra.mxu0 0.0
        %1912 = vmatprep.mubr.f32.mxu0 0.0
        %1913 = vmatmul.mubr.f32.gmra.mrb[0].mxu0 %v1750
        %v1914 = vpop.f32.mrb[0].mxu0
        %v1915 = vadd.f32 0.0, %v1914
        %v1916 = vpop.f32.mrb[0].mxu0
        %1917 = vmatprep.mubr.f32.mxu0 0.0
        %1918 = vmatmul.mubr.f32.gmra.mrb[0].mxu0 %v1753
        %v1919 = vpop.f32.mrb[0].mxu0
        %v1920 = vadd.f32 0.0, %v1919
        %v1921 = vpop.f32.mrb[0].mxu0
        %1922 = vmatprep.mubr.f32.mxu0 0.0
        %1923 = vmatmul.mubr.f32.gmra.mrb[0].mxu0 %v1756
        %v1924 = vpop.f32.mrb[0].mxu0
        %v1925 = vadd.f32 0.0, %v1924
        %v1926 = vpop.f32.mrb[0].mxu0
        %1927 = vmatprep.mubr.f32.mxu0 0.0
        %1928 = vmatmul.mubr.f32.gmra.mrb[0].mxu0 %v1759
        %v1929 = vpop.f32.mrb[0].mxu0
        %v1930 = vadd.f32 0.0, %v1929
        %v1931 = vpop.f32.mrb[0].mxu0
        %1932 = vmatprep.mubr.f32.mxu0 0.0
        %1933 = vmatmul.mubr.f32.gmra.mrb[0].mxu0 %v1762
        %v1934 = vpop.f32.mrb[0].mxu0
        %v1935 = vadd.f32 0.0, %v1934
        %v1936 = vpop.f32.mrb[0].mxu0
        %1937 = vmatprep.mubr.f32.mxu0 0.0
        %1938 = vmatmul.mubr.f32.gmra.mrb[0].mxu0 %v1765
        %v1939 = vpop.f32.mrb[0].mxu0
        %v1940 = vadd.f32 0.0, %v1939
        %v1941 = vpop.f32.mrb[0].mxu0
        %1942 = vmatprep.mubr.f32.mxu0 0.0
        %1943 = vmatmul.mubr.f32.gmra.mrb[0].mxu0 %v1768
        %v1944 = vpop.f32.mrb[0].mxu0
        %v1945 = vadd.f32 0.0, %v1944
        %v1946 = vpop.f32.mrb[0].mxu0
        %1947 = vmatprep.mubr.f32.mxu0 0.0
        %1948 = vmatmul.mubr.f32.gmra.mrb[0].mxu0 %v1771
        %v1949 = vpop.f32.mrb[0].mxu0
        %v1950 = vadd.f32 0.0, %v1949
        %v1951 = vpop.f32.mrb[0].mxu0
        %1952 = vmatprep.mubr.f32.mxu0 0.0
        %1953 = vmatmul.mubr.f32.gmra.mrb[0].mxu0 %v1774
        %v1954 = vpop.f32.mrb[0].mxu0
        %v1955 = vadd.f32 0.0, %v1954
        %v1956 = vpop.f32.mrb[0].mxu0
        %1957 = vmatprep.mubr.f32.mxu0 0.0
        %1958 = vmatmul.mubr.f32.gmra.mrb[0].mxu0 %v1777
        %v1959 = vpop.f32.mrb[0].mxu0
        %v1960 = vadd.f32 0.0, %v1959
        %v1961 = vpop.f32.mrb[0].mxu0
        %1962 = vmatprep.mubr.f32.mxu0 0.0
        %1963 = vmatmul.mubr.f32.gmra.mrb[0].mxu0 %v1780
        %v1964 = vpop.f32.mrb[0].mxu0
        %v1965 = vadd.f32 0.0, %v1964
        %v1966 = vpop.f32.mrb[0].mxu0
        %1967 = vmatprep.mubr.f32.mxu0 0.0
        %1968 = vmatmul.mubr.f32.gmra.mrb[0].mxu0 %v1783
        %v1969 = vpop.f32.mrb[0].mxu0
        %v1970 = vadd.f32 0.0, %v1969
        %v1971 = vpop.f32.mrb[0].mxu0
        %1972 = vmatprep.mubr.f32.mxu0 0.0
        %1973 = vmatmul.mubr.f32.gmra.mrb[0].mxu0 %v1786
        %v1974 = vpop.f32.mrb[0].mxu0
        %v1975 = vadd.f32 0.0, %v1974
        %v1976 = vpop.f32.mrb[0].mxu0
        %1977 = vmatprep.mubr.f32.mxu0 0.0
        %1978 = vmatmul.mubr.f32.gmra.mrb[0].mxu0 %v1789
        %v1979 = vpop.f32.mrb[0].mxu0
        %v1980 = vadd.f32 0.0, %v1979
        %v1981 = vpop.f32.mrb[0].mxu0
        %1982 = vmatprep.mubr.f32.mxu0 0.0
        %1983 = vmatmul.mubr.f32.gmra.mrb[0].mxu0 %v1792
        %v1984 = vpop.f32.mrb[0].mxu0
        %v1985 = vadd.f32 0.0, %v1984
        %v1986 = vpop.f32.mrb[0].mxu0
        %1987 = vmatprep.mubr.f32.mxu0 0.0
        %1988 = vmatmul.mubr.f32.gmra.mrb[0].mxu0 %v1795
        %v1989 = vpop.f32.mrb[0].mxu0
        %v1990 = vadd.f32 0.0, %v1989
        %v1991 = vpop.f32.mrb[0].mxu0
        %1992 = vmatprep.mubr.f32.mxu0 0.0
        %1993 = vmatmul.mubr.f32.gmra.mrb[0].mxu0 %v1798
        %v1994 = vpop.f32.mrb[0].mxu0
        %v1995 = vadd.f32 0.0, %v1994
        %v1996 = vpop.f32.mrb[0].mxu0
        %1997 = vmatprep.mubr.f32.mxu0 0.0
        %1998 = vmatmul.mubr.f32.gmra.mrb[0].mxu0 %v1801
        %v1999 = vpop.f32.mrb[0].mxu0
        %v2000 = vadd.f32 0.0, %v1999
        %v2001 = vpop.f32.mrb[0].mxu0
        %2002 = vmatprep.mubr.f32.mxu0 0.0
        %2003 = vmatmul.mubr.f32.gmra.mrb[0].mxu0 %v1804
        %v2004 = vpop.f32.mrb[0].mxu0
        %v2005 = vadd.f32 0.0, %v2004
        %v2006 = vpop.f32.mrb[0].mxu0
        %2007 = vmatprep.mubr.f32.mxu0 0.0
        %2008 = vmatmul.mubr.f32.gmra.mrb[0].mxu0 %v1807
        %v2009 = vpop.f32.mrb[0].mxu0
        %v2010 = vadd.f32 0.0, %v2009
        %v2011 = vpop.f32.mrb[0].mxu0
        %2012 = vmatprep.mubr.f32.mxu0 0.0
        %2013 = vmatmul.mubr.f32.gmra.mrb[0].mxu0 %v1810
        %v2014 = vpop.f32.mrb[0].mxu0
        %v2015 = vadd.f32 0.0, %v2014
        %v2016 = vpop.f32.mrb[0].mxu0
        %2017 = vmatprep.mubr.f32.mxu0 0.0
        %2018 = vmatmul.mubr.f32.gmra.mrb[0].mxu0 %v1813
        %v2019 = vpop.f32.mrb[0].mxu0
        %v2020 = vadd.f32 0.0, %v2019
        %v2021 = vpop.f32.mrb[0].mxu0
        %2022 = vmatprep.mubr.f32.mxu0 0.0
        %2023 = vmatmul.mubr.f32.gmra.mrb[0].mxu0 %v1816
        %v2024 = vpop.f32.mrb[0].mxu0
        %v2025 = vadd.f32 0.0, %v2024
        %v2026 = vpop.f32.mrb[0].mxu0
        %2027 = vmatprep.mubr.f32.mxu0 0.0
        %2028 = vmatmul.mubr.f32.gmra.mrb[0].mxu0 %v1819
        %v2029 = vpop.f32.mrb[0].mxu0
        %v2030 = vadd.f32 0.0, %v2029
        %v2031 = vpop.f32.mrb[0].mxu0
        %2032 = vmatprep.mubr.f32.mxu0 0.0
        %2033 = vmatmul.mubr.f32.gmra.mrb[0].mxu0 %v1822
        %v2034 = vpop.f32.mrb[0].mxu0
        %v2035 = vadd.f32 0.0, %v2034
        %v2036 = vpop.f32.mrb[0].mxu0
        %2037 = vmatprep.mubr.f32.mxu0 0.0
        %2038 = vmatmul.mubr.f32.gmra.mrb[0].mxu0 %v1825
        %v2039 = vpop.f32.mrb[0].mxu0
        %v2040 = vadd.f32 0.0, %v2039
        %v2041 = vpop.f32.mrb[0].mxu0
        %2042 = vmatprep.mubr.f32.mxu0 0.0
        %2043 = vmatmul.mubr.f32.gmra.mrb[0].mxu0 %v1828
        %v2044 = vpop.f32.mrb[0].mxu0
        %v2045 = vadd.f32 0.0, %v2044
        %v2046 = vpop.f32.mrb[0].mxu0
        %2047 = vmatprep.mubr.f32.mxu0 0.0
        %2048 = vmatmul.mubr.f32.gmra.mrb[0].mxu0 %v1831
        %v2049 = vpop.f32.mrb[0].mxu0
        %v2050 = vadd.f32 0.0, %v2049
        %v2051 = vpop.f32.mrb[0].mxu0
        %2052 = vmatprep.mubr.f32.mxu0 0.0
        %2053 = vmatmul.mubr.f32.gmra.mrb[0].mxu0 %v1834
        %v2054 = vpop.f32.mrb[0].mxu0
        %v2055 = vadd.f32 0.0, %v2054
        %v2056 = vpop.f32.mrb[0].mxu0
        %2057 = vmatprep.mubr.f32.mxu0 0.0
        %2058 = vmatmul.mubr.f32.gmra.mrb[0].mxu0 %v1837
        %v2059 = vpop.f32.mrb[0].mxu0
        %v2060 = vadd.f32 0.0, %v2059
        %v2061 = vpop.f32.mrb[0].mxu0
        %2062 = vmatprep.mubr.f32.mxu0 0.0
        %2063 = vmatmul.mubr.f32.gmra.mrb[0].mxu0 %v1840
        %v2064 = vpop.f32.mrb[0].mxu0
        %v2065 = vadd.f32 0.0, %v2064
        %v2066 = vpop.f32.mrb[0].mxu0
        %2067 = vmatprep.mubr.f32.mxu0 0.0
        %2068 = vmatmul.mubr.f32.gmra.mrb[0].mxu0 %v1843
        %v2069 = vpop.f32.mrb[0].mxu0
        %v2070 = vadd.f32 0.0, %v2069
        %v2071 = vpop.f32.mrb[0].mxu0
        %2072 = vdwg.mxu0
        %v2073 = vadd.f32 %v1683, %v1915
        %v2074 = vadd.f32 %v1684, %v1920
        %v2075 = vadd.f32 %v1685, %v1925
        %v2076 = vadd.f32 %v1686, %v1930
        %v2077 = vadd.f32 %v1687, %v1935
        %v2078 = vadd.f32 %v1688, %v1940
        %v2079 = vadd.f32 %v1689, %v1945
        %v2080 = vadd.f32 %v1690, %v1950
        %v2081 = vadd.f32 %v1691, %v1955
        %v2082 = vadd.f32 %v1692, %v1960
        %v2083 = vadd.f32 %v1693, %v1965
        %v2084 = vadd.f32 %v1694, %v1970
        %v2085 = vadd.f32 %v1695, %v1975
        %v2086 = vadd.f32 %v1696, %v1980
        %v2087 = vadd.f32 %v1697, %v1985
        %v2088 = vadd.f32 %v1698, %v1990
        %v2089 = vadd.f32 %v1699, %v1995
        %v2090 = vadd.f32 %v1700, %v2000
        %v2091 = vadd.f32 %v1701, %v2005
        %v2092 = vadd.f32 %v1702, %v2010
        %v2093 = vadd.f32 %v1703, %v2015
        %v2094 = vadd.f32 %v1704, %v2020
        %v2095 = vadd.f32 %v1705, %v2025
        %v2096 = vadd.f32 %v1706, %v2030
        %v2097 = vadd.f32 %v1707, %v2035
        %v2098 = vadd.f32 %v1708, %v2040
        %v2099 = vadd.f32 %v1709, %v2045
        %v2100 = vadd.f32 %v1710, %v2050
        %v2101 = vadd.f32 %v1711, %v2055
        %v2102 = vadd.f32 %v1712, %v2060
        %v2103 = vadd.f32 %v1713, %v2065
        %v2104 = vadd.f32 %v1714, %v2070
        %v2105 = vld [vmem:[%s1324 + $0x2] sm:$0xff]
        %v2106 = vld [vmem:[%s1324 + $0xa] sm:$0xff]
        %v2107 = vld [vmem:[%s1324 + $0x1a] sm:$0xff]
        %v2108 = vld [vmem:[%s1324 + $0x22] sm:$0xff]
        %v2109 = vld [vmem:[%s1324 + $0x32] sm:$0xff]
        %v2110 = vld [vmem:[%s1324 + $0x3a] sm:$0xff]
        %v2111 = vld [vmem:[%s1324 + $0x4a] sm:$0xff]
        %v2112 = vld [vmem:[%s1324 + $0x52] sm:$0xff]
        %v2113 = vld [vmem:[%s1324 + $0x62] sm:$0xff]
        %v2114 = vld [vmem:[%s1324 + $0x6a] sm:$0xff]
        %v2115 = vld [vmem:[%s1324 + $0x7a] sm:$0xff]
        %v2116 = vld [vmem:[%s1324 + $0x82] sm:$0xff]
        %v2117 = vld [vmem:[%s1324 + $0x92] sm:$0xff]
        %v2118 = vld [vmem:[%s1324 + $0x9a] sm:$0xff]
        %v2119 = vld [vmem:[%s1324 + $0xaa] sm:$0xff]
        %v2120 = vld [vmem:[%s1324 + $0xb2] sm:$0xff]
        %v2121 = vld [vmem:[%s1324 + $0xc2] sm:$0xff]
        %v2122 = vld [vmem:[%s1324 + $0xca] sm:$0xff]
        %v2123 = vld [vmem:[%s1324 + $0xda] sm:$0xff]
        %v2124 = vld [vmem:[%s1324 + $0xe2] sm:$0xff]
        %v2125 = vld [vmem:[%s1324 + $0xf2] sm:$0xff]
        %v2126 = vld [vmem:[%s1324 + $0xfa] sm:$0xff]
        %v2127 = vld [vmem:[%s1324 + $0x10a] sm:$0xff]
        %v2128 = vld [vmem:[%s1324 + $0x112] sm:$0xff]
        %v2129 = vld [vmem:[%s1324 + $0x122] sm:$0xff]
        %v2130 = vld [vmem:[%s1324 + $0x12a] sm:$0xff]
        %v2131 = vld [vmem:[%s1324 + $0x13a] sm:$0xff]
        %v2132 = vld [vmem:[%s1324 + $0x142] sm:$0xff]
        %v2133 = vld [vmem:[%s1324 + $0x152] sm:$0xff]
        %v2134 = vld [vmem:[%s1324 + $0x15a] sm:$0xff]
        %v2135 = vld [vmem:[%s1324 + $0x16a] sm:$0xff]
        %v2136 = vld [vmem:[%s1324 + $0x172] sm:$0xff]
        %s2137 = scalar_lea.vmem %s1, 20
        %v2138 = vld [vmem:[%s2137] sm:$0xf]
        %v2140 = vsel %vm284, %v2105, 0
        %v2143 = vsel %vm284, %v2106, 0
        %v2146 = vsel %vm284, %v2107, 0
        %v2149 = vsel %vm284, %v2108, 0
        %v2152 = vsel %vm284, %v2109, 0
        %v2155 = vsel %vm284, %v2110, 0
        %v2158 = vsel %vm284, %v2111, 0
        %v2161 = vsel %vm284, %v2112, 0
        %v2164 = vsel %vm284, %v2113, 0
        %v2167 = vsel %vm284, %v2114, 0
        %v2170 = vsel %vm284, %v2115, 0
        %v2173 = vsel %vm284, %v2116, 0
        %v2176 = vsel %vm284, %v2117, 0
        %v2179 = vsel %vm284, %v2118, 0
        %v2182 = vsel %vm284, %v2119, 0
        %v2185 = vsel %vm284, %v2120, 0
        %v2188 = vsel %vm284, %v2121, 0
        %v2191 = vsel %vm284, %v2122, 0
        %v2194 = vsel %vm284, %v2123, 0
        %v2197 = vsel %vm284, %v2124, 0
        %v2200 = vsel %vm284, %v2125, 0
        %v2203 = vsel %vm284, %v2126, 0
        %v2206 = vsel %vm284, %v2127, 0
        %v2209 = vsel %vm284, %v2128, 0
        %v2212 = vsel %vm284, %v2129, 0
        %v2215 = vsel %vm284, %v2130, 0
        %v2218 = vsel %vm284, %v2131, 0
        %v2221 = vsel %vm284, %v2132, 0
        %v2224 = vsel %vm284, %v2133, 0
        %v2227 = vsel %vm284, %v2134, 0
        %v2230 = vsel %vm284, %v2135, 0
        %v2233 = vsel %vm284, %v2136, 0
        %v2236 = vsel %vm381, %v2138, 0
        %2238 = vmatprep.subr.mxu0 0.0
        %2239 = vmatpush1.msra.mxu0 %v2236
        %2240 = vmatprep.subr.mxu0 0.0
        %2241 = vmatpush1.msra.mxu0 0.0
        %2242 = vmatprep.subr.mxu0 0.0
        %2243 = vmatpush1.msra.mxu0 0.0
        %2244 = vmatprep.subr.mxu0 0.0
        %2245 = vmatpush1.msra.mxu0 0.0
        %2246 = vmatprep.subr.mxu0 0.0
        %2247 = vmatpush1.msra.mxu0 0.0
        %2248 = vmatprep.subr.mxu0 0.0
        %2249 = vmatpush1.msra.mxu0 0.0
        %2250 = vmatprep.subr.mxu0 0.0
        %2251 = vmatpush1.msra.mxu0 0.0
        %2252 = vmatprep.subr.mxu0 0.0
        %2253 = vmatpush1.msra.mxu0 0.0
        %2254 = vmatprep.subr.mxu0 0.0
        %2255 = vmatpush1.msra.mxu0 0.0
        %2256 = vmatprep.subr.mxu0 0.0
        %2257 = vmatpush1.msra.mxu0 0.0
        %2258 = vmatprep.subr.mxu0 0.0
        %2259 = vmatpush1.msra.mxu0 0.0
        %2260 = vmatprep.subr.mxu0 0.0
        %2261 = vmatpush1.msra.mxu0 0.0
        %2262 = vmatprep.subr.mxu0 0.0
        %2263 = vmatpush1.msra.mxu0 0.0
        %2264 = vmatprep.subr.mxu0 0.0
        %2265 = vmatpush1.msra.mxu0 0.0
        %2266 = vmatprep.subr.mxu0 0.0
        %2267 = vmatpush1.msra.mxu0 0.0
        %2268 = vmatprep.subr.mxu0 0.0
        %2269 = vmatpush1.msra.mxu0 0.0
        %2270 = vmatprep.subr.mxu0 0.0
        %2271 = vmatpush1.msra.mxu0 0.0
        %2272 = vmatprep.subr.mxu0 0.0
        %2273 = vmatpush1.msra.mxu0 0.0
        %2274 = vmatprep.subr.mxu0 0.0
        %2275 = vmatpush1.msra.mxu0 0.0
        %2276 = vmatprep.subr.mxu0 0.0
        %2277 = vmatpush1.msra.mxu0 0.0
        %2278 = vmatprep.subr.mxu0 0.0
        %2279 = vmatpush1.msra.mxu0 0.0
        %2280 = vmatprep.subr.mxu0 0.0
        %2281 = vmatpush1.msra.mxu0 0.0
        %2282 = vmatprep.subr.mxu0 0.0
        %2283 = vmatpush1.msra.mxu0 0.0
        %2284 = vmatprep.subr.mxu0 0.0
        %2285 = vmatpush1.msra.mxu0 0.0
        %2286 = vmatprep.subr.mxu0 0.0
        %2287 = vmatpush1.msra.mxu0 0.0
        %2288 = vmatprep.subr.mxu0 0.0
        %2289 = vmatpush1.msra.mxu0 0.0
        %2290 = vmatprep.subr.mxu0 0.0
        %2291 = vmatpush1.msra.mxu0 0.0
        %2292 = vmatprep.subr.mxu0 0.0
        %2293 = vmatpush1.msra.mxu0 0.0
        %2294 = vmatprep.subr.mxu0 0.0
        %2295 = vmatpush1.msra.mxu0 0.0
        %2296 = vmatprep.subr.mxu0 0.0
        %2297 = vmatpush1.msra.mxu0 0.0
        %2298 = vmatprep.subr.mxu0 0.0
        %2299 = vmatpush1.msra.mxu0 0.0
        %2300 = vmatprep.subr.mxu0 0.0
        %2301 = vmatpush1.msra.mxu0 0.0
        %2302 = vmatprep.mubr.f32.mxu0 0.0
        %2303 = vmatmul.mubr.f32.gmra.mrb[0].mxu0 %v2140
        %v2304 = vpop.f32.mrb[0].mxu0
        %v2305 = vadd.f32 0.0, %v2304
        %v2306 = vpop.f32.mrb[0].mxu0
        %2307 = vmatprep.mubr.f32.mxu0 0.0
        %2308 = vmatmul.mubr.f32.gmra.mrb[0].mxu0 %v2143
        %v2309 = vpop.f32.mrb[0].mxu0
        %v2310 = vadd.f32 0.0, %v2309
        %v2311 = vpop.f32.mrb[0].mxu0
        %2312 = vmatprep.mubr.f32.mxu0 0.0
        %2313 = vmatmul.mubr.f32.gmra.mrb[0].mxu0 %v2146
        %v2314 = vpop.f32.mrb[0].mxu0
        %v2315 = vadd.f32 0.0, %v2314
        %v2316 = vpop.f32.mrb[0].mxu0
        %2317 = vmatprep.mubr.f32.mxu0 0.0
        %2318 = vmatmul.mubr.f32.gmra.mrb[0].mxu0 %v2149
        %v2319 = vpop.f32.mrb[0].mxu0
        %v2320 = vadd.f32 0.0, %v2319
        %v2321 = vpop.f32.mrb[0].mxu0
        %2322 = vmatprep.mubr.f32.mxu0 0.0
        %2323 = vmatmul.mubr.f32.gmra.mrb[0].mxu0 %v2152
        %v2324 = vpop.f32.mrb[0].mxu0
        %v2325 = vadd.f32 0.0, %v2324
        %v2326 = vpop.f32.mrb[0].mxu0
        %2327 = vmatprep.mubr.f32.mxu0 0.0
        %2328 = vmatmul.mubr.f32.gmra.mrb[0].mxu0 %v2155
        %v2329 = vpop.f32.mrb[0].mxu0
        %v2330 = vadd.f32 0.0, %v2329
        %v2331 = vpop.f32.mrb[0].mxu0
        %2332 = vmatprep.mubr.f32.mxu0 0.0
        %2333 = vmatmul.mubr.f32.gmra.mrb[0].mxu0 %v2158
        %v2334 = vpop.f32.mrb[0].mxu0
        %v2335 = vadd.f32 0.0, %v2334
        %v2336 = vpop.f32.mrb[0].mxu0
        %2337 = vmatprep.mubr.f32.mxu0 0.0
        %2338 = vmatmul.mubr.f32.gmra.mrb[0].mxu0 %v2161
        %v2339 = vpop.f32.mrb[0].mxu0
        %v2340 = vadd.f32 0.0, %v2339
        %v2341 = vpop.f32.mrb[0].mxu0
        %2342 = vmatprep.mubr.f32.mxu0 0.0
        %2343 = vmatmul.mubr.f32.gmra.mrb[0].mxu0 %v2164
        %v2344 = vpop.f32.mrb[0].mxu0
        %v2345 = vadd.f32 0.0, %v2344
        %v2346 = vpop.f32.mrb[0].mxu0
        %2347 = vmatprep.mubr.f32.mxu0 0.0
        %2348 = vmatmul.mubr.f32.gmra.mrb[0].mxu0 %v2167
        %v2349 = vpop.f32.mrb[0].mxu0
        %v2350 = vadd.f32 0.0, %v2349
        %v2351 = vpop.f32.mrb[0].mxu0
        %2352 = vmatprep.mubr.f32.mxu0 0.0
        %2353 = vmatmul.mubr.f32.gmra.mrb[0].mxu0 %v2170
        %v2354 = vpop.f32.mrb[0].mxu0
        %v2355 = vadd.f32 0.0, %v2354
        %v2356 = vpop.f32.mrb[0].mxu0
        %2357 = vmatprep.mubr.f32.mxu0 0.0
        %2358 = vmatmul.mubr.f32.gmra.mrb[0].mxu0 %v2173
        %v2359 = vpop.f32.mrb[0].mxu0
        %v2360 = vadd.f32 0.0, %v2359
        %v2361 = vpop.f32.mrb[0].mxu0
        %2362 = vmatprep.mubr.f32.mxu0 0.0
        %2363 = vmatmul.mubr.f32.gmra.mrb[0].mxu0 %v2176
        %v2364 = vpop.f32.mrb[0].mxu0
        %v2365 = vadd.f32 0.0, %v2364
        %v2366 = vpop.f32.mrb[0].mxu0
        %2367 = vmatprep.mubr.f32.mxu0 0.0
        %2368 = vmatmul.mubr.f32.gmra.mrb[0].mxu0 %v2179
        %v2369 = vpop.f32.mrb[0].mxu0
        %v2370 = vadd.f32 0.0, %v2369
        %v2371 = vpop.f32.mrb[0].mxu0
        %2372 = vmatprep.mubr.f32.mxu0 0.0
        %2373 = vmatmul.mubr.f32.gmra.mrb[0].mxu0 %v2182
        %v2374 = vpop.f32.mrb[0].mxu0
        %v2375 = vadd.f32 0.0, %v2374
        %v2376 = vpop.f32.mrb[0].mxu0
        %2377 = vmatprep.mubr.f32.mxu0 0.0
        %2378 = vmatmul.mubr.f32.gmra.mrb[0].mxu0 %v2185
        %v2379 = vpop.f32.mrb[0].mxu0
        %v2380 = vadd.f32 0.0, %v2379
        %v2381 = vpop.f32.mrb[0].mxu0
        %2382 = vmatprep.mubr.f32.mxu0 0.0
        %2383 = vmatmul.mubr.f32.gmra.mrb[0].mxu0 %v2188
        %v2384 = vpop.f32.mrb[0].mxu0
        %v2385 = vadd.f32 0.0, %v2384
        %v2386 = vpop.f32.mrb[0].mxu0
        %2387 = vmatprep.mubr.f32.mxu0 0.0
        %2388 = vmatmul.mubr.f32.gmra.mrb[0].mxu0 %v2191
        %v2389 = vpop.f32.mrb[0].mxu0
        %v2390 = vadd.f32 0.0, %v2389
        %v2391 = vpop.f32.mrb[0].mxu0
        %2392 = vmatprep.mubr.f32.mxu0 0.0
        %2393 = vmatmul.mubr.f32.gmra.mrb[0].mxu0 %v2194
        %v2394 = vpop.f32.mrb[0].mxu0
        %v2395 = vadd.f32 0.0, %v2394
        %v2396 = vpop.f32.mrb[0].mxu0
        %2397 = vmatprep.mubr.f32.mxu0 0.0
        %2398 = vmatmul.mubr.f32.gmra.mrb[0].mxu0 %v2197
        %v2399 = vpop.f32.mrb[0].mxu0
        %v2400 = vadd.f32 0.0, %v2399
        %v2401 = vpop.f32.mrb[0].mxu0
        %2402 = vmatprep.mubr.f32.mxu0 0.0
        %2403 = vmatmul.mubr.f32.gmra.mrb[0].mxu0 %v2200
        %v2404 = vpop.f32.mrb[0].mxu0
        %v2405 = vadd.f32 0.0, %v2404
        %v2406 = vpop.f32.mrb[0].mxu0
        %2407 = vmatprep.mubr.f32.mxu0 0.0
        %2408 = vmatmul.mubr.f32.gmra.mrb[0].mxu0 %v2203
        %v2409 = vpop.f32.mrb[0].mxu0
        %v2410 = vadd.f32 0.0, %v2409
        %v2411 = vpop.f32.mrb[0].mxu0
        %2412 = vmatprep.mubr.f32.mxu0 0.0
        %2413 = vmatmul.mubr.f32.gmra.mrb[0].mxu0 %v2206
        %v2414 = vpop.f32.mrb[0].mxu0
        %v2415 = vadd.f32 0.0, %v2414
        %v2416 = vpop.f32.mrb[0].mxu0
        %2417 = vmatprep.mubr.f32.mxu0 0.0
        %2418 = vmatmul.mubr.f32.gmra.mrb[0].mxu0 %v2209
        %v2419 = vpop.f32.mrb[0].mxu0
        %v2420 = vadd.f32 0.0, %v2419
        %v2421 = vpop.f32.mrb[0].mxu0
        %2422 = vmatprep.mubr.f32.mxu0 0.0
        %2423 = vmatmul.mubr.f32.gmra.mrb[0].mxu0 %v2212
        %v2424 = vpop.f32.mrb[0].mxu0
        %v2425 = vadd.f32 0.0, %v2424
        %v2426 = vpop.f32.mrb[0].mxu0
        %2427 = vmatprep.mubr.f32.mxu0 0.0
        %2428 = vmatmul.mubr.f32.gmra.mrb[0].mxu0 %v2215
        %v2429 = vpop.f32.mrb[0].mxu0
        %v2430 = vadd.f32 0.0, %v2429
        %v2431 = vpop.f32.mrb[0].mxu0
        %2432 = vmatprep.mubr.f32.mxu0 0.0
        %2433 = vmatmul.mubr.f32.gmra.mrb[0].mxu0 %v2218
        %v2434 = vpop.f32.mrb[0].mxu0
        %v2435 = vadd.f32 0.0, %v2434
        %v2436 = vpop.f32.mrb[0].mxu0
        %2437 = vmatprep.mubr.f32.mxu0 0.0
        %2438 = vmatmul.mubr.f32.gmra.mrb[0].mxu0 %v2221
        %v2439 = vpop.f32.mrb[0].mxu0
        %v2440 = vadd.f32 0.0, %v2439
        %v2441 = vpop.f32.mrb[0].mxu0
        %2442 = vmatprep.mubr.f32.mxu0 0.0
        %2443 = vmatmul.mubr.f32.gmra.mrb[0].mxu0 %v2224
        %v2444 = vpop.f32.mrb[0].mxu0
        %v2445 = vadd.f32 0.0, %v2444
        %v2446 = vpop.f32.mrb[0].mxu0
        %2447 = vmatprep.mubr.f32.mxu0 0.0
        %2448 = vmatmul.mubr.f32.gmra.mrb[0].mxu0 %v2227
        %v2449 = vpop.f32.mrb[0].mxu0
        %v2450 = vadd.f32 0.0, %v2449
        %v2451 = vpop.f32.mrb[0].mxu0
        %2452 = vmatprep.mubr.f32.mxu0 0.0
        %2453 = vmatmul.mubr.f32.gmra.mrb[0].mxu0 %v2230
        %v2454 = vpop.f32.mrb[0].mxu0
        %v2455 = vadd.f32 0.0, %v2454
        %v2456 = vpop.f32.mrb[0].mxu0
        %2457 = vmatprep.mubr.f32.mxu0 0.0
        %2458 = vmatmul.mubr.f32.gmra.mrb[0].mxu0 %v2233
        %v2459 = vpop.f32.mrb[0].mxu0
        %v2460 = vadd.f32 0.0, %v2459
        %v2461 = vpop.f32.mrb[0].mxu0
        %2462 = vdwg.mxu0
        %v2463 = vadd.f32 %v2073, %v2305
        %v2464 = vadd.f32 %v2074, %v2310
        %v2465 = vadd.f32 %v2075, %v2315
        %v2466 = vadd.f32 %v2076, %v2320
        %v2467 = vadd.f32 %v2077, %v2325
        %v2468 = vadd.f32 %v2078, %v2330
        %v2469 = vadd.f32 %v2079, %v2335
        %v2470 = vadd.f32 %v2080, %v2340
        %v2471 = vadd.f32 %v2081, %v2345
        %v2472 = vadd.f32 %v2082, %v2350
        %v2473 = vadd.f32 %v2083, %v2355
        %v2474 = vadd.f32 %v2084, %v2360
        %v2475 = vadd.f32 %v2085, %v2365
        %v2476 = vadd.f32 %v2086, %v2370
        %v2477 = vadd.f32 %v2087, %v2375
        %v2478 = vadd.f32 %v2088, %v2380
        %v2479 = vadd.f32 %v2089, %v2385
        %v2480 = vadd.f32 %v2090, %v2390
        %v2481 = vadd.f32 %v2091, %v2395
        %v2482 = vadd.f32 %v2092, %v2400
        %v2483 = vadd.f32 %v2093, %v2405
        %v2484 = vadd.f32 %v2094, %v2410
        %v2485 = vadd.f32 %v2095, %v2415
        %v2486 = vadd.f32 %v2096, %v2420
        %v2487 = vadd.f32 %v2097, %v2425
        %v2488 = vadd.f32 %v2098, %v2430
        %v2489 = vadd.f32 %v2099, %v2435
        %v2490 = vadd.f32 %v2100, %v2440
        %v2491 = vadd.f32 %v2101, %v2445
        %v2492 = vadd.f32 %v2102, %v2450
        %v2493 = vadd.f32 %v2103, %v2455
        %v2494 = vadd.f32 %v2104, %v2460
        %s2495 = scalar_lea.vmem %s208, 48
        %v2496 = vld [vmem:[%s2495] sm:$0xff]
        %v2497 = vld [vmem:[%s2495 + $0x8] sm:$0xff]
        %v2498 = vld [vmem:[%s2495 + $0x18] sm:$0xff]
        %v2499 = vld [vmem:[%s2495 + $0x20] sm:$0xff]
        %v2500 = vld [vmem:[%s2495 + $0x30] sm:$0xff]
        %v2501 = vld [vmem:[%s2495 + $0x38] sm:$0xff]
        %v2502 = vld [vmem:[%s2495 + $0x48] sm:$0xff]
        %v2503 = vld [vmem:[%s2495 + $0x50] sm:$0xff]
        %v2504 = vld [vmem:[%s2495 + $0x60] sm:$0xff]
        %v2505 = vld [vmem:[%s2495 + $0x68] sm:$0xff]
        %v2506 = vld [vmem:[%s2495 + $0x78] sm:$0xff]
        %v2507 = vld [vmem:[%s2495 + $0x80] sm:$0xff]
        %v2508 = vld [vmem:[%s2495 + $0x90] sm:$0xff]
        %v2509 = vld [vmem:[%s2495 + $0x98] sm:$0xff]
        %v2510 = vld [vmem:[%s2495 + $0xa8] sm:$0xff]
        %v2511 = vld [vmem:[%s2495 + $0xb0] sm:$0xff]
        %v2512 = vld [vmem:[%s2495 + $0xc0] sm:$0xff]
        %v2513 = vld [vmem:[%s2495 + $0xc8] sm:$0xff]
        %v2514 = vld [vmem:[%s2495 + $0xd8] sm:$0xff]
        %v2515 = vld [vmem:[%s2495 + $0xe0] sm:$0xff]
        %v2516 = vld [vmem:[%s2495 + $0xf0] sm:$0xff]
        %v2517 = vld [vmem:[%s2495 + $0xf8] sm:$0xff]
        %v2518 = vld [vmem:[%s2495 + $0x108] sm:$0xff]
        %v2519 = vld [vmem:[%s2495 + $0x110] sm:$0xff]
        %v2520 = vld [vmem:[%s2495 + $0x120] sm:$0xff]
        %v2521 = vld [vmem:[%s2495 + $0x128] sm:$0xff]
        %v2522 = vld [vmem:[%s2495 + $0x138] sm:$0xff]
        %v2523 = vld [vmem:[%s2495 + $0x140] sm:$0xff]
        %v2524 = vld [vmem:[%s2495 + $0x150] sm:$0xff]
        %v2525 = vld [vmem:[%s2495 + $0x158] sm:$0xff]
        %v2526 = vld [vmem:[%s2495 + $0x168] sm:$0xff]
        %v2527 = vld [vmem:[%s2495 + $0x170] sm:$0xff]
        %s2528 = scalar_lea.vmem %s1, 24
        %v2529 = vld [vmem:[%s2528] sm:$0xf]
        %v2531 = vsel %vm284, %v2496, 0
        %v2534 = vsel %vm284, %v2497, 0
        %v2537 = vsel %vm284, %v2498, 0
        %v2540 = vsel %vm284, %v2499, 0
        %v2543 = vsel %vm284, %v2500, 0
        %v2546 = vsel %vm284, %v2501, 0
        %v2549 = vsel %vm284, %v2502, 0
        %v2552 = vsel %vm284, %v2503, 0
        %v2555 = vsel %vm284, %v2504, 0
        %v2558 = vsel %vm284, %v2505, 0
        %v2561 = vsel %vm284, %v2506, 0
        %v2564 = vsel %vm284, %v2507, 0
        %v2567 = vsel %vm284, %v2508, 0
        %v2570 = vsel %vm284, %v2509, 0
        %v2573 = vsel %vm284, %v2510, 0
        %v2576 = vsel %vm284, %v2511, 0
        %v2579 = vsel %vm284, %v2512, 0
        %v2582 = vsel %vm284, %v2513, 0
        %v2585 = vsel %vm284, %v2514, 0
        %v2588 = vsel %vm284, %v2515, 0
        %v2591 = vsel %vm284, %v2516, 0
        %v2594 = vsel %vm284, %v2517, 0
        %v2597 = vsel %vm284, %v2518, 0
        %v2600 = vsel %vm284, %v2519, 0
        %v2603 = vsel %vm284, %v2520, 0
        %v2606 = vsel %vm284, %v2521, 0
        %v2609 = vsel %vm284, %v2522, 0
        %v2612 = vsel %vm284, %v2523, 0
        %v2615 = vsel %vm284, %v2524, 0
        %v2618 = vsel %vm284, %v2525, 0
        %v2621 = vsel %vm284, %v2526, 0
        %v2624 = vsel %vm284, %v2527, 0
        %v2627 = vsel %vm381, %v2529, 0
        %2629 = vmatprep.subr.mxu0 0.0
        %2630 = vmatpush1.msra.mxu0 %v2627
        %2631 = vmatprep.subr.mxu0 0.0
        %2632 = vmatpush1.msra.mxu0 0.0
        %2633 = vmatprep.subr.mxu0 0.0
        %2634 = vmatpush1.msra.mxu0 0.0
        %2635 = vmatprep.subr.mxu0 0.0
        %2636 = vmatpush1.msra.mxu0 0.0
        %2637 = vmatprep.subr.mxu0 0.0
        %2638 = vmatpush1.msra.mxu0 0.0
        %2639 = vmatprep.subr.mxu0 0.0
        %2640 = vmatpush1.msra.mxu0 0.0
        %2641 = vmatprep.subr.mxu0 0.0
        %2642 = vmatpush1.msra.mxu0 0.0
        %2643 = vmatprep.subr.mxu0 0.0
        %2644 = vmatpush1.msra.mxu0 0.0
        %2645 = vmatprep.subr.mxu0 0.0
        %2646 = vmatpush1.msra.mxu0 0.0
        %2647 = vmatprep.subr.mxu0 0.0
        %2648 = vmatpush1.msra.mxu0 0.0
        %2649 = vmatprep.subr.mxu0 0.0
        %2650 = vmatpush1.msra.mxu0 0.0
        %2651 = vmatprep.subr.mxu0 0.0
        %2652 = vmatpush1.msra.mxu0 0.0
        %2653 = vmatprep.subr.mxu0 0.0
        %2654 = vmatpush1.msra.mxu0 0.0
        %2655 = vmatprep.subr.mxu0 0.0
        %2656 = vmatpush1.msra.mxu0 0.0
        %2657 = vmatprep.subr.mxu0 0.0
        %2658 = vmatpush1.msra.mxu0 0.0
        %2659 = vmatprep.subr.mxu0 0.0
        %2660 = vmatpush1.msra.mxu0 0.0
        %2661 = vmatprep.subr.mxu0 0.0
        %2662 = vmatpush1.msra.mxu0 0.0
        %2663 = vmatprep.subr.mxu0 0.0
        %2664 = vmatpush1.msra.mxu0 0.0
        %2665 = vmatprep.subr.mxu0 0.0
        %2666 = vmatpush1.msra.mxu0 0.0
        %2667 = vmatprep.subr.mxu0 0.0
        %2668 = vmatpush1.msra.mxu0 0.0
        %2669 = vmatprep.subr.mxu0 0.0
        %2670 = vmatpush1.msra.mxu0 0.0
        %2671 = vmatprep.subr.mxu0 0.0
        %2672 = vmatpush1.msra.mxu0 0.0
        %2673 = vmatprep.subr.mxu0 0.0
        %2674 = vmatpush1.msra.mxu0 0.0
        %2675 = vmatprep.subr.mxu0 0.0
        %2676 = vmatpush1.msra.mxu0 0.0
        %2677 = vmatprep.subr.mxu0 0.0
        %2678 = vmatpush1.msra.mxu0 0.0
        %2679 = vmatprep.subr.mxu0 0.0
        %2680 = vmatpush1.msra.mxu0 0.0
        %2681 = vmatprep.subr.mxu0 0.0
        %2682 = vmatpush1.msra.mxu0 0.0
        %2683 = vmatprep.subr.mxu0 0.0
        %2684 = vmatpush1.msra.mxu0 0.0
        %2685 = vmatprep.subr.mxu0 0.0
        %2686 = vmatpush1.msra.mxu0 0.0
        %2687 = vmatprep.subr.mxu0 0.0
        %2688 = vmatpush1.msra.mxu0 0.0
        %2689 = vmatprep.subr.mxu0 0.0
        %2690 = vmatpush1.msra.mxu0 0.0
        %2691 = vmatprep.subr.mxu0 0.0
        %2692 = vmatpush1.msra.mxu0 0.0
        %2693 = vmatprep.mubr.f32.mxu0 0.0
        %2694 = vmatmul.mubr.f32.gmra.mrb[0].mxu0 %v2531
        %v2695 = vpop.f32.mrb[0].mxu0
        %v2696 = vadd.f32 0.0, %v2695
        %v2697 = vpop.f32.mrb[0].mxu0
        %2698 = vmatprep.mubr.f32.mxu0 0.0
        %2699 = vmatmul.mubr.f32.gmra.mrb[0].mxu0 %v2534
        %v2700 = vpop.f32.mrb[0].mxu0
        %v2701 = vadd.f32 0.0, %v2700
        %v2702 = vpop.f32.mrb[0].mxu0
        %2703 = vmatprep.mubr.f32.mxu0 0.0
        %2704 = vmatmul.mubr.f32.gmra.mrb[0].mxu0 %v2537
        %v2705 = vpop.f32.mrb[0].mxu0
        %v2706 = vadd.f32 0.0, %v2705
        %v2707 = vpop.f32.mrb[0].mxu0
        %2708 = vmatprep.mubr.f32.mxu0 0.0
        %2709 = vmatmul.mubr.f32.gmra.mrb[0].mxu0 %v2540
        %v2710 = vpop.f32.mrb[0].mxu0
        %v2711 = vadd.f32 0.0, %v2710
        %v2712 = vpop.f32.mrb[0].mxu0
        %2713 = vmatprep.mubr.f32.mxu0 0.0
        %2714 = vmatmul.mubr.f32.gmra.mrb[0].mxu0 %v2543
        %v2715 = vpop.f32.mrb[0].mxu0
        %v2716 = vadd.f32 0.0, %v2715
        %v2717 = vpop.f32.mrb[0].mxu0
        %2718 = vmatprep.mubr.f32.mxu0 0.0
        %2719 = vmatmul.mubr.f32.gmra.mrb[0].mxu0 %v2546
        %v2720 = vpop.f32.mrb[0].mxu0
        %v2721 = vadd.f32 0.0, %v2720
        %v2722 = vpop.f32.mrb[0].mxu0
        %2723 = vmatprep.mubr.f32.mxu0 0.0
        %2724 = vmatmul.mubr.f32.gmra.mrb[0].mxu0 %v2549
        %v2725 = vpop.f32.mrb[0].mxu0
        %v2726 = vadd.f32 0.0, %v2725
        %v2727 = vpop.f32.mrb[0].mxu0
        %2728 = vmatprep.mubr.f32.mxu0 0.0
        %2729 = vmatmul.mubr.f32.gmra.mrb[0].mxu0 %v2552
        %v2730 = vpop.f32.mrb[0].mxu0
        %v2731 = vadd.f32 0.0, %v2730
        %v2732 = vpop.f32.mrb[0].mxu0
        %2733 = vmatprep.mubr.f32.mxu0 0.0
        %2734 = vmatmul.mubr.f32.gmra.mrb[0].mxu0 %v2555
        %v2735 = vpop.f32.mrb[0].mxu0
        %v2736 = vadd.f32 0.0, %v2735
        %v2737 = vpop.f32.mrb[0].mxu0
        %2738 = vmatprep.mubr.f32.mxu0 0.0
        %2739 = vmatmul.mubr.f32.gmra.mrb[0].mxu0 %v2558
        %v2740 = vpop.f32.mrb[0].mxu0
        %v2741 = vadd.f32 0.0, %v2740
        %v2742 = vpop.f32.mrb[0].mxu0
        %2743 = vmatprep.mubr.f32.mxu0 0.0
        %2744 = vmatmul.mubr.f32.gmra.mrb[0].mxu0 %v2561
        %v2745 = vpop.f32.mrb[0].mxu0
        %v2746 = vadd.f32 0.0, %v2745
        %v2747 = vpop.f32.mrb[0].mxu0
        %2748 = vmatprep.mubr.f32.mxu0 0.0
        %2749 = vmatmul.mubr.f32.gmra.mrb[0].mxu0 %v2564
        %v2750 = vpop.f32.mrb[0].mxu0
        %v2751 = vadd.f32 0.0, %v2750
        %v2752 = vpop.f32.mrb[0].mxu0
        %2753 = vmatprep.mubr.f32.mxu0 0.0
        %2754 = vmatmul.mubr.f32.gmra.mrb[0].mxu0 %v2567
        %v2755 = vpop.f32.mrb[0].mxu0
        %v2756 = vadd.f32 0.0, %v2755
        %v2757 = vpop.f32.mrb[0].mxu0
        %2758 = vmatprep.mubr.f32.mxu0 0.0
        %2759 = vmatmul.mubr.f32.gmra.mrb[0].mxu0 %v2570
        %v2760 = vpop.f32.mrb[0].mxu0
        %v2761 = vadd.f32 0.0, %v2760
        %v2762 = vpop.f32.mrb[0].mxu0
        %2763 = vmatprep.mubr.f32.mxu0 0.0
        %2764 = vmatmul.mubr.f32.gmra.mrb[0].mxu0 %v2573
        %v2765 = vpop.f32.mrb[0].mxu0
        %v2766 = vadd.f32 0.0, %v2765
        %v2767 = vpop.f32.mrb[0].mxu0
        %2768 = vmatprep.mubr.f32.mxu0 0.0
        %2769 = vmatmul.mubr.f32.gmra.mrb[0].mxu0 %v2576
        %v2770 = vpop.f32.mrb[0].mxu0
        %v2771 = vadd.f32 0.0, %v2770
        %v2772 = vpop.f32.mrb[0].mxu0
        %2773 = vmatprep.mubr.f32.mxu0 0.0
        %2774 = vmatmul.mubr.f32.gmra.mrb[0].mxu0 %v2579
        %v2775 = vpop.f32.mrb[0].mxu0
        %v2776 = vadd.f32 0.0, %v2775
        %v2777 = vpop.f32.mrb[0].mxu0
        %2778 = vmatprep.mubr.f32.mxu0 0.0
        %2779 = vmatmul.mubr.f32.gmra.mrb[0].mxu0 %v2582
        %v2780 = vpop.f32.mrb[0].mxu0
        %v2781 = vadd.f32 0.0, %v2780
        %v2782 = vpop.f32.mrb[0].mxu0
        %2783 = vmatprep.mubr.f32.mxu0 0.0
        %2784 = vmatmul.mubr.f32.gmra.mrb[0].mxu0 %v2585
        %v2785 = vpop.f32.mrb[0].mxu0
        %v2786 = vadd.f32 0.0, %v2785
        %v2787 = vpop.f32.mrb[0].mxu0
        %2788 = vmatprep.mubr.f32.mxu0 0.0
        %2789 = vmatmul.mubr.f32.gmra.mrb[0].mxu0 %v2588
        %v2790 = vpop.f32.mrb[0].mxu0
        %v2791 = vadd.f32 0.0, %v2790
        %v2792 = vpop.f32.mrb[0].mxu0
        %2793 = vmatprep.mubr.f32.mxu0 0.0
        %2794 = vmatmul.mubr.f32.gmra.mrb[0].mxu0 %v2591
        %v2795 = vpop.f32.mrb[0].mxu0
        %v2796 = vadd.f32 0.0, %v2795
        %v2797 = vpop.f32.mrb[0].mxu0
        %2798 = vmatprep.mubr.f32.mxu0 0.0
        %2799 = vmatmul.mubr.f32.gmra.mrb[0].mxu0 %v2594
        %v2800 = vpop.f32.mrb[0].mxu0
        %v2801 = vadd.f32 0.0, %v2800
        %v2802 = vpop.f32.mrb[0].mxu0
        %2803 = vmatprep.mubr.f32.mxu0 0.0
        %2804 = vmatmul.mubr.f32.gmra.mrb[0].mxu0 %v2597
        %v2805 = vpop.f32.mrb[0].mxu0
        %v2806 = vadd.f32 0.0, %v2805
        %v2807 = vpop.f32.mrb[0].mxu0
        %2808 = vmatprep.mubr.f32.mxu0 0.0
        %2809 = vmatmul.mubr.f32.gmra.mrb[0].mxu0 %v2600
        %v2810 = vpop.f32.mrb[0].mxu0
        %v2811 = vadd.f32 0.0, %v2810
        %v2812 = vpop.f32.mrb[0].mxu0
        %2813 = vmatprep.mubr.f32.mxu0 0.0
        %2814 = vmatmul.mubr.f32.gmra.mrb[0].mxu0 %v2603
        %v2815 = vpop.f32.mrb[0].mxu0
        %v2816 = vadd.f32 0.0, %v2815
        %v2817 = vpop.f32.mrb[0].mxu0
        %2818 = vmatprep.mubr.f32.mxu0 0.0
        %2819 = vmatmul.mubr.f32.gmra.mrb[0].mxu0 %v2606
        %v2820 = vpop.f32.mrb[0].mxu0
        %v2821 = vadd.f32 0.0, %v2820
        %v2822 = vpop.f32.mrb[0].mxu0
        %2823 = vmatprep.mubr.f32.mxu0 0.0
        %2824 = vmatmul.mubr.f32.gmra.mrb[0].mxu0 %v2609
        %v2825 = vpop.f32.mrb[0].mxu0
        %v2826 = vadd.f32 0.0, %v2825
        %v2827 = vpop.f32.mrb[0].mxu0
        %2828 = vmatprep.mubr.f32.mxu0 0.0
        %2829 = vmatmul.mubr.f32.gmra.mrb[0].mxu0 %v2612
        %v2830 = vpop.f32.mrb[0].mxu0
        %v2831 = vadd.f32 0.0, %v2830
        %v2832 = vpop.f32.mrb[0].mxu0
        %2833 = vmatprep.mubr.f32.mxu0 0.0
        %2834 = vmatmul.mubr.f32.gmra.mrb[0].mxu0 %v2615
        %v2835 = vpop.f32.mrb[0].mxu0
        %v2836 = vadd.f32 0.0, %v2835
        %v2837 = vpop.f32.mrb[0].mxu0
        %2838 = vmatprep.mubr.f32.mxu0 0.0
        %2839 = vmatmul.mubr.f32.gmra.mrb[0].mxu0 %v2618
        %v2840 = vpop.f32.mrb[0].mxu0
        %v2841 = vadd.f32 0.0, %v2840
        %v2842 = vpop.f32.mrb[0].mxu0
        %2843 = vmatprep.mubr.f32.mxu0 0.0
        %2844 = vmatmul.mubr.f32.gmra.mrb[0].mxu0 %v2621
        %v2845 = vpop.f32.mrb[0].mxu0
        %v2846 = vadd.f32 0.0, %v2845
        %v2847 = vpop.f32.mrb[0].mxu0
        %2848 = vmatprep.mubr.f32.mxu0 0.0
        %2849 = vmatmul.mubr.f32.gmra.mrb[0].mxu0 %v2624
        %v2850 = vpop.f32.mrb[0].mxu0
        %v2851 = vadd.f32 0.0, %v2850
        %v2852 = vpop.f32.mrb[0].mxu0
        %2853 = vdwg.mxu0
        %v2854 = vadd.f32 %v2463, %v2696
        %v2855 = vadd.f32 %v2464, %v2701
        %v2856 = vadd.f32 %v2465, %v2706
        %v2857 = vadd.f32 %v2466, %v2711
        %v2858 = vadd.f32 %v2467, %v2716
        %v2859 = vadd.f32 %v2468, %v2721
        %v2860 = vadd.f32 %v2469, %v2726
        %v2861 = vadd.f32 %v2470, %v2731
        %v2862 = vadd.f32 %v2471, %v2736
        %v2863 = vadd.f32 %v2472, %v2741
        %v2864 = vadd.f32 %v2473, %v2746
        %v2865 = vadd.f32 %v2474, %v2751
        %v2866 = vadd.f32 %v2475, %v2756
        %v2867 = vadd.f32 %v2476, %v2761
        %v2868 = vadd.f32 %v2477, %v2766
        %v2869 = vadd.f32 %v2478, %v2771
        %v2870 = vadd.f32 %v2479, %v2776
        %v2871 = vadd.f32 %v2480, %v2781
        %v2872 = vadd.f32 %v2481, %v2786
        %v2873 = vadd.f32 %v2482, %v2791
        %v2874 = vadd.f32 %v2483, %v2796
        %v2875 = vadd.f32 %v2484, %v2801
        %v2876 = vadd.f32 %v2485, %v2806
        %v2877 = vadd.f32 %v2486, %v2811
        %v2878 = vadd.f32 %v2487, %v2816
        %v2879 = vadd.f32 %v2488, %v2821
        %v2880 = vadd.f32 %v2489, %v2826
        %v2881 = vadd.f32 %v2490, %v2831
        %v2882 = vadd.f32 %v2491, %v2836
        %v2883 = vadd.f32 %v2492, %v2841
        %v2884 = vadd.f32 %v2493, %v2846
        %v2885 = vadd.f32 %v2494, %v2851
        %v2886 = vld [vmem:[%s2495 + $0x1] sm:$0xff]
        %v2887 = vld [vmem:[%s2495 + $0x9] sm:$0xff]
        %v2888 = vld [vmem:[%s2495 + $0x19] sm:$0xff]
        %v2889 = vld [vmem:[%s2495 + $0x21] sm:$0xff]
        %v2890 = vld [vmem:[%s2495 + $0x31] sm:$0xff]
        %v2891 = vld [vmem:[%s2495 + $0x39] sm:$0xff]
        %v2892 = vld [vmem:[%s2495 + $0x49] sm:$0xff]
        %v2893 = vld [vmem:[%s2495 + $0x51] sm:$0xff]
        %v2894 = vld [vmem:[%s2495 + $0x61] sm:$0xff]
        %v2895 = vld [vmem:[%s2495 + $0x69] sm:$0xff]
        %v2896 = vld [vmem:[%s2495 + $0x79] sm:$0xff]
        %v2897 = vld [vmem:[%s2495 + $0x81] sm:$0xff]
        %v2898 = vld [vmem:[%s2495 + $0x91] sm:$0xff]
        %v2899 = vld [vmem:[%s2495 + $0x99] sm:$0xff]
        %v2900 = vld [vmem:[%s2495 + $0xa9] sm:$0xff]
        %v2901 = vld [vmem:[%s2495 + $0xb1] sm:$0xff]
        %v2902 = vld [vmem:[%s2495 + $0xc1] sm:$0xff]
        %v2903 = vld [vmem:[%s2495 + $0xc9] sm:$0xff]
        %v2904 = vld [vmem:[%s2495 + $0xd9] sm:$0xff]
        %v2905 = vld [vmem:[%s2495 + $0xe1] sm:$0xff]
        %v2906 = vld [vmem:[%s2495 + $0xf1] sm:$0xff]
        %v2907 = vld [vmem:[%s2495 + $0xf9] sm:$0xff]
        %v2908 = vld [vmem:[%s2495 + $0x109] sm:$0xff]
        %v2909 = vld [vmem:[%s2495 + $0x111] sm:$0xff]
        %v2910 = vld [vmem:[%s2495 + $0x121] sm:$0xff]
        %v2911 = vld [vmem:[%s2495 + $0x129] sm:$0xff]
        %v2912 = vld [vmem:[%s2495 + $0x139] sm:$0xff]
        %v2913 = vld [vmem:[%s2495 + $0x141] sm:$0xff]
        %v2914 = vld [vmem:[%s2495 + $0x151] sm:$0xff]
        %v2915 = vld [vmem:[%s2495 + $0x159] sm:$0xff]
        %v2916 = vld [vmem:[%s2495 + $0x169] sm:$0xff]
        %v2917 = vld [vmem:[%s2495 + $0x171] sm:$0xff]
        %s2918 = scalar_lea.vmem %s1, 28
        %v2919 = vld [vmem:[%s2918] sm:$0xf]
        %v2921 = vsel %vm284, %v2886, 0
        %v2924 = vsel %vm284, %v2887, 0
        %v2927 = vsel %vm284, %v2888, 0
        %v2930 = vsel %vm284, %v2889, 0
        %v2933 = vsel %vm284, %v2890, 0
        %v2936 = vsel %vm284, %v2891, 0
        %v2939 = vsel %vm284, %v2892, 0
        %v2942 = vsel %vm284, %v2893, 0
        %v2945 = vsel %vm284, %v2894, 0
        %v2948 = vsel %vm284, %v2895, 0
        %v2951 = vsel %vm284, %v2896, 0
        %v2954 = vsel %vm284, %v2897, 0
        %v2957 = vsel %vm284, %v2898, 0
        %v2960 = vsel %vm284, %v2899, 0
        %v2963 = vsel %vm284, %v2900, 0
        %v2966 = vsel %vm284, %v2901, 0
        %v2969 = vsel %vm284, %v2902, 0
        %v2972 = vsel %vm284, %v2903, 0
        %v2975 = vsel %vm284, %v2904, 0
        %v2978 = vsel %vm284, %v2905, 0
        %v2981 = vsel %vm284, %v2906, 0
        %v2984 = vsel %vm284, %v2907, 0
        %v2987 = vsel %vm284, %v2908, 0
        %v2990 = vsel %vm284, %v2909, 0
        %v2993 = vsel %vm284, %v2910, 0
        %v2996 = vsel %vm284, %v2911, 0
        %v2999 = vsel %vm284, %v2912, 0
        %v3002 = vsel %vm284, %v2913, 0
        %v3005 = vsel %vm284, %v2914, 0
        %v3008 = vsel %vm284, %v2915, 0
        %v3011 = vsel %vm284, %v2916, 0
        %v3014 = vsel %vm284, %v2917, 0
        %v3017 = vsel %vm381, %v2919, 0
        %3019 = vmatprep.subr.mxu0 0.0
        %3020 = vmatpush1.msra.mxu0 %v3017
        %3021 = vmatprep.subr.mxu0 0.0
        %3022 = vmatpush1.msra.mxu0 0.0
        %3023 = vmatprep.subr.mxu0 0.0
        %3024 = vmatpush1.msra.mxu0 0.0
        %3025 = vmatprep.subr.mxu0 0.0
        %3026 = vmatpush1.msra.mxu0 0.0
        %3027 = vmatprep.subr.mxu0 0.0
        %3028 = vmatpush1.msra.mxu0 0.0
        %3029 = vmatprep.subr.mxu0 0.0
        %3030 = vmatpush1.msra.mxu0 0.0
        %3031 = vmatprep.subr.mxu0 0.0
        %3032 = vmatpush1.msra.mxu0 0.0
        %3033 = vmatprep.subr.mxu0 0.0
        %3034 = vmatpush1.msra.mxu0 0.0
        %3035 = vmatprep.subr.mxu0 0.0
        %3036 = vmatpush1.msra.mxu0 0.0
        %3037 = vmatprep.subr.mxu0 0.0
        %3038 = vmatpush1.msra.mxu0 0.0
        %3039 = vmatprep.subr.mxu0 0.0
        %3040 = vmatpush1.msra.mxu0 0.0
        %3041 = vmatprep.subr.mxu0 0.0
        %3042 = vmatpush1.msra.mxu0 0.0
        %3043 = vmatprep.subr.mxu0 0.0
        %3044 = vmatpush1.msra.mxu0 0.0
        %3045 = vmatprep.subr.mxu0 0.0
        %3046 = vmatpush1.msra.mxu0 0.0
        %3047 = vmatprep.subr.mxu0 0.0
        %3048 = vmatpush1.msra.mxu0 0.0
        %3049 = vmatprep.subr.mxu0 0.0
        %3050 = vmatpush1.msra.mxu0 0.0
        %3051 = vmatprep.subr.mxu0 0.0
        %3052 = vmatpush1.msra.mxu0 0.0
        %3053 = vmatprep.subr.mxu0 0.0
        %3054 = vmatpush1.msra.mxu0 0.0
        %3055 = vmatprep.subr.mxu0 0.0
        %3056 = vmatpush1.msra.mxu0 0.0
        %3057 = vmatprep.subr.mxu0 0.0
        %3058 = vmatpush1.msra.mxu0 0.0
        %3059 = vmatprep.subr.mxu0 0.0
        %3060 = vmatpush1.msra.mxu0 0.0
        %3061 = vmatprep.subr.mxu0 0.0
        %3062 = vmatpush1.msra.mxu0 0.0
        %3063 = vmatprep.subr.mxu0 0.0
        %3064 = vmatpush1.msra.mxu0 0.0
        %3065 = vmatprep.subr.mxu0 0.0
        %3066 = vmatpush1.msra.mxu0 0.0
        %3067 = vmatprep.subr.mxu0 0.0
        %3068 = vmatpush1.msra.mxu0 0.0
        %3069 = vmatprep.subr.mxu0 0.0
        %3070 = vmatpush1.msra.mxu0 0.0
        %3071 = vmatprep.subr.mxu0 0.0
        %3072 = vmatpush1.msra.mxu0 0.0
        %3073 = vmatprep.subr.mxu0 0.0
        %3074 = vmatpush1.msra.mxu0 0.0
        %3075 = vmatprep.subr.mxu0 0.0
        %3076 = vmatpush1.msra.mxu0 0.0
        %3077 = vmatprep.subr.mxu0 0.0
        %3078 = vmatpush1.msra.mxu0 0.0
        %3079 = vmatprep.subr.mxu0 0.0
        %3080 = vmatpush1.msra.mxu0 0.0
        %3081 = vmatprep.subr.mxu0 0.0
        %3082 = vmatpush1.msra.mxu0 0.0
        %3083 = vmatprep.mubr.f32.mxu0 0.0
        %3084 = vmatmul.mubr.f32.gmra.mrb[0].mxu0 %v2921
        %v3085 = vpop.f32.mrb[0].mxu0
        %v3086 = vadd.f32 0.0, %v3085
        %v3087 = vpop.f32.mrb[0].mxu0
        %3088 = vmatprep.mubr.f32.mxu0 0.0
        %3089 = vmatmul.mubr.f32.gmra.mrb[0].mxu0 %v2924
        %v3090 = vpop.f32.mrb[0].mxu0
        %v3091 = vadd.f32 0.0, %v3090
        %v3092 = vpop.f32.mrb[0].mxu0
        %3093 = vmatprep.mubr.f32.mxu0 0.0
        %3094 = vmatmul.mubr.f32.gmra.mrb[0].mxu0 %v2927
        %v3095 = vpop.f32.mrb[0].mxu0
        %v3096 = vadd.f32 0.0, %v3095
        %v3097 = vpop.f32.mrb[0].mxu0
        %3098 = vmatprep.mubr.f32.mxu0 0.0
        %3099 = vmatmul.mubr.f32.gmra.mrb[0].mxu0 %v2930
        %v3100 = vpop.f32.mrb[0].mxu0
        %v3101 = vadd.f32 0.0, %v3100
        %v3102 = vpop.f32.mrb[0].mxu0
        %3103 = vmatprep.mubr.f32.mxu0 0.0
        %3104 = vmatmul.mubr.f32.gmra.mrb[0].mxu0 %v2933
        %v3105 = vpop.f32.mrb[0].mxu0
        %v3106 = vadd.f32 0.0, %v3105
        %v3107 = vpop.f32.mrb[0].mxu0
        %3108 = vmatprep.mubr.f32.mxu0 0.0
        %3109 = vmatmul.mubr.f32.gmra.mrb[0].mxu0 %v2936
        %v3110 = vpop.f32.mrb[0].mxu0
        %v3111 = vadd.f32 0.0, %v3110
        %v3112 = vpop.f32.mrb[0].mxu0
        %3113 = vmatprep.mubr.f32.mxu0 0.0
        %3114 = vmatmul.mubr.f32.gmra.mrb[0].mxu0 %v2939
        %v3115 = vpop.f32.mrb[0].mxu0
        %v3116 = vadd.f32 0.0, %v3115
        %v3117 = vpop.f32.mrb[0].mxu0
        %3118 = vmatprep.mubr.f32.mxu0 0.0
        %3119 = vmatmul.mubr.f32.gmra.mrb[0].mxu0 %v2942
        %v3120 = vpop.f32.mrb[0].mxu0
        %v3121 = vadd.f32 0.0, %v3120
        %v3122 = vpop.f32.mrb[0].mxu0
        %3123 = vmatprep.mubr.f32.mxu0 0.0
        %3124 = vmatmul.mubr.f32.gmra.mrb[0].mxu0 %v2945
        %v3125 = vpop.f32.mrb[0].mxu0
        %v3126 = vadd.f32 0.0, %v3125
        %v3127 = vpop.f32.mrb[0].mxu0
        %3128 = vmatprep.mubr.f32.mxu0 0.0
        %3129 = vmatmul.mubr.f32.gmra.mrb[0].mxu0 %v2948
        %v3130 = vpop.f32.mrb[0].mxu0
        %v3131 = vadd.f32 0.0, %v3130
        %v3132 = vpop.f32.mrb[0].mxu0
        %3133 = vmatprep.mubr.f32.mxu0 0.0
        %3134 = vmatmul.mubr.f32.gmra.mrb[0].mxu0 %v2951
        %v3135 = vpop.f32.mrb[0].mxu0
        %v3136 = vadd.f32 0.0, %v3135
        %v3137 = vpop.f32.mrb[0].mxu0
        %3138 = vmatprep.mubr.f32.mxu0 0.0
        %3139 = vmatmul.mubr.f32.gmra.mrb[0].mxu0 %v2954
        %v3140 = vpop.f32.mrb[0].mxu0
        %v3141 = vadd.f32 0.0, %v3140
        %v3142 = vpop.f32.mrb[0].mxu0
        %3143 = vmatprep.mubr.f32.mxu0 0.0
        %3144 = vmatmul.mubr.f32.gmra.mrb[0].mxu0 %v2957
        %v3145 = vpop.f32.mrb[0].mxu0
        %v3146 = vadd.f32 0.0, %v3145
        %v3147 = vpop.f32.mrb[0].mxu0
        %3148 = vmatprep.mubr.f32.mxu0 0.0
        %3149 = vmatmul.mubr.f32.gmra.mrb[0].mxu0 %v2960
        %v3150 = vpop.f32.mrb[0].mxu0
        %v3151 = vadd.f32 0.0, %v3150
        %v3152 = vpop.f32.mrb[0].mxu0
        %3153 = vmatprep.mubr.f32.mxu0 0.0
        %3154 = vmatmul.mubr.f32.gmra.mrb[0].mxu0 %v2963
        %v3155 = vpop.f32.mrb[0].mxu0
        %v3156 = vadd.f32 0.0, %v3155
        %v3157 = vpop.f32.mrb[0].mxu0
        %3158 = vmatprep.mubr.f32.mxu0 0.0
        %3159 = vmatmul.mubr.f32.gmra.mrb[0].mxu0 %v2966
        %v3160 = vpop.f32.mrb[0].mxu0
        %v3161 = vadd.f32 0.0, %v3160
        %v3162 = vpop.f32.mrb[0].mxu0
        %3163 = vmatprep.mubr.f32.mxu0 0.0
        %3164 = vmatmul.mubr.f32.gmra.mrb[0].mxu0 %v2969
        %v3165 = vpop.f32.mrb[0].mxu0
        %v3166 = vadd.f32 0.0, %v3165
        %v3167 = vpop.f32.mrb[0].mxu0
        %3168 = vmatprep.mubr.f32.mxu0 0.0
        %3169 = vmatmul.mubr.f32.gmra.mrb[0].mxu0 %v2972
        %v3170 = vpop.f32.mrb[0].mxu0
        %v3171 = vadd.f32 0.0, %v3170
        %v3172 = vpop.f32.mrb[0].mxu0
        %3173 = vmatprep.mubr.f32.mxu0 0.0
        %3174 = vmatmul.mubr.f32.gmra.mrb[0].mxu0 %v2975
        %v3175 = vpop.f32.mrb[0].mxu0
        %v3176 = vadd.f32 0.0, %v3175
        %v3177 = vpop.f32.mrb[0].mxu0
        %3178 = vmatprep.mubr.f32.mxu0 0.0
        %3179 = vmatmul.mubr.f32.gmra.mrb[0].mxu0 %v2978
        %v3180 = vpop.f32.mrb[0].mxu0
        %v3181 = vadd.f32 0.0, %v3180
        %v3182 = vpop.f32.mrb[0].mxu0
        %3183 = vmatprep.mubr.f32.mxu0 0.0
        %3184 = vmatmul.mubr.f32.gmra.mrb[0].mxu0 %v2981
        %v3185 = vpop.f32.mrb[0].mxu0
        %v3186 = vadd.f32 0.0, %v3185
        %v3187 = vpop.f32.mrb[0].mxu0
        %3188 = vmatprep.mubr.f32.mxu0 0.0
        %3189 = vmatmul.mubr.f32.gmra.mrb[0].mxu0 %v2984
        %v3190 = vpop.f32.mrb[0].mxu0
        %v3191 = vadd.f32 0.0, %v3190
        %v3192 = vpop.f32.mrb[0].mxu0
        %3193 = vmatprep.mubr.f32.mxu0 0.0
        %3194 = vmatmul.mubr.f32.gmra.mrb[0].mxu0 %v2987
        %v3195 = vpop.f32.mrb[0].mxu0
        %v3196 = vadd.f32 0.0, %v3195
        %v3197 = vpop.f32.mrb[0].mxu0
        %3198 = vmatprep.mubr.f32.mxu0 0.0
        %3199 = vmatmul.mubr.f32.gmra.mrb[0].mxu0 %v2990
        %v3200 = vpop.f32.mrb[0].mxu0
        %v3201 = vadd.f32 0.0, %v3200
        %v3202 = vpop.f32.mrb[0].mxu0
        %3203 = vmatprep.mubr.f32.mxu0 0.0
        %3204 = vmatmul.mubr.f32.gmra.mrb[0].mxu0 %v2993
        %v3205 = vpop.f32.mrb[0].mxu0
        %v3206 = vadd.f32 0.0, %v3205
        %v3207 = vpop.f32.mrb[0].mxu0
        %3208 = vmatprep.mubr.f32.mxu0 0.0
        %3209 = vmatmul.mubr.f32.gmra.mrb[0].mxu0 %v2996
        %v3210 = vpop.f32.mrb[0].mxu0
        %v3211 = vadd.f32 0.0, %v3210
        %v3212 = vpop.f32.mrb[0].mxu0
        %3213 = vmatprep.mubr.f32.mxu0 0.0
        %3214 = vmatmul.mubr.f32.gmra.mrb[0].mxu0 %v2999
        %v3215 = vpop.f32.mrb[0].mxu0
        %v3216 = vadd.f32 0.0, %v3215
        %v3217 = vpop.f32.mrb[0].mxu0
        %3218 = vmatprep.mubr.f32.mxu0 0.0
        %3219 = vmatmul.mubr.f32.gmra.mrb[0].mxu0 %v3002
        %v3220 = vpop.f32.mrb[0].mxu0
        %v3221 = vadd.f32 0.0, %v3220
        %v3222 = vpop.f32.mrb[0].mxu0
        %3223 = vmatprep.mubr.f32.mxu0 0.0
        %3224 = vmatmul.mubr.f32.gmra.mrb[0].mxu0 %v3005
        %v3225 = vpop.f32.mrb[0].mxu0
        %v3226 = vadd.f32 0.0, %v3225
        %v3227 = vpop.f32.mrb[0].mxu0
        %3228 = vmatprep.mubr.f32.mxu0 0.0
        %3229 = vmatmul.mubr.f32.gmra.mrb[0].mxu0 %v3008
        %v3230 = vpop.f32.mrb[0].mxu0
        %v3231 = vadd.f32 0.0, %v3230
        %v3232 = vpop.f32.mrb[0].mxu0
        %3233 = vmatprep.mubr.f32.mxu0 0.0
        %3234 = vmatmul.mubr.f32.gmra.mrb[0].mxu0 %v3011
        %v3235 = vpop.f32.mrb[0].mxu0
        %v3236 = vadd.f32 0.0, %v3235
        %v3237 = vpop.f32.mrb[0].mxu0
        %3238 = vmatprep.mubr.f32.mxu0 0.0
        %3239 = vmatmul.mubr.f32.gmra.mrb[0].mxu0 %v3014
        %v3240 = vpop.f32.mrb[0].mxu0
        %v3241 = vadd.f32 0.0, %v3240
        %v3242 = vpop.f32.mrb[0].mxu0
        %3243 = vdwg.mxu0
        %v3244 = vadd.f32 %v2854, %v3086
        %v3245 = vadd.f32 %v2855, %v3091
        %v3246 = vadd.f32 %v2856, %v3096
        %v3247 = vadd.f32 %v2857, %v3101
        %v3248 = vadd.f32 %v2858, %v3106
        %v3249 = vadd.f32 %v2859, %v3111
        %v3250 = vadd.f32 %v2860, %v3116
        %v3251 = vadd.f32 %v2861, %v3121
        %v3252 = vadd.f32 %v2862, %v3126
        %v3253 = vadd.f32 %v2863, %v3131
        %v3254 = vadd.f32 %v2864, %v3136
        %v3255 = vadd.f32 %v2865, %v3141
        %v3256 = vadd.f32 %v2866, %v3146
        %v3257 = vadd.f32 %v2867, %v3151
        %v3258 = vadd.f32 %v2868, %v3156
        %v3259 = vadd.f32 %v2869, %v3161
        %v3260 = vadd.f32 %v2870, %v3166
        %v3261 = vadd.f32 %v2871, %v3171
        %v3262 = vadd.f32 %v2872, %v3176
        %v3263 = vadd.f32 %v2873, %v3181
        %v3264 = vadd.f32 %v2874, %v3186
        %v3265 = vadd.f32 %v2875, %v3191
        %v3266 = vadd.f32 %v2876, %v3196
        %v3267 = vadd.f32 %v2877, %v3201
        %v3268 = vadd.f32 %v2878, %v3206
        %v3269 = vadd.f32 %v2879, %v3211
        %v3270 = vadd.f32 %v2880, %v3216
        %v3271 = vadd.f32 %v2881, %v3221
        %v3272 = vadd.f32 %v2882, %v3226
        %v3273 = vadd.f32 %v2883, %v3231
        %v3274 = vadd.f32 %v2884, %v3236
        %v3275 = vadd.f32 %v2885, %v3241
        %v3276 = vld [vmem:[%s2495 + $0x2] sm:$0xff]
        %v3277 = vld [vmem:[%s2495 + $0xa] sm:$0xff]
        %v3278 = vld [vmem:[%s2495 + $0x1a] sm:$0xff]
        %v3279 = vld [vmem:[%s2495 + $0x22] sm:$0xff]
        %v3280 = vld [vmem:[%s2495 + $0x32] sm:$0xff]
        %v3281 = vld [vmem:[%s2495 + $0x3a] sm:$0xff]
        %v3282 = vld [vmem:[%s2495 + $0x4a] sm:$0xff]
        %v3283 = vld [vmem:[%s2495 + $0x52] sm:$0xff]
        %v3284 = vld [vmem:[%s2495 + $0x62] sm:$0xff]
        %v3285 = vld [vmem:[%s2495 + $0x6a] sm:$0xff]
        %v3286 = vld [vmem:[%s2495 + $0x7a] sm:$0xff]
        %v3287 = vld [vmem:[%s2495 + $0x82] sm:$0xff]
        %v3288 = vld [vmem:[%s2495 + $0x92] sm:$0xff]
        %v3289 = vld [vmem:[%s2495 + $0x9a] sm:$0xff]
        %v3290 = vld [vmem:[%s2495 + $0xaa] sm:$0xff]
        %v3291 = vld [vmem:[%s2495 + $0xb2] sm:$0xff]
        %v3292 = vld [vmem:[%s2495 + $0xc2] sm:$0xff]
        %v3293 = vld [vmem:[%s2495 + $0xca] sm:$0xff]
        %v3294 = vld [vmem:[%s2495 + $0xda] sm:$0xff]
        %v3295 = vld [vmem:[%s2495 + $0xe2] sm:$0xff]
        %v3296 = vld [vmem:[%s2495 + $0xf2] sm:$0xff]
        %v3297 = vld [vmem:[%s2495 + $0xfa] sm:$0xff]
        %v3298 = vld [vmem:[%s2495 + $0x10a] sm:$0xff]
        %v3299 = vld [vmem:[%s2495 + $0x112] sm:$0xff]
        %v3300 = vld [vmem:[%s2495 + $0x122] sm:$0xff]
        %v3301 = vld [vmem:[%s2495 + $0x12a] sm:$0xff]
        %v3302 = vld [vmem:[%s2495 + $0x13a] sm:$0xff]
        %v3303 = vld [vmem:[%s2495 + $0x142] sm:$0xff]
        %v3304 = vld [vmem:[%s2495 + $0x152] sm:$0xff]
        %v3305 = vld [vmem:[%s2495 + $0x15a] sm:$0xff]
        %v3306 = vld [vmem:[%s2495 + $0x16a] sm:$0xff]
        %v3307 = vld [vmem:[%s2495 + $0x172] sm:$0xff]
        %s3308 = scalar_lea.vmem %s1, 32
        %v3309 = vld [vmem:[%s3308] sm:$0xf]
        %v3311 = vsel %vm284, %v3276, 0
        %v3314 = vsel %vm284, %v3277, 0
        %v3317 = vsel %vm284, %v3278, 0
        %v3320 = vsel %vm284, %v3279, 0
        %v3323 = vsel %vm284, %v3280, 0
        %v3326 = vsel %vm284, %v3281, 0
        %v3329 = vsel %vm284, %v3282, 0
        %v3332 = vsel %vm284, %v3283, 0
        %v3335 = vsel %vm284, %v3284, 0
        %v3338 = vsel %vm284, %v3285, 0
        %v3341 = vsel %vm284, %v3286, 0
        %v3344 = vsel %vm284, %v3287, 0
        %v3347 = vsel %vm284, %v3288, 0
        %v3350 = vsel %vm284, %v3289, 0
        %v3353 = vsel %vm284, %v3290, 0
        %v3356 = vsel %vm284, %v3291, 0
        %v3359 = vsel %vm284, %v3292, 0
        %v3362 = vsel %vm284, %v3293, 0
        %v3365 = vsel %vm284, %v3294, 0
        %v3368 = vsel %vm284, %v3295, 0
        %v3371 = vsel %vm284, %v3296, 0
        %v3374 = vsel %vm284, %v3297, 0
        %v3377 = vsel %vm284, %v3298, 0
        %v3380 = vsel %vm284, %v3299, 0
        %v3383 = vsel %vm284, %v3300, 0
        %v3386 = vsel %vm284, %v3301, 0
        %v3389 = vsel %vm284, %v3302, 0
        %v3392 = vsel %vm284, %v3303, 0
        %v3395 = vsel %vm284, %v3304, 0
        %v3398 = vsel %vm284, %v3305, 0
        %v3401 = vsel %vm284, %v3306, 0
        %v3404 = vsel %vm284, %v3307, 0
        %v3407 = vsel %vm381, %v3309, 0
        %3409 = vmatprep.subr.mxu0 0.0
        %3410 = vmatpush1.msra.mxu0 %v3407
        %3411 = vmatprep.subr.mxu0 0.0
        %3412 = vmatpush1.msra.mxu0 0.0
        %3413 = vmatprep.subr.mxu0 0.0
        %3414 = vmatpush1.msra.mxu0 0.0
        %3415 = vmatprep.subr.mxu0 0.0
        %3416 = vmatpush1.msra.mxu0 0.0
        %3417 = vmatprep.subr.mxu0 0.0
        %3418 = vmatpush1.msra.mxu0 0.0
        %3419 = vmatprep.subr.mxu0 0.0
        %3420 = vmatpush1.msra.mxu0 0.0
        %3421 = vmatprep.subr.mxu0 0.0
        %3422 = vmatpush1.msra.mxu0 0.0
        %3423 = vmatprep.subr.mxu0 0.0
        %3424 = vmatpush1.msra.mxu0 0.0
        %3425 = vmatprep.subr.mxu0 0.0
        %3426 = vmatpush1.msra.mxu0 0.0
        %3427 = vmatprep.subr.mxu0 0.0
        %3428 = vmatpush1.msra.mxu0 0.0
        %3429 = vmatprep.subr.mxu0 0.0
        %3430 = vmatpush1.msra.mxu0 0.0
        %3431 = vmatprep.subr.mxu0 0.0
        %3432 = vmatpush1.msra.mxu0 0.0
        %3433 = vmatprep.subr.mxu0 0.0
        %3434 = vmatpush1.msra.mxu0 0.0
        %3435 = vmatprep.subr.mxu0 0.0
        %3436 = vmatpush1.msra.mxu0 0.0
        %3437 = vmatprep.subr.mxu0 0.0
        %3438 = vmatpush1.msra.mxu0 0.0
        %3439 = vmatprep.subr.mxu0 0.0
        %3440 = vmatpush1.msra.mxu0 0.0
        %3441 = vmatprep.subr.mxu0 0.0
        %3442 = vmatpush1.msra.mxu0 0.0
        %3443 = vmatprep.subr.mxu0 0.0
        %3444 = vmatpush1.msra.mxu0 0.0
        %3445 = vmatprep.subr.mxu0 0.0
        %3446 = vmatpush1.msra.mxu0 0.0
        %3447 = vmatprep.subr.mxu0 0.0
        %3448 = vmatpush1.msra.mxu0 0.0
        %3449 = vmatprep.subr.mxu0 0.0
        %3450 = vmatpush1.msra.mxu0 0.0
        %3451 = vmatprep.subr.mxu0 0.0
        %3452 = vmatpush1.msra.mxu0 0.0
        %3453 = vmatprep.subr.mxu0 0.0
        %3454 = vmatpush1.msra.mxu0 0.0
        %3455 = vmatprep.subr.mxu0 0.0
        %3456 = vmatpush1.msra.mxu0 0.0
        %3457 = vmatprep.subr.mxu0 0.0
        %3458 = vmatpush1.msra.mxu0 0.0
        %3459 = vmatprep.subr.mxu0 0.0
        %3460 = vmatpush1.msra.mxu0 0.0
        %3461 = vmatprep.subr.mxu0 0.0
        %3462 = vmatpush1.msra.mxu0 0.0
        %3463 = vmatprep.subr.mxu0 0.0
        %3464 = vmatpush1.msra.mxu0 0.0
        %3465 = vmatprep.subr.mxu0 0.0
        %3466 = vmatpush1.msra.mxu0 0.0
        %3467 = vmatprep.subr.mxu0 0.0
        %3468 = vmatpush1.msra.mxu0 0.0
        %3469 = vmatprep.subr.mxu0 0.0
        %3470 = vmatpush1.msra.mxu0 0.0
        %3471 = vmatprep.subr.mxu0 0.0
        %3472 = vmatpush1.msra.mxu0 0.0
        %3473 = vmatprep.mubr.f32.mxu0 0.0
        %3474 = vmatmul.mubr.f32.gmra.mrb[0].mxu0 %v3311
        %v3475 = vpop.f32.mrb[0].mxu0
        %v3476 = vadd.f32 0.0, %v3475
        %v3477 = vpop.f32.mrb[0].mxu0
        %3478 = vmatprep.mubr.f32.mxu0 0.0
        %3479 = vmatmul.mubr.f32.gmra.mrb[0].mxu0 %v3314
        %v3480 = vpop.f32.mrb[0].mxu0
        %v3481 = vadd.f32 0.0, %v3480
        %v3482 = vpop.f32.mrb[0].mxu0
        %3483 = vmatprep.mubr.f32.mxu0 0.0
        %3484 = vmatmul.mubr.f32.gmra.mrb[0].mxu0 %v3317
        %v3485 = vpop.f32.mrb[0].mxu0
        %v3486 = vadd.f32 0.0, %v3485
        %v3487 = vpop.f32.mrb[0].mxu0
        %3488 = vmatprep.mubr.f32.mxu0 0.0
        %3489 = vmatmul.mubr.f32.gmra.mrb[0].mxu0 %v3320
        %v3490 = vpop.f32.mrb[0].mxu0
        %v3491 = vadd.f32 0.0, %v3490
        %v3492 = vpop.f32.mrb[0].mxu0
        %3493 = vmatprep.mubr.f32.mxu0 0.0
        %3494 = vmatmul.mubr.f32.gmra.mrb[0].mxu0 %v3323
        %v3495 = vpop.f32.mrb[0].mxu0
        %v3496 = vadd.f32 0.0, %v3495
        %v3497 = vpop.f32.mrb[0].mxu0
        %3498 = vmatprep.mubr.f32.mxu0 0.0
        %3499 = vmatmul.mubr.f32.gmra.mrb[0].mxu0 %v3326
        %v3500 = vpop.f32.mrb[0].mxu0
        %v3501 = vadd.f32 0.0, %v3500
        %v3502 = vpop.f32.mrb[0].mxu0
        %3503 = vmatprep.mubr.f32.mxu0 0.0
        %3504 = vmatmul.mubr.f32.gmra.mrb[0].mxu0 %v3329
        %v3505 = vpop.f32.mrb[0].mxu0
        %v3506 = vadd.f32 0.0, %v3505
        %v3507 = vpop.f32.mrb[0].mxu0
        %3508 = vmatprep.mubr.f32.mxu0 0.0
        %3509 = vmatmul.mubr.f32.gmra.mrb[0].mxu0 %v3332
        %v3510 = vpop.f32.mrb[0].mxu0
        %v3511 = vadd.f32 0.0, %v3510
        %v3512 = vpop.f32.mrb[0].mxu0
        %3513 = vmatprep.mubr.f32.mxu0 0.0
        %3514 = vmatmul.mubr.f32.gmra.mrb[0].mxu0 %v3335
        %v3515 = vpop.f32.mrb[0].mxu0
        %v3516 = vadd.f32 0.0, %v3515
        %v3517 = vpop.f32.mrb[0].mxu0
        %3518 = vmatprep.mubr.f32.mxu0 0.0
        %3519 = vmatmul.mubr.f32.gmra.mrb[0].mxu0 %v3338
        %v3520 = vpop.f32.mrb[0].mxu0
        %v3521 = vadd.f32 0.0, %v3520
        %v3522 = vpop.f32.mrb[0].mxu0
        %3523 = vmatprep.mubr.f32.mxu0 0.0
        %3524 = vmatmul.mubr.f32.gmra.mrb[0].mxu0 %v3341
        %v3525 = vpop.f32.mrb[0].mxu0
        %v3526 = vadd.f32 0.0, %v3525
        %v3527 = vpop.f32.mrb[0].mxu0
        %3528 = vmatprep.mubr.f32.mxu0 0.0
        %3529 = vmatmul.mubr.f32.gmra.mrb[0].mxu0 %v3344
        %v3530 = vpop.f32.mrb[0].mxu0
        %v3531 = vadd.f32 0.0, %v3530
        %v3532 = vpop.f32.mrb[0].mxu0
        %3533 = vmatprep.mubr.f32.mxu0 0.0
        %3534 = vmatmul.mubr.f32.gmra.mrb[0].mxu0 %v3347
        %v3535 = vpop.f32.mrb[0].mxu0
        %v3536 = vadd.f32 0.0, %v3535
        %v3537 = vpop.f32.mrb[0].mxu0
        %3538 = vmatprep.mubr.f32.mxu0 0.0
        %3539 = vmatmul.mubr.f32.gmra.mrb[0].mxu0 %v3350
        %v3540 = vpop.f32.mrb[0].mxu0
        %v3541 = vadd.f32 0.0, %v3540
        %v3542 = vpop.f32.mrb[0].mxu0
        %3543 = vmatprep.mubr.f32.mxu0 0.0
        %3544 = vmatmul.mubr.f32.gmra.mrb[0].mxu0 %v3353
        %v3545 = vpop.f32.mrb[0].mxu0
        %v3546 = vadd.f32 0.0, %v3545
        %v3547 = vpop.f32.mrb[0].mxu0
        %3548 = vmatprep.mubr.f32.mxu0 0.0
        %3549 = vmatmul.mubr.f32.gmra.mrb[0].mxu0 %v3356
        %v3550 = vpop.f32.mrb[0].mxu0
        %v3551 = vadd.f32 0.0, %v3550
        %v3552 = vpop.f32.mrb[0].mxu0
        %3553 = vmatprep.mubr.f32.mxu0 0.0
        %3554 = vmatmul.mubr.f32.gmra.mrb[0].mxu0 %v3359
        %v3555 = vpop.f32.mrb[0].mxu0
        %v3556 = vadd.f32 0.0, %v3555
        %v3557 = vpop.f32.mrb[0].mxu0
        %3558 = vmatprep.mubr.f32.mxu0 0.0
        %3559 = vmatmul.mubr.f32.gmra.mrb[0].mxu0 %v3362
        %v3560 = vpop.f32.mrb[0].mxu0
        %v3561 = vadd.f32 0.0, %v3560
        %v3562 = vpop.f32.mrb[0].mxu0
        %3563 = vmatprep.mubr.f32.mxu0 0.0
        %3564 = vmatmul.mubr.f32.gmra.mrb[0].mxu0 %v3365
        %v3565 = vpop.f32.mrb[0].mxu0
        %v3566 = vadd.f32 0.0, %v3565
        %v3567 = vpop.f32.mrb[0].mxu0
        %3568 = vmatprep.mubr.f32.mxu0 0.0
        %3569 = vmatmul.mubr.f32.gmra.mrb[0].mxu0 %v3368
        %v3570 = vpop.f32.mrb[0].mxu0
        %v3571 = vadd.f32 0.0, %v3570
        %v3572 = vpop.f32.mrb[0].mxu0
        %3573 = vmatprep.mubr.f32.mxu0 0.0
        %3574 = vmatmul.mubr.f32.gmra.mrb[0].mxu0 %v3371
        %v3575 = vpop.f32.mrb[0].mxu0
        %v3576 = vadd.f32 0.0, %v3575
        %v3577 = vpop.f32.mrb[0].mxu0
        %3578 = vmatprep.mubr.f32.mxu0 0.0
        %3579 = vmatmul.mubr.f32.gmra.mrb[0].mxu0 %v3374
        %v3580 = vpop.f32.mrb[0].mxu0
        %v3581 = vadd.f32 0.0, %v3580
        %v3582 = vpop.f32.mrb[0].mxu0
        %3583 = vmatprep.mubr.f32.mxu0 0.0
        %3584 = vmatmul.mubr.f32.gmra.mrb[0].mxu0 %v3377
        %v3585 = vpop.f32.mrb[0].mxu0
        %v3586 = vadd.f32 0.0, %v3585
        %v3587 = vpop.f32.mrb[0].mxu0
        %3588 = vmatprep.mubr.f32.mxu0 0.0
        %3589 = vmatmul.mubr.f32.gmra.mrb[0].mxu0 %v3380
        %v3590 = vpop.f32.mrb[0].mxu0
        %v3591 = vadd.f32 0.0, %v3590
        %v3592 = vpop.f32.mrb[0].mxu0
        %3593 = vmatprep.mubr.f32.mxu0 0.0
        %3594 = vmatmul.mubr.f32.gmra.mrb[0].mxu0 %v3383
        %v3595 = vpop.f32.mrb[0].mxu0
        %v3596 = vadd.f32 0.0, %v3595
        %v3597 = vpop.f32.mrb[0].mxu0
        %3598 = vmatprep.mubr.f32.mxu0 0.0
        %3599 = vmatmul.mubr.f32.gmra.mrb[0].mxu0 %v3386
        %v3600 = vpop.f32.mrb[0].mxu0
        %v3601 = vadd.f32 0.0, %v3600
        %v3602 = vpop.f32.mrb[0].mxu0
        %3603 = vmatprep.mubr.f32.mxu0 0.0
        %3604 = vmatmul.mubr.f32.gmra.mrb[0].mxu0 %v3389
        %v3605 = vpop.f32.mrb[0].mxu0
        %v3606 = vadd.f32 0.0, %v3605
        %v3607 = vpop.f32.mrb[0].mxu0
        %3608 = vmatprep.mubr.f32.mxu0 0.0
        %3609 = vmatmul.mubr.f32.gmra.mrb[0].mxu0 %v3392
        %v3610 = vpop.f32.mrb[0].mxu0
        %v3611 = vadd.f32 0.0, %v3610
        %v3612 = vpop.f32.mrb[0].mxu0
        %3613 = vmatprep.mubr.f32.mxu0 0.0
        %3614 = vmatmul.mubr.f32.gmra.mrb[0].mxu0 %v3395
        %v3615 = vpop.f32.mrb[0].mxu0
        %v3616 = vadd.f32 0.0, %v3615
        %v3617 = vpop.f32.mrb[0].mxu0
        %3618 = vmatprep.mubr.f32.mxu0 0.0
        %3619 = vmatmul.mubr.f32.gmra.mrb[0].mxu0 %v3398
        %v3620 = vpop.f32.mrb[0].mxu0
        %v3621 = vadd.f32 0.0, %v3620
        %v3622 = vpop.f32.mrb[0].mxu0
        %3623 = vmatprep.mubr.f32.mxu0 0.0
        %3624 = vmatmul.mubr.f32.gmra.mrb[0].mxu0 %v3401
        %v3625 = vpop.f32.mrb[0].mxu0
        %v3626 = vadd.f32 0.0, %v3625
        %v3627 = vpop.f32.mrb[0].mxu0
        %3628 = vmatprep.mubr.f32.mxu0 0.0
        %3629 = vmatmul.mubr.f32.gmra.mrb[0].mxu0 %v3404
        %v3630 = vpop.f32.mrb[0].mxu0
        %v3631 = vadd.f32 0.0, %v3630
        %v3632 = vpop.f32.mrb[0].mxu0
        %3633 = vdwg.mxu0
        %v3634 = vadd.f32 %v3244, %v3476
        %v3635 = vadd.f32 %v3245, %v3481
        %v3636 = vadd.f32 %v3246, %v3486
        %v3637 = vadd.f32 %v3247, %v3491
        %v3638 = vadd.f32 %v3248, %v3496
        %v3639 = vadd.f32 %v3249, %v3501
        %v3640 = vadd.f32 %v3250, %v3506
        %v3641 = vadd.f32 %v3251, %v3511
        %v3642 = vadd.f32 %v3252, %v3516
        %v3643 = vadd.f32 %v3253, %v3521
        %v3644 = vadd.f32 %v3254, %v3526
        %v3645 = vadd.f32 %v3255, %v3531
        %v3646 = vadd.f32 %v3256, %v3536
        %v3647 = vadd.f32 %v3257, %v3541
        %v3648 = vadd.f32 %v3258, %v3546
        %v3649 = vadd.f32 %v3259, %v3551
        %v3650 = vadd.f32 %v3260, %v3556
        %v3651 = vadd.f32 %v3261, %v3561
        %v3652 = vadd.f32 %v3262, %v3566
        %v3653 = vadd.f32 %v3263, %v3571
        %v3654 = vadd.f32 %v3264, %v3576
        %v3655 = vadd.f32 %v3265, %v3581
        %v3656 = vadd.f32 %v3266, %v3586
        %v3657 = vadd.f32 %v3267, %v3591
        %v3658 = vadd.f32 %v3268, %v3596
        %v3659 = vadd.f32 %v3269, %v3601
        %v3660 = vadd.f32 %v3270, %v3606
        %v3661 = vadd.f32 %v3271, %v3611
        %v3662 = vadd.f32 %v3272, %v3616
        %v3663 = vadd.f32 %v3273, %v3621
        %v3664 = vadd.f32 %v3274, %v3626
        %v3665 = vadd.f32 %v3275, %v3631
        %3666 = vxpose.xlu0.b32.start [1/16] %v3634, 128
        %3667 = vxpose.xlu0.b32.cont [2/16] %v3635, 128
        %3668 = vxpose.xlu0.b32.cont [3/16] %v3636, 128
        %3669 = vxpose.xlu0.b32.cont [4/16] %v3637, 128
        %3670 = vxpose.xlu0.b32.cont [5/16] %v3638, 128
        %3671 = vxpose.xlu0.b32.cont [6/16] %v3639, 128
        %3672 = vxpose.xlu0.b32.cont [7/16] %v3640, 128
        %3673 = vxpose.xlu0.b32.cont [8/16] %v3641, 128
        %3674 = vxpose.xlu0.b32.cont [9/16] %v3642, 128
        %3675 = vxpose.xlu0.b32.cont [10/16] %v3643, 128
        %3676 = vxpose.xlu0.b32.cont [11/16] %v3644, 128
        %3677 = vxpose.xlu0.b32.cont [12/16] %v3645, 128
        %3678 = vxpose.xlu0.b32.cont [13/16] %v3646, 128
        %3679 = vxpose.xlu0.b32.cont [14/16] %v3647, 128
        %3680 = vxpose.xlu0.b32.cont [15/16] %v3648, 128
        %3681 = vxpose.xlu0.b32.end [16/16] %v3649, 128
        %v3682 = vpop.trf.xlu0
        %v3683 = vpop.trf.xlu0
        %v3684 = vpop.trf.xlu0
        %v3685 = vpop.trf.xlu0
        %v3686 = vpop.trf.xlu0
        %v3687 = vpop.trf.xlu0
        %v3688 = vpop.trf.xlu0
        %v3689 = vpop.trf.xlu0
        %v3690 = vpop.trf.xlu0
        %v3691 = vpop.trf.xlu0
        %v3692 = vpop.trf.xlu0
        %v3693 = vpop.trf.xlu0
        %v3694 = vpop.trf.xlu0
        %v3695 = vpop.trf.xlu0
        %v3696 = vpop.trf.xlu0
        %v3697 = vpop.trf.xlu0
        %3698 = vxpose.xlu0.b32.start [1/16] %v3650, 128
        %3699 = vxpose.xlu0.b32.cont [2/16] %v3651, 128
        %3700 = vxpose.xlu0.b32.cont [3/16] %v3652, 128
        %3701 = vxpose.xlu0.b32.cont [4/16] %v3653, 128
        %3702 = vxpose.xlu0.b32.cont [5/16] %v3654, 128
        %3703 = vxpose.xlu0.b32.cont [6/16] %v3655, 128
        %3704 = vxpose.xlu0.b32.cont [7/16] %v3656, 128
        %3705 = vxpose.xlu0.b32.cont [8/16] %v3657, 128
        %3706 = vxpose.xlu0.b32.cont [9/16] %v3658, 128
        %3707 = vxpose.xlu0.b32.cont [10/16] %v3659, 128
        %3708 = vxpose.xlu0.b32.cont [11/16] %v3660, 128
        %3709 = vxpose.xlu0.b32.cont [12/16] %v3661, 128
        %3710 = vxpose.xlu0.b32.cont [13/16] %v3662, 128
        %3711 = vxpose.xlu0.b32.cont [14/16] %v3663, 128
        %3712 = vxpose.xlu0.b32.cont [15/16] %v3664, 128
        %3713 = vxpose.xlu0.b32.end [16/16] %v3665, 128
        %v3714 = vpop.trf.xlu0
        %v3715 = vpop.trf.xlu0
        %v3716 = vpop.trf.xlu0
        %v3717 = vpop.trf.xlu0
        %v3718 = vpop.trf.xlu0
        %v3719 = vpop.trf.xlu0
        %v3720 = vpop.trf.xlu0
        %v3721 = vpop.trf.xlu0
        %v3722 = vpop.trf.xlu0
        %v3723 = vpop.trf.xlu0
        %v3724 = vpop.trf.xlu0
        %v3725 = vpop.trf.xlu0
        %v3726 = vpop.trf.xlu0
        %v3727 = vpop.trf.xlu0
        %v3728 = vpop.trf.xlu0
        %v3729 = vpop.trf.xlu0
        %v3732 = vcombine.low %v3682, %v3714
        %3734 = vst [vmem:[%s191] sm:$0xff] %v3732
        %v3735 = vsel %vm381, %v3682, 0.0
        %v3736 = vsel %vm381, %v3714, 0.0
        %v3737 = vadd.f32 %v3735, %v3736
        %3738 = vadd.xlane.f32.xlu0 %v3737
        %v3739 = vpop.xlane.xlu0 %3738
        %vm3740 = vcmask 3072
        %3741 = vst.msk [vmem:[%s212] sm:$0xf] %vm3740, %v3739
        %v3742 = vmul.f32 %v3682, %v3682
        %v3743 = vmul.f32 %v3714, %v3714
        %v3744 = vsel %vm381, %v3742, 0.0
        %v3745 = vsel %vm381, %v3743, 0.0
        %v3746 = vadd.f32 %v3744, %v3745
        %3747 = vadd.xlane.f32.xlu0 %v3746
        %v3748 = vpop.xlane.xlu0 %3747
        %3749 = vst.msk [vmem:[%s216] sm:$0xf] %vm3740, %v3748
        %s3750 = sand.u32 %s74, 1
        %s3751 = scalar_lea.sflag [#allocation3], %s3750
        %s3752 = sand.u32 %s74, 1
        %s3753 = smul.addr %s3752, 8
        %s3754 = scalar_lea.vmem [#allocation2], %s3753
        %p3755 = scmp.lt.s32.totalorder %s19, 1
        %s3756 = scalar_select %p3755, %s19, 1
        %s3757 = smul.addr %s3756, 4
        %s3758 = scalar_lea.vmem %s3, %s3757
        %p3759 = scmp.lt.s32.totalorder %s19, 1
        %s3760 = scalar_select %p3759, %s19, 1
        %s3761 = smul.addr %s3760, 4
        %s3762 = scalar_lea.vmem %s4, %s3761
        // Predicated region
        $region29: #{tpu_custom_call.1} parent=27 // pred_check
          %p3763 = pneg %p84
        $region30: #{tpu_custom_call.1} parent=27 // pred_check_branch
          %3765 = sbr.rel (%p3763) target = $region32
        $region31: #{tpu_custom_call.1} parent=27 // pred_region
          %s3767 = ssub.s32 128, 128
          %3768 = vsyncadd %s3751, %s3767
          %s3769 = smul.addr %s19, 2
          %s3770 = smul.addr %s3769, 64
          %s3771 = scalar_lea.hbm %s2, %s3770
          %s3773 = sshll.u32 %s3754, 4
          %s3774 = int_to_ptr.vmem [resolvable:$true] %s3773
          %3776 = dma.vmem_to_hbm [thread:$0]  %s3774, 128, %s3771, %s3751
        $region32: #{tpu_custom_call.1} parent=27 // pred_fallthru
          _
        // Predicated region
        $region33: #{tpu_custom_call.1} parent=27 // pred_check
          %p3777 = pneg %p110
        $region34: #{tpu_custom_call.1} parent=27 // pred_check_branch
          %3779 = sbr.rel (%p3777) target = $region36
        $region35: #{tpu_custom_call.1} parent=27 // pred_region
          _
        $region36: #{tpu_custom_call.1} parent=27 // pred_fallthru
          _
        // Predicated region
        $region37: #{tpu_custom_call.1} parent=27 // pred_check
          %p3780 = pneg %p136
        $region38: #{tpu_custom_call.1} parent=27 // pred_check_branch
          %3782 = sbr.rel (%p3780) target = $region40
        $region39: #{tpu_custom_call.1} parent=27 // pred_region
          _
        $region40: #{tpu_custom_call.1} parent=27 // pred_fallthru
          _
      $region28: #{tpu_custom_call.1} parent=5 // pred_fallthru
        _
      %p3783 = scmp.le.s32.totalorder 2, %s14
      // Predicated region
      $region41: #{tpu_custom_call.1} parent=5 // pred_check
        %p3784 = pneg %p3783
      $region42: #{tpu_custom_call.1} parent=5 // pred_check_branch
        %3786 = sbr.rel (%p3784) target = $region44
      $region43: #{tpu_custom_call.1} parent=5 // pred_region
        %s3787 = ssub.s32 %s14, 2
        // Predicated region
        $region45: #{tpu_custom_call.1} parent=43 // pred_check
          %p3788 = pneg %p90
        $region46: #{tpu_custom_call.1} parent=43 // pred_check_branch
          %3790 = sbr.rel (%p3788) target = $region48
        $region47: #{tpu_custom_call.1} parent=43 // pred_region
          %s3791 = sand.u32 %s75, 1
          %s3792 = scalar_lea.sflag [#allocation3], %s3791
          %s3793 = sand.u32 %s75, 1
          %s3794 = smul.addr %s3793, 8
          %s3795 = scalar_lea.vmem [#allocation2], %s3794
          %3796 = dma.done %s3792, 128
        $region48: #{tpu_custom_call.1} parent=43 // pred_fallthru
          _
        // Predicated region
        $region49: #{tpu_custom_call.1} parent=43 // pred_check
          %p3797 = pneg %p116
        $region50: #{tpu_custom_call.1} parent=43 // pred_check_branch
          %3799 = sbr.rel (%p3797) target = $region52
        $region51: #{tpu_custom_call.1} parent=43 // pred_region
          %p3800 = scmp.lt.s32.totalorder %s20, 1
          %s3801 = scalar_select %p3800, %s20, 1
          %s3802 = smul.addr %s3801, 4
          %s3803 = scalar_lea.vmem %s3, %s3802
        $region52: #{tpu_custom_call.1} parent=43 // pred_fallthru
          _
        // Predicated region
        $region53: #{tpu_custom_call.1} parent=43 // pred_check
          %p3804 = pneg %p142
        $region54: #{tpu_custom_call.1} parent=43 // pred_check_branch
          %3806 = sbr.rel (%p3804) target = $region56
        $region55: #{tpu_custom_call.1} parent=43 // pred_region
          %p3807 = scmp.lt.s32.totalorder %s20, 1
          %s3808 = scalar_select %p3807, %s20, 1
          %s3809 = smul.addr %s3808, 4
          %s3810 = scalar_lea.vmem %s4, %s3809
        $region56: #{tpu_custom_call.1} parent=43 // pred_fallthru
          _
      $region44: #{tpu_custom_call.1} parent=5 // pred_fallthru
        _
    $region6: #{tpu_custom_call.1} parent=1 // loop_footer
      %s18 = sadd.s32 1, %s14
    $region7: #{tpu_custom_call.1} parent=1 // loop_footer_branch
      %13 = sbr.rel target = $region3
    $region8: #{tpu_custom_call.1} parent=1 // loop_exit
      _
    %3811 = vsyncpa [#allocation3], 1
    %s3812 = scalar_lea.sflag [#allocation3], 1
    %3813 = vsyncpa %s3812, 1

</llo_original>
